<compile_context>
chip_gen: v7x
topology: tpu7x:2x2x1
jax: 0.10.0
libtpu: 0.0.40
codegen_flags: <defaults>
</compile_context>

<pallas_src>
import functools

import jax
import jax.numpy as jnp
import numpy as np
from jax.experimental import pallas as pl
from jax.experimental.pallas import tpu as pltpu

NEG_SLOPE = 0.01  # nn.LeakyReLU(negative_slope=0.01)


# --------------------------------- kernel ---------------------------------
def _lifting_kernel(x_ref, sel_ref, w_ref, b_ref, c_ref, d_ref, s_ref):
    Bb, C, T = x_ref.shape
    Lh = T // 2
    KC = w_ref.shape[2]                    # weights are packed as (4, C, K*C)
    K = KC // C
    pad = (K - 1) // 2 + 1                 # ReflectionPad1d amount (=2 for K=3)
    S = Lh + 2 * pad                       # per-signal slot width on the lane axis
    chunk = sel_ref.shape[0]
    NC = T // chunk
    half = chunk // 2

    mdt = w_ref.dtype                      # MXU operand dtype for the convolutions
    f32 = jnp.float32
    hi = jax.lax.Precision.HIGHEST

    def cat(parts, axis):
        return parts[0] if len(parts) == 1 else jnp.concatenate(parts, axis=axis)

    # ---- fused Splitting(): even/odd de-interleave via one MXU matmul per time chunk ----
    # rows = (batch, channel) pairs (good row occupancy), columns = time.  The 0/1 selector
    # keeps the split exact in f32 and uses the otherwise idle MXU.
    x_bc = cat([x_ref[i] for i in range(Bb)], axis=0)               # (Bb*C, T)
    ev, od = [], []
    for i in range(NC):
        y = jnp.dot(x_bc[:, i * chunk:(i + 1) * chunk], sel_ref[...],
                    preferred_element_type=f32, precision=hi)       # (Bb*C, chunk)
        ev.append(y[:, :half])
        od.append(y[:, half:])
    xe = cat(ev, axis=-1)                                           # (Bb*C, Lh) even samples
    xo = cat(od, axis=-1)                                           # (Bb*C, Lh) odd samples

    def sig(z_bc, i):                       # (C, Lh) slab of batch element i
        return z_bc[i * C:(i + 1) * C, :]

    # ---- Operator(): ReflectionPad1d -> Conv1d -> LeakyReLU -> Dropout(0) -> Conv1d -> Tanh
    # All Bb signals are processed batch-fused: each signal lives in a contiguous width-S
    # slot on the lane axis, so every conv tap window is a single contiguous slice and each
    # conv is one MXU matmul per block.
    def pad_slots(sigs):
        pieces = []
        for zb in sigs:                                             # zb: (C, Lh)
            left = [zb[:, pad - j:pad - j + 1] for j in range(pad)]        # z[pad] .. z[1]
            right = [zb[:, Lh - 2 - j:Lh - 1 - j] for j in range(pad)]     # z[L-2] .. z[L-1-pad]
            pieces += left + [zb] + right
        return cat(pieces, axis=-1)                                 # (C, Bb*S)

    def conv(z, w, b):
        # K taps fused into one (C, K*C) @ (K*C, n) matmul (f32 accumulate).
        # Operands are cast BEFORE the unfold so the unfolded buffer is already narrow.
        n = z.shape[-1] - K + 1
        zc = z.astype(mdt)
        unf = cat([zc[:, k:k + n] for k in range(K)], axis=0)       # (K*C, n)
        prec = hi if mdt == f32 else jax.lax.Precision.DEFAULT
        return jnp.dot(w, unf, preferred_element_type=f32, precision=prec) + b

    def operator(sigs, w1, b1, w2, b2):
        zp = pad_slots(sigs)                                        # (C, Bb*S)
        h = conv(zp, w1, b1)                                        # valid cols/slot: [0, Lh+2)
        h = jnp.where(h >= 0, h, NEG_SLOPE * h)     # LeakyReLU(0.01); Dropout(p=0) is a no-op
        return jnp.tanh(conv(h, w2, b2))                            # valid cols/slot: [0, Lh)

    # c = x_even + U(x_odd)
    u = operator([sig(xo, i) for i in range(Bb)],
                 w_ref[0], b_ref[0], w_ref[1], b_ref[1])
    c_sigs = [sig(xe, i) + u[:, i * S:i * S + Lh] for i in range(Bb)]

    # d = x_odd - P(c)
    p = operator(c_sigs, w_ref[2], b_ref[2], w_ref[3], b_ref[3])
    d_sigs = [sig(xo, i) - p[:, i * S:i * S + Lh] for i in range(Bb)]

    # stores + per-block partial sums for the regularization terms (packed into one output)
    sd = jnp.zeros((1, 1), f32)
    sc = jnp.zeros((1, 1), f32)
    for i in range(Bb):
        c_ref[i] = c_sigs[i]
        d_ref[i] = d_sigs[i]
        sd = sd + jnp.sum(jnp.abs(d_sigs[i]), keepdims=True)
        sc = sc + jnp.sum(c_sigs[i], keepdims=True)
    sx = jnp.sum(x_bc, keepdims=True)
    s_ref[0] = cat([sd, sc, sx], axis=-1)                           # (1, 3)


# --------------------------------- wrapper --------------------------------
def _prep_params(params, matmul_dtype):
    """PyTorch Conv1d weight (C_out, C_in, K) -> (C_out, K*C_in) matching the kernel's
    k-major unfold; packed as (4, C, K*C) weights and (4, C, 1) biases."""
    def wprep(w):
        c_out, c_in, k = w.shape
        return jnp.transpose(w, (0, 2, 1)).reshape(c_out, k * c_in)

    uw1, ub1, uw2, ub2, pw1, pb1, pw2, pb2 = params
    w_all = jnp.stack([wprep(uw1), wprep(uw2), wprep(pw1), wprep(pw2)]).astype(matmul_dtype)
    b_all = jnp.stack([b.reshape(-1, 1) for b in (ub1, ub2, pb1, pb2)]).astype(jnp.float32)
    return w_all, b_all


def _vmem_limit_bytes():
    cap = 128 * 1024 * 1024
    try:
        cap = int(pltpu.get_tpu_info().vmem_capacity_bytes)
    except Exception:
        pass
    return int(min(cap // 2, 64 * 1024 * 1024))     # ~32 MiB on v7x, 64 MiB on v5e/v6e


def _pick_chunk(T, cap=256):
    if T <= cap:
        return T
    for c in (256, 128, 64, 32, 16, 8, 4, 2):
        if T % c == 0:
            return c
    return T


def _split_selector(chunk):
    half = chunk // 2
    sel = np.zeros((chunk, chunk), np.float32)
    idx = np.arange(half)
    sel[2 * idx, idx] = 1.0                 # even samples -> first half of the chunk columns
    sel[2 * idx + 1, half + idx] = 1.0      # odd samples  -> second half
    return jnp.asarray(sel)


def _choose_block_batch(B, C, T, vmem_limit_bytes, target_bytes=2 << 20, max_assembly=8):
    """Batch elements per grid step: sized by bytes (~2 MiB of input per step), capped by a
    rough VMEM footprint and by the small per-element slice/store plumbing (max_assembly)."""
    per_elem_in = 4 * C * T
    per_elem_vmem = 40 * C * T          # double-buffered blocks + slot-form f32 intermediates
    cap = min(B, max_assembly,
              max(1, target_bytes // per_elem_in),
              max(1, (vmem_limit_bytes // 2) // per_elem_vmem))
    cap = int(max(1, cap))
    for bb in range(cap, 0, -1):        # prefer an even grid length (v7x dual-TensorCore)
        if B % bb == 0 and (B // bb) % 2 == 0:
            return bb
    for bb in range(cap, 0, -1):
        if B % bb == 0:
            return bb
    return 1


def level_twavenet_forward(x, params, *, regu_details, regu_approx,
                           use_bf16_matmul=False, block_batch=None):
    """x: (B, C, T) with T even.  Returns (approx, details, regu); approx/details: (B, C, T//2)."""
    x = x.astype(jnp.float32)
    B, C, T = x.shape
    assert T % 2 == 0, "sequence length must be even for Splitting()"
    Lh = T // 2
    K = params[0].shape[-1]
    pad = (K - 1) // 2 + 1
    assert K == 3, "lifting combination needs the length-preserving K=3 Operator"
    assert Lh >= pad + 1, f"half length {Lh} too short for ReflectionPad1d({pad})"

    matmul_dtype = jnp.bfloat16 if use_bf16_matmul else jnp.float32
    w_all, b_all = _prep_params(params, matmul_dtype)

    chunk = _pick_chunk(T)
    sel = _split_selector(chunk)

    vmem_limit = _vmem_limit_bytes()
    Bb = block_batch if block_batch is not None else _choose_block_batch(B, C, T, vmem_limit)
    assert B % Bb == 0, "block_batch must divide the batch size"
    G = B // Bb

    full = lambda a: pl.BlockSpec(a.shape, lambda g, _nd=a.ndim: (0,) * _nd)
    out_shapes = (
        jax.ShapeDtypeStruct((B, C, Lh), jnp.float32),      # c (approx)
        jax.ShapeDtypeStruct((B, C, Lh), jnp.float32),      # d (details)
        jax.ShapeDtypeStruct((G, 1, 3), jnp.float32),       # per-block [sum|d|, sum c, sum x]
    )

    c, d, s = pl.pallas_call(
        _lifting_kernel,
        grid=(G,),
        in_specs=[pl.BlockSpec((Bb, C, T), lambda g: (g, 0, 0)),
                  full(sel), full(w_all), full(b_all)],
        out_specs=[pl.BlockSpec((Bb, C, Lh), lambda g: (g, 0, 0)),
                   pl.BlockSpec((Bb, C, Lh), lambda g: (g, 0, 0)),
                   pl.BlockSpec((1, 1, 3), lambda g: (g, 0, 0))],
        out_shape=out_shapes,
        compiler_params=pltpu.CompilerParams(
            dimension_semantics=("parallel",),
            vmem_limit_bytes=vmem_limit),
    )(x, sel, w_all, b_all)

    # Regularization terms from the in-kernel partial sums (no HBM re-read of c/d).
    regu = jnp.float32(0.0)
    if regu_details:
        regu = regu + regu_details * (jnp.sum(s[:, 0, 0]) / (B * C * Lh))
    if regu_approx:
        mean_c = jnp.sum(s[:, 0, 1]) / (B * C * Lh)
        mean_x = jnp.sum(s[:, 0, 2]) / (B * C * T)
        regu = regu + regu_approx * jnp.abs(mean_c - mean_x)   # torch.dist(a, b, 2) == |a-b|
    return c, d, regu


def init_params(key, C, K=3):
    """Deterministic synthetic weights in PyTorch Conv1d layout: weight (C_out, C_in, K), bias (C,)."""
    keys = jax.random.split(key, 8)
    w = lambda k: jax.random.normal(k, (C, C, K), jnp.float32) / jnp.sqrt(float(C * K))
    b = lambda k: jax.random.normal(k, (C,), jnp.float32) * 0.1
    return (w(keys[0]), b(keys[1]), w(keys[2]), b(keys[3]),
            w(keys[4]), b(keys[5]), w(keys[6]), b(keys[7]))


# ----------------- pure-JAX reference (validation only) -----------------
def _ref_operator(x, w1, b1, w2, b2, pad):
    xp = jnp.pad(x, ((0, 0), (0, 0), (pad, pad)), mode="reflect")

    def conv1d(z, w, b):
        out = jax.lax.conv_general_dilated(
            z, w, window_strides=(1,), padding="VALID",
            dimension_numbers=("NCH", "OIH", "NCH"),
            precision=jax.lax.Precision.HIGHEST)
        return out + b.reshape(1, -1, 1)

    h = conv1d(xp, w1, b1)
    h = jnp.where(h >= 0, h, NEG_SLOPE * h)
    return jnp.tanh(conv1d(h, w2, b2))


def ref_forward(x, params, regu_details, regu_approx):
    uw1, ub1, uw2, ub2, pw1, pb1, pw2, pb2 = params
    pad = (uw1.shape[-1] - 1) // 2 + 1
    x_even, x_odd = x[:, :, 0::2], x[:, :, 1::2]
    c = x_even + _ref_operator(x_odd, uw1, ub1, uw2, ub2, pad)
    d = x_odd - _ref_operator(c, pw1, pb1, pw2, pb2, pad)
    regu = (regu_details * jnp.mean(jnp.abs(d))
            + regu_approx * jnp.abs(jnp.mean(c) - jnp.mean(x)))
    return c, d, regu


if __name__ == "__main__":
    key = jax.random.PRNGKey(0)
    kx, kp = jax.random.split(key)

    B, C, T, K = 2, 4, 16, 3
    regu_details, regu_approx = 0.01, 0.1

    x = jax.random.normal(kx, (B, C, T), jnp.float32)
    params = init_params(kp, C, K)

    fwd = jax.jit(functools.partial(level_twavenet_forward,
                                    regu_details=regu_details,
                                    regu_approx=regu_approx,
                                    use_bf16_matmul=False))
    approx, details, regu = fwd(x, params)
    jax.block_until_ready((approx, details, regu))

    a_ref, d_ref, r_ref = ref_forward(x, params, regu_details, regu_approx)
    np.testing.assert_allclose(np.asarray(approx), np.asarray(a_ref), atol=1e-3, rtol=1e-3)
    np.testing.assert_allclose(np.asarray(details), np.asarray(d_ref), atol=1e-3, rtol=1e-3)
    np.testing.assert_allclose(float(regu), float(r_ref), atol=1e-3, rtol=1e-3)

    print("KERNEL_OK")
</pallas_src>

<mosaic_0001>
module attributes {stable_mosaic.version = 11 : i64} {
  func.func @_lifting_kernel(%arg0: i32, %arg1: memref<1x4x16xf32, #tpu.memory_space<vmem>>, %arg2: memref<16x16xf32, #tpu.memory_space<vmem>>, %arg3: memref<4x4x12xf32, #tpu.memory_space<vmem>>, %arg4: memref<4x4x1xf32, #tpu.memory_space<vmem>>, %arg5: memref<1x4x8xf32, #tpu.memory_space<vmem>>, %arg6: memref<1x4x8xf32, #tpu.memory_space<vmem>>, %arg7: memref<1x1x3xf32, #tpu.memory_space<vmem>>) attributes {dimension_semantics = [#tpu.dimension_semantics<parallel>], iteration_bounds = array<i64: 2>, scalar_prefetch = 0 : i64, scratch_operands = 0 : i64, tpu.core_type = #tpu.core_type<tc>, window_params = [{transform_indices = @transform_0, window_bounds = array<i64: 1, 4, 16>}, {pipeline_mode = #tpu.pipeline_mode<synchronous>, transform_indices = @transform_1, window_bounds = array<i64: 16, 16>}, {pipeline_mode = #tpu.pipeline_mode<synchronous>, transform_indices = @transform_2, window_bounds = array<i64: 4, 4, 12>}, {pipeline_mode = #tpu.pipeline_mode<synchronous>, transform_indices = @transform_3, window_bounds = array<i64: 4, 4, 1>}, {transform_indices = @transform_4, window_bounds = array<i64: 1, 4, 8>}, {transform_indices = @transform_5, window_bounds = array<i64: 1, 4, 8>}, {transform_indices = @transform_6, window_bounds = array<i64: 1, 1, 3>}]} {
    %c0 = arith.constant 0 : index
    %c0_0 = arith.constant 0 : index
    %c0_1 = arith.constant 0 : index
    %0 = vector.load %arg1[%c0, %c0_0, %c0_1] : memref<1x4x16xf32, #tpu.memory_space<vmem>>, vector<1x4x16xf32>
    %1 = vector.shape_cast %0 : vector<1x4x16xf32> to vector<4x16xf32>
    %c0_2 = arith.constant 0 : index
    %c0_3 = arith.constant 0 : index
    %2 = vector.load %arg2[%c0_2, %c0_3] : memref<16x16xf32, #tpu.memory_space<vmem>>, vector<16x16xf32>
    %cst = arith.constant dense<0.000000e+00> : vector<4x16xf32>
    %3 = tpu.matmul %1, %2, %cst {dimension_numbers = #tpu.dot_dimension_numbers<[1], [0], [0], [1], [0, 0, 1, 1], [], []>, precision = #tpu.contract_precision<fp32>} : vector<4x16xf32>, vector<16x16xf32>, vector<4x16xf32> -> vector<4x16xf32>
    %4 = vector.extract_strided_slice %3 {offsets = [0, 0], sizes = [4, 8], strides = [1, 1]} : vector<4x16xf32> to vector<4x8xf32>
    %5 = vector.extract_strided_slice %3 {offsets = [0, 8], sizes = [4, 8], strides = [1, 1]} : vector<4x16xf32> to vector<4x8xf32>
    %c0_4 = arith.constant 0 : index
    %c0_5 = arith.constant 0 : index
    %c0_6 = arith.constant 0 : index
    %6 = vector.load %arg3[%c0_4, %c0_5, %c0_6] : memref<4x4x12xf32, #tpu.memory_space<vmem>>, vector<1x4x12xf32>
    %7 = vector.shape_cast %6 : vector<1x4x12xf32> to vector<4x12xf32>
    %c0_7 = arith.constant 0 : index
    %c0_8 = arith.constant 0 : index
    %c0_9 = arith.constant 0 : index
    %8 = vector.load %arg4[%c0_7, %c0_8, %c0_9] : memref<4x4x1xf32, #tpu.memory_space<vmem>>, vector<1x4x1xf32>
    %9 = vector.shape_cast %8 : vector<1x4x1xf32> to vector<4x1xf32>
    %c1 = arith.constant 1 : index
    %c0_10 = arith.constant 0 : index
    %c0_11 = arith.constant 0 : index
    %10 = vector.load %arg3[%c1, %c0_10, %c0_11] : memref<4x4x12xf32, #tpu.memory_space<vmem>>, vector<1x4x12xf32>
    %11 = vector.shape_cast %10 : vector<1x4x12xf32> to vector<4x12xf32>
    %c1_12 = arith.constant 1 : index
    %c0_13 = arith.constant 0 : index
    %c0_14 = arith.constant 0 : index
    %12 = vector.load %arg4[%c1_12, %c0_13, %c0_14] : memref<4x4x1xf32, #tpu.memory_space<vmem>>, vector<1x4x1xf32>
    %13 = vector.shape_cast %12 : vector<1x4x1xf32> to vector<4x1xf32>
    %14 = vector.extract_strided_slice %5 {offsets = [0, 2], sizes = [4, 1], strides = [1, 1]} : vector<4x8xf32> to vector<4x1xf32>
    %15 = vector.extract_strided_slice %5 {offsets = [0, 1], sizes = [4, 1], strides = [1, 1]} : vector<4x8xf32> to vector<4x1xf32>
    %16 = vector.extract_strided_slice %5 {offsets = [0, 6], sizes = [4, 1], strides = [1, 1]} : vector<4x8xf32> to vector<4x1xf32>
    %17 = vector.extract_strided_slice %5 {offsets = [0, 5], sizes = [4, 1], strides = [1, 1]} : vector<4x8xf32> to vector<4x1xf32>
    %18 = tpu.concatenate %14, %15, %5, %16, %17 in 1 : vector<4x1xf32>, vector<4x1xf32>, vector<4x8xf32>, vector<4x1xf32>, vector<4x1xf32> -> vector<4x12xf32>
    %19 = vector.extract_strided_slice %18 {offsets = [0, 0], sizes = [4, 10], strides = [1, 1]} : vector<4x12xf32> to vector<4x10xf32>
    %20 = vector.extract_strided_slice %18 {offsets = [0, 1], sizes = [4, 10], strides = [1, 1]} : vector<4x12xf32> to vector<4x10xf32>
    %21 = vector.extract_strided_slice %18 {offsets = [0, 2], sizes = [4, 10], strides = [1, 1]} : vector<4x12xf32> to vector<4x10xf32>
    %22 = tpu.concatenate %19, %20, %21 in 0 : vector<4x10xf32>, vector<4x10xf32>, vector<4x10xf32> -> vector<12x10xf32>
    %cst_15 = arith.constant dense<0.000000e+00> : vector<4x10xf32>
    %23 = tpu.matmul %7, %22, %cst_15 {dimension_numbers = #tpu.dot_dimension_numbers<[1], [0], [0], [1], [0, 0, 1, 1], [], []>, precision = #tpu.contract_precision<fp32>} : vector<4x12xf32>, vector<12x10xf32>, vector<4x10xf32> -> vector<4x10xf32>
    %24 = vector.broadcast %9 : vector<4x1xf32> to vector<4x10xf32>
    %25 = arith.addf %23, %24 : vector<4x10xf32>
    %cst_16 = arith.constant 0.000000e+00 : f32
    %26 = vector.broadcast %cst_16 : f32 to vector<4x10xf32>
    %27 = arith.cmpf oge, %25, %26 : vector<4x10xf32>
    %cst_17 = arith.constant 0.00999999977 : f32
    %28 = vector.broadcast %cst_17 : f32 to vector<4x10xf32>
    %29 = arith.mulf %28, %25 : vector<4x10xf32>
    %30 = arith.select %27, %25, %29 : vector<4x10xi1>, vector<4x10xf32>
    %31 = vector.extract_strided_slice %30 {offsets = [0, 0], sizes = [4, 8], strides = [1, 1]} : vector<4x10xf32> to vector<4x8xf32>
    %32 = vector.extract_strided_slice %30 {offsets = [0, 1], sizes = [4, 8], strides = [1, 1]} : vector<4x10xf32> to vector<4x8xf32>
    %33 = vector.extract_strided_slice %30 {offsets = [0, 2], sizes = [4, 8], strides = [1, 1]} : vector<4x10xf32> to vector<4x8xf32>
    %34 = tpu.concatenate %31, %32, %33 in 0 : vector<4x8xf32>, vector<4x8xf32>, vector<4x8xf32> -> vector<12x8xf32>
    %cst_18 = arith.constant dense<0.000000e+00> : vector<4x8xf32>
    %35 = tpu.matmul %11, %34, %cst_18 {dimension_numbers = #tpu.dot_dimension_numbers<[1], [0], [0], [1], [0, 0, 1, 1], [], []>, precision = #tpu.contract_precision<fp32>} : vector<4x12xf32>, vector<12x8xf32>, vector<4x8xf32> -> vector<4x8xf32>
    %36 = vector.broadcast %13 : vector<4x1xf32> to vector<4x8xf32>
    %37 = arith.addf %35, %36 : vector<4x8xf32>
    %38 = math.tanh %37 : vector<4x8xf32>
    %39 = arith.addf %4, %38 : vector<4x8xf32>
    %c2 = arith.constant 2 : index
    %c0_19 = arith.constant 0 : index
    %c0_20 = arith.constant 0 : index
    %40 = vector.load %arg3[%c2, %c0_19, %c0_20] : memref<4x4x12xf32, #tpu.memory_space<vmem>>, vector<1x4x12xf32>
    %41 = vector.shape_cast %40 : vector<1x4x12xf32> to vector<4x12xf32>
    %c2_21 = arith.constant 2 : index
    %c0_22 = arith.constant 0 : index
    %c0_23 = arith.constant 0 : index
    %42 = vector.load %arg4[%c2_21, %c0_22, %c0_23] : memref<4x4x1xf32, #tpu.memory_space<vmem>>, vector<1x4x1xf32>
    %43 = vector.shape_cast %42 : vector<1x4x1xf32> to vector<4x1xf32>
    %c3 = arith.constant 3 : index
    %c0_24 = arith.constant 0 : index
    %c0_25 = arith.constant 0 : index
    %44 = vector.load %arg3[%c3, %c0_24, %c0_25] : memref<4x4x12xf32, #tpu.memory_space<vmem>>, vector<1x4x12xf32>
    %45 = vector.shape_cast %44 : vector<1x4x12xf32> to vector<4x12xf32>
    %c3_26 = arith.constant 3 : index
    %c0_27 = arith.constant 0 : index
    %c0_28 = arith.constant 0 : index
    %46 = vector.load %arg4[%c3_26, %c0_27, %c0_28] : memref<4x4x1xf32, #tpu.memory_space<vmem>>, vector<1x4x1xf32>
    %47 = vector.shape_cast %46 : vector<1x4x1xf32> to vector<4x1xf32>
    %48 = vector.extract_strided_slice %39 {offsets = [0, 2], sizes = [4, 1], strides = [1, 1]} : vector<4x8xf32> to vector<4x1xf32>
    %49 = vector.extract_strided_slice %39 {offsets = [0, 1], sizes = [4, 1], strides = [1, 1]} : vector<4x8xf32> to vector<4x1xf32>
    %50 = vector.extract_strided_slice %39 {offsets = [0, 6], sizes = [4, 1], strides = [1, 1]} : vector<4x8xf32> to vector<4x1xf32>
    %51 = vector.extract_strided_slice %39 {offsets = [0, 5], sizes = [4, 1], strides = [1, 1]} : vector<4x8xf32> to vector<4x1xf32>
    %52 = tpu.concatenate %48, %49, %39, %50, %51 in 1 : vector<4x1xf32>, vector<4x1xf32>, vector<4x8xf32>, vector<4x1xf32>, vector<4x1xf32> -> vector<4x12xf32>
    %53 = vector.extract_strided_slice %52 {offsets = [0, 0], sizes = [4, 10], strides = [1, 1]} : vector<4x12xf32> to vector<4x10xf32>
    %54 = vector.extract_strided_slice %52 {offsets = [0, 1], sizes = [4, 10], strides = [1, 1]} : vector<4x12xf32> to vector<4x10xf32>
    %55 = vector.extract_strided_slice %52 {offsets = [0, 2], sizes = [4, 10], strides = [1, 1]} : vector<4x12xf32> to vector<4x10xf32>
    %56 = tpu.concatenate %53, %54, %55 in 0 : vector<4x10xf32>, vector<4x10xf32>, vector<4x10xf32> -> vector<12x10xf32>
    %cst_29 = arith.constant dense<0.000000e+00> : vector<4x10xf32>
    %57 = tpu.matmul %41, %56, %cst_29 {dimension_numbers = #tpu.dot_dimension_numbers<[1], [0], [0], [1], [0, 0, 1, 1], [], []>, precision = #tpu.contract_precision<fp32>} : vector<4x12xf32>, vector<12x10xf32>, vector<4x10xf32> -> vector<4x10xf32>
    %58 = vector.broadcast %43 : vector<4x1xf32> to vector<4x10xf32>
    %59 = arith.addf %57, %58 : vector<4x10xf32>
    %cst_30 = arith.constant 0.000000e+00 : f32
    %60 = vector.broadcast %cst_30 : f32 to vector<4x10xf32>
    %61 = arith.cmpf oge, %59, %60 : vector<4x10xf32>
    %cst_31 = arith.constant 0.00999999977 : f32
    %62 = vector.broadcast %cst_31 : f32 to vector<4x10xf32>
    %63 = arith.mulf %62, %59 : vector<4x10xf32>
    %64 = arith.select %61, %59, %63 : vector<4x10xi1>, vector<4x10xf32>
    %65 = vector.extract_strided_slice %64 {offsets = [0, 0], sizes = [4, 8], strides = [1, 1]} : vector<4x10xf32> to vector<4x8xf32>
    %66 = vector.extract_strided_slice %64 {offsets = [0, 1], sizes = [4, 8], strides = [1, 1]} : vector<4x10xf32> to vector<4x8xf32>
    %67 = vector.extract_strided_slice %64 {offsets = [0, 2], sizes = [4, 8], strides = [1, 1]} : vector<4x10xf32> to vector<4x8xf32>
    %68 = tpu.concatenate %65, %66, %67 in 0 : vector<4x8xf32>, vector<4x8xf32>, vector<4x8xf32> -> vector<12x8xf32>
    %cst_32 = arith.constant dense<0.000000e+00> : vector<4x8xf32>
    %69 = tpu.matmul %45, %68, %cst_32 {dimension_numbers = #tpu.dot_dimension_numbers<[1], [0], [0], [1], [0, 0, 1, 1], [], []>, precision = #tpu.contract_precision<fp32>} : vector<4x12xf32>, vector<12x8xf32>, vector<4x8xf32> -> vector<4x8xf32>
    %70 = vector.broadcast %47 : vector<4x1xf32> to vector<4x8xf32>
    %71 = arith.addf %69, %70 : vector<4x8xf32>
    %72 = math.tanh %71 : vector<4x8xf32>
    %73 = arith.subf %5, %72 : vector<4x8xf32>
    %cst_33 = arith.constant 0.000000e+00 : f32
    %74 = vector.broadcast %cst_33 : f32 to vector<1x1xf32>
    %cst_34 = arith.constant 0.000000e+00 : f32
    %75 = vector.broadcast %cst_34 : f32 to vector<1x1xf32>
    %c0_35 = arith.constant 0 : index
    %c0_36 = arith.constant 0 : index
    %c0_37 = arith.constant 0 : index
    %76 = vector.load %arg5[%c0_35, %c0_36, %c0_37] : memref<1x4x8xf32, #tpu.memory_space<vmem>>, vector<1x4x8xf32>
    %77 = vector.shape_cast %76 : vector<1x4x8xf32> to vector<4x8xf32>
    %78 = vector.shape_cast %39 : vector<4x8xf32> to vector<1x4x8xf32>
    tpu.vector_store %arg5[%c0_35, %c0_36, %c0_37], %78 {strides = array<i32>} : memref<1x4x8xf32, #tpu.memory_space<vmem>>, vector<1x4x8xf32>,
    %c0_38 = arith.constant 0 : index
    %c0_39 = arith.constant 0 : index
    %c0_40 = arith.constant 0 : index
    %79 = vector.load %arg6[%c0_38, %c0_39, %c0_40] : memref<1x4x8xf32, #tpu.memory_space<vmem>>, vector<1x4x8xf32>
    %80 = vector.shape_cast %79 : vector<1x4x8xf32> to vector<4x8xf32>
    %81 = vector.shape_cast %73 : vector<4x8xf32> to vector<1x4x8xf32>
    tpu.vector_store %arg6[%c0_38, %c0_39, %c0_40], %81 {strides = array<i32>} : memref<1x4x8xf32, #tpu.memory_space<vmem>>, vector<1x4x8xf32>,
    %82 = math.absf %73 : vector<4x8xf32>
    %83 = vector.shape_cast %82 : vector<4x8xf32> to vector<1x4x8xf32>
    %cst_41 = arith.constant dense<0.000000e+00> : vector<1xf32>
    %84 = vector.multi_reduction <add>, %83, %cst_41 [1, 2] : vector<1x4x8xf32> to vector<1xf32>
    %85 = vector.shape_cast %84 : vector<1xf32> to vector<1x1x1xf32>
    %86 = vector.extract %85[0, 0, 0] : f32 from vector<1x1x1xf32>
    %87 = vector.broadcast %86 : f32 to vector<1x1xf32>
    %88 = arith.addf %74, %87 : vector<1x1xf32>
    %89 = vector.shape_cast %39 : vector<4x8xf32> to vector<1x4x8xf32>
    %cst_42 = arith.constant dense<0.000000e+00> : vector<1xf32>
    %90 = vector.multi_reduction <add>, %89, %cst_42 [1, 2] : vector<1x4x8xf32> to vector<1xf32>
    %91 = vector.shape_cast %90 : vector<1xf32> to vector<1x1x1xf32>
    %92 = vector.extract %91[0, 0, 0] : f32 from vector<1x1x1xf32>
    %93 = vector.broadcast %92 : f32 to vector<1x1xf32>
    %94 = arith.addf %75, %93 : vector<1x1xf32>
    %95 = vector.shape_cast %1 : vector<4x16xf32> to vector<1x4x16xf32>
    %cst_43 = arith.constant dense<0.000000e+00> : vector<1xf32>
    %96 = vector.multi_reduction <add>, %95, %cst_43 [1, 2] : vector<1x4x16xf32> to vector<1xf32>
    %97 = vector.shape_cast %96 : vector<1xf32> to vector<1x1x1xf32>
    %98 = vector.extract %97[0, 0, 0] : f32 from vector<1x1x1xf32>
    %99 = vector.broadcast %98 : f32 to vector<1x1xf32>
    %100 = tpu.concatenate %88, %94, %99 in 1 : vector<1x1xf32>, vector<1x1xf32>, vector<1x1xf32> -> vector<1x3xf32>
    %c0_44 = arith.constant 0 : index
    %c0_45 = arith.constant 0 : index
    %c0_46 = arith.constant 0 : index
    %101 = vector.load %arg7[%c0_44, %c0_45, %c0_46] : memref<1x1x3xf32, #tpu.memory_space<vmem>>, vector<1x1x3xf32>
    %102 = vector.shape_cast %101 : vector<1x1x3xf32> to vector<1x3xf32>
    %103 = vector.shape_cast %100 : vector<1x3xf32> to vector<1x1x3xf32>
    tpu.vector_store %arg7[%c0_44, %c0_45, %c0_46], %103 {strides = array<i32>} : memref<1x1x3xf32, #tpu.memory_space<vmem>>, vector<1x1x3xf32>,
    return
  }
  func.func @transform_0(%arg0: i32) -> (i32, i32, i32) {
    %c0_i32 = arith.constant 0 : i32
    %c0_i32_0 = arith.constant 0 : i32
    %c0_i32_1 = arith.constant 0 : i32
    return %arg0, %c0_i32, %c0_i32_0 : i32, i32, i32
  }
  func.func @transform_1(%arg0: i32) -> (i32, i32) {
    %c0_i32 = arith.constant 0 : i32
    %c0_i32_0 = arith.constant 0 : i32
    %c0_i32_1 = arith.constant 0 : i32
    return %c0_i32, %c0_i32_0 : i32, i32
  }
  func.func @transform_2(%arg0: i32) -> (i32, i32, i32) {
    %c0_i32 = arith.constant 0 : i32
    %c0_i32_0 = arith.constant 0 : i32
    %c0_i32_1 = arith.constant 0 : i32
    %c0_i32_2 = arith.constant 0 : i32
    return %c0_i32, %c0_i32_0, %c0_i32_1 : i32, i32, i32
  }
  func.func @transform_3(%arg0: i32) -> (i32, i32, i32) {
    %c0_i32 = arith.constant 0 : i32
    %c0_i32_0 = arith.constant 0 : i32
    %c0_i32_1 = arith.constant 0 : i32
    %c0_i32_2 = arith.constant 0 : i32
    return %c0_i32, %c0_i32_0, %c0_i32_1 : i32, i32, i32
  }
  func.func @transform_4(%arg0: i32) -> (i32, i32, i32) {
    %c0_i32 = arith.constant 0 : i32
    %c0_i32_0 = arith.constant 0 : i32
    %c0_i32_1 = arith.constant 0 : i32
    return %arg0, %c0_i32, %c0_i32_0 : i32, i32, i32
  }
  func.func @transform_5(%arg0: i32) -> (i32, i32, i32) {
    %c0_i32 = arith.constant 0 : i32
    %c0_i32_0 = arith.constant 0 : i32
    %c0_i32_1 = arith.constant 0 : i32
    return %arg0, %c0_i32, %c0_i32_0 : i32, i32, i32
  }
  func.func @transform_6(%arg0: i32) -> (i32, i32, i32) {
    %c0_i32 = arith.constant 0 : i32
    %c0_i32_0 = arith.constant 0 : i32
    %c0_i32_1 = arith.constant 0 : i32
    return %arg0, %c0_i32, %c0_i32_0 : i32, i32, i32
  }
}

</mosaic_0001>

<llo_original>
// kernel: level_twavenet_forward.1
$region0: #{level_twavenet_forward.1}
  #allocation0 [shape = 'u32[]', space=smem, size = 0x4, offset = 0x4, fixed_abs, tag = 'smem constant byte address 0x4 - core index']
  #allocation1 [shape = 'u32[144,128]{1,0:T(1,128)}', space=vmem, size = 0x12000, scoped, tag = 'internal scratch']
  %s0 = inlined_call_operand.hbm [shape: f32[2,4,16], index: 0, kind: input, shape index: {}]
  %s1 = inlined_call_operand.hbm [shape: f32[16,16], index: 1, kind: input, shape index: {}]
  %s2 = inlined_call_operand.hbm [shape: f32[4,4,12], index: 2, kind: input, shape index: {}]
  %s3 = inlined_call_operand.hbm [shape: f32[4,4,1], index: 3, kind: input, shape index: {}]
  %s4 = inlined_call_operand.hbm [shape: f32[2,4,8], index: 4, kind: output, shape index: {0}]
  %s5 = inlined_call_operand.hbm [shape: f32[2,4,8], index: 5, kind: output, shape index: {1}]
  %s6 = inlined_call_operand.hbm [shape: f32[2,1,3], index: 6, kind: output, shape index: {2}]
  %7 = xla_tuple %s4, %s5, %s6
  %s8 = sld [smem:[#allocation0]]
  $region81: #{level_twavenet_forward.1} parent=0
    _
  %s10 = ssub.s32 1, %s8
  %s11 = scalar_select 0, %s10, %s8
  $region1: #{level_twavenet_forward.1} parent=0
    #allocation2 [shape = 'u8[4096]{0}', space=vmem, size = 0x1000, scoped, tag = 'input window, operand 0']
    #allocation3 [shape = 's32[2]{0}', space=sflag, size = 0x8, scoped, tag = 'scoped memory for level_twavenet_forward.1']
    #allocation4 [shape = 's32[2]{0}', space=sflag, size = 0x8, scoped, tag = 'scoped memory for level_twavenet_forward.1']
    #allocation5 [shape = 'u8[8192]{0}', space=vmem, size = 0x2000, scoped, tag = 'input window, operand 1, single buffered']
    #allocation6 [shape = 's32[1]{0}', space=sflag, size = 0x4, scoped, tag = 'scoped memory for level_twavenet_forward.1']
    #allocation7 [shape = 'u8[8192]{0}', space=vmem, size = 0x2000, scoped, tag = 'input window, operand 2, single buffered']
    #allocation8 [shape = 'u8[8192]{0}', space=vmem, size = 0x2000, scoped, tag = 'input window, operand 3, single buffered']
    #allocation9 [shape = 's32[1]{0}', space=sflag, size = 0x4, scoped, tag = 'scoped memory for level_twavenet_forward.1']
    #allocation10 [shape = 'u8[4096]{0}', space=vmem, size = 0x1000, scoped, tag = 'output window, operand 0']
    #allocation11 [shape = 'u8[4096]{0}', space=vmem, size = 0x1000, scoped, tag = 'output window, operand 1']
    #allocation12 [shape = 's32[2]{0}', space=sflag, size = 0x8, scoped, tag = 'scoped memory for level_twavenet_forward.1']
    #allocation13 [shape = 'u8[1024]{0}', space=vmem, size = 0x400, scoped, tag = 'output window, operand 2']
    %12 = vsyncpa [#allocation3], 0
    %s13 = scalar_lea.sflag [#allocation3], 1
    %14 = vsyncpa %s13, 0
    %15 = vsyncpa [#allocation6], 0
    %16 = vsyncpa [#allocation9], 0
    %17 = vsyncpa [#allocation4], 0
    %s18 = scalar_lea.sflag [#allocation4], 1
    %19 = vsyncpa %s18, 0
    %20 = vsyncpa [#allocation12], 0
    %s21 = scalar_lea.sflag [#allocation12], 1
    %22 = vsyncpa %s21, 0
    loop: start=0, step=1, limit=4
    $region2: #{level_twavenet_forward.1} parent=1 // loop_pre_header
      _
    $region3: #{level_twavenet_forward.1} parent=1 // loop_header
      %s24 = sphi 0, %s28
      %p25 = scmp.ge.s32.totalorder %s24, 4
      %s34 = sphi 0, %s36
      %s37 = sphi 0, %s34
      %s38 = sphi 0, %s37
      %s54 = sphi 0, %s38
      %s58 = sphi 0, %s58
      %s60 = sphi 0, %s58
      %s61 = sphi 0, %s60
      %s75 = sphi 0, %s61
      %s79 = sphi 0, %s79
      %s81 = sphi 0, %s79
      %s82 = sphi 0, %s81
      %s96 = sphi 0, %s82
      %s100 = sphi 0, %s100
      %s102 = sphi 0, %s100
      %s103 = sphi 0, %s102
      %s117 = sphi 0, %s103
      %s123 = sphi 0, %s125
      %s126 = sphi 0, %s123
      %s127 = sphi 0, %s126
      %s143 = sphi 0, %s127
      %s149 = sphi 0, %s151
      %s152 = sphi 0, %s149
      %s153 = sphi 0, %s152
      %s169 = sphi 0, %s153
      %s175 = sphi 0, %s177
      %s178 = sphi 0, %s175
      %s179 = sphi 0, %s178
      %s195 = sphi 0, %s179
    $region4: #{level_twavenet_forward.1} parent=1 // loop_header_branch
      %27 = sbr.rel (%p25) target = $region8
    $region5: #{level_twavenet_forward.1} parent=1 // loop_body
      %s29 = ssub.s32 %s24, 1
      %s30 = ssub.s32 %s24, 2
      %s31 = sadd.s32 %s24, 1
      %s32 = ssub.s32 %s24, %s31
      %p33 = scmp.eq.s32.totalorder %s32, 0
      %s35 = sadd.s32 %s34, 1
      %s36 = scalar_select %p33, %s34, %s35
      %p39 = pneg %p33
      %p40 = scmp.eq.s32.totalorder %s24, 1
      %p41 = por %p39, %p40
      %p42 = scmp.ne.s32.totalorder %s34, %s37
      %p43 = scmp.eq.s32.totalorder %s24, 0
      %p44 = por %p42, %p43
      %p45 = scmp.ne.s32.totalorder %s34, %s37
      %p46 = scmp.eq.s32.totalorder %s29, 1
      %p47 = por %p45, %p46
      %p48 = scmp.ne.s32.totalorder %s37, %s38
      %p49 = scmp.eq.s32.totalorder %s29, 0
      %p50 = por %p48, %p49
      %p51 = scmp.ne.s32.totalorder %s37, %s38
      %p52 = scmp.eq.s32.totalorder %s30, 1
      %p53 = por %p51, %p52
      %p55 = scmp.ne.s32.totalorder %s38, %s54
      %p56 = scmp.eq.s32.totalorder %s30, 0
      %p57 = por %p55, %p56
      %s59 = sadd.s32 %s58, 1
      %p62 = scmp.eq.s32.totalorder %s24, 1
      %p63 = scmp.ne.s32.totalorder %s58, %s60
      %p64 = scmp.eq.s32.totalorder %s24, 0
      %p65 = por %p63, %p64
      %p66 = scmp.ne.s32.totalorder %s58, %s60
      %p67 = scmp.eq.s32.totalorder %s29, 1
      %p68 = por %p66, %p67
      %p69 = scmp.ne.s32.totalorder %s60, %s61
      %p70 = scmp.eq.s32.totalorder %s29, 0
      %p71 = por %p69, %p70
      %p72 = scmp.ne.s32.totalorder %s60, %s61
      %p73 = scmp.eq.s32.totalorder %s30, 1
      %p74 = por %p72, %p73
      %p76 = scmp.ne.s32.totalorder %s61, %s75
      %p77 = scmp.eq.s32.totalorder %s30, 0
      %p78 = por %p76, %p77
      %s80 = sadd.s32 %s79, 1
      %p83 = scmp.eq.s32.totalorder %s24, 1
      %p84 = scmp.ne.s32.totalorder %s79, %s81
      %p85 = scmp.eq.s32.totalorder %s24, 0
      %p86 = por %p84, %p85
      %p87 = scmp.ne.s32.totalorder %s79, %s81
      %p88 = scmp.eq.s32.totalorder %s29, 1
      %p89 = por %p87, %p88
      %p90 = scmp.ne.s32.totalorder %s81, %s82
      %p91 = scmp.eq.s32.totalorder %s29, 0
      %p92 = por %p90, %p91
      %p93 = scmp.ne.s32.totalorder %s81, %s82
      %p94 = scmp.eq.s32.totalorder %s30, 1
      %p95 = por %p93, %p94
      %p97 = scmp.ne.s32.totalorder %s82, %s96
      %p98 = scmp.eq.s32.totalorder %s30, 0
      %p99 = por %p97, %p98
      %s101 = sadd.s32 %s100, 1
      %p104 = scmp.eq.s32.totalorder %s24, 1
      %p105 = scmp.ne.s32.totalorder %s100, %s102
      %p106 = scmp.eq.s32.totalorder %s24, 0
      %p107 = por %p105, %p106
      %p108 = scmp.ne.s32.totalorder %s100, %s102
      %p109 = scmp.eq.s32.totalorder %s29, 1
      %p110 = por %p108, %p109
      %p111 = scmp.ne.s32.totalorder %s102, %s103
      %p112 = scmp.eq.s32.totalorder %s29, 0
      %p113 = por %p111, %p112
      %p114 = scmp.ne.s32.totalorder %s102, %s103
      %p115 = scmp.eq.s32.totalorder %s30, 1
      %p116 = por %p114, %p115
      %p118 = scmp.ne.s32.totalorder %s103, %s117
      %p119 = scmp.eq.s32.totalorder %s30, 0
      %p120 = por %p118, %p119
      %s121 = ssub.s32 %s24, %s31
      %p122 = scmp.eq.s32.totalorder %s121, 0
      %s124 = sadd.s32 %s123, 1
      %s125 = scalar_select %p122, %s123, %s124
      %p128 = pneg %p122
      %p129 = scmp.eq.s32.totalorder %s24, 1
      %p130 = por %p128, %p129
      %p131 = scmp.ne.s32.totalorder %s123, %s126
      %p132 = scmp.eq.s32.totalorder %s24, 0
      %p133 = por %p131, %p132
      %p134 = scmp.ne.s32.totalorder %s123, %s126
      %p135 = scmp.eq.s32.totalorder %s29, 1
      %p136 = por %p134, %p135
      %p137 = scmp.ne.s32.totalorder %s126, %s127
      %p138 = scmp.eq.s32.totalorder %s29, 0
      %p139 = por %p137, %p138
      %p140 = scmp.ne.s32.totalorder %s126, %s127
      %p141 = scmp.eq.s32.totalorder %s30, 1
      %p142 = por %p140, %p141
      %p144 = scmp.ne.s32.totalorder %s127, %s143
      %p145 = scmp.eq.s32.totalorder %s30, 0
      %p146 = por %p144, %p145
      %s147 = ssub.s32 %s24, %s31
      %p148 = scmp.eq.s32.totalorder %s147, 0
      %s150 = sadd.s32 %s149, 1
      %s151 = scalar_select %p148, %s149, %s150
      %p154 = pneg %p148
      %p155 = scmp.eq.s32.totalorder %s24, 1
      %p156 = por %p154, %p155
      %p157 = scmp.ne.s32.totalorder %s149, %s152
      %p158 = scmp.eq.s32.totalorder %s24, 0
      %p159 = por %p157, %p158
      %p160 = scmp.ne.s32.totalorder %s149, %s152
      %p161 = scmp.eq.s32.totalorder %s29, 1
      %p162 = por %p160, %p161
      %p163 = scmp.ne.s32.totalorder %s152, %s153
      %p164 = scmp.eq.s32.totalorder %s29, 0
      %p165 = por %p163, %p164
      %p166 = scmp.ne.s32.totalorder %s152, %s153
      %p167 = scmp.eq.s32.totalorder %s30, 1
      %p168 = por %p166, %p167
      %p170 = scmp.ne.s32.totalorder %s153, %s169
      %p171 = scmp.eq.s32.totalorder %s30, 0
      %p172 = por %p170, %p171
      %s173 = ssub.s32 %s24, %s31
      %p174 = scmp.eq.s32.totalorder %s173, 0
      %s176 = sadd.s32 %s175, 1
      %s177 = scalar_select %p174, %s175, %s176
      %p180 = pneg %p174
      %p181 = scmp.eq.s32.totalorder %s24, 1
      %p182 = por %p180, %p181
      %p183 = scmp.ne.s32.totalorder %s175, %s178
      %p184 = scmp.eq.s32.totalorder %s24, 0
      %p185 = por %p183, %p184
      %p186 = scmp.ne.s32.totalorder %s175, %s178
      %p187 = scmp.eq.s32.totalorder %s29, 1
      %p188 = por %p186, %p187
      %p189 = scmp.ne.s32.totalorder %s178, %s179
      %p190 = scmp.eq.s32.totalorder %s29, 0
      %p191 = por %p189, %p190
      %p192 = scmp.ne.s32.totalorder %s178, %s179
      %p193 = scmp.eq.s32.totalorder %s30, 1
      %p194 = por %p192, %p193
      %p196 = scmp.ne.s32.totalorder %s179, %s195
      %p197 = scmp.eq.s32.totalorder %s30, 0
      %p198 = por %p196, %p197
      %p199 = scmp.le.s32.totalorder 1, %s24
      %p200 = scmp.lt.s32.totalorder %s24, 3
      %p201 = pnand %p199, %p200
      %p202 = pneg %p201
      // Predicated region
      $region9: #{level_twavenet_forward.1} parent=5 // pred_check
        _
      $region10: #{level_twavenet_forward.1} parent=5 // pred_check_branch
        %204 = sbr.rel (%p201) target = $region12
      $region11: #{level_twavenet_forward.1} parent=5 // pred_region
        %s205 = ssub.s32 %s24, 1
        // Predicated region
        $region13: #{level_twavenet_forward.1} parent=11 // pred_check
          %p206 = pneg %p71
        $region14: #{level_twavenet_forward.1} parent=11 // pred_check_branch
          %208 = sbr.rel (%p206) target = $region16
        $region15: #{level_twavenet_forward.1} parent=11 // pred_region
          %s210 = ssub.s32 256, 256
          %211 = vsyncadd [#allocation6], %s210
          %s212 = sshll.u32 [#allocation5], 4
          %s213 = int_to_ptr.vmem [resolvable:$true] %s212
          %218 = dma.hbm_to_vmem [thread:$0]  %s1, 256, %s213, [#allocation6], 128, 128, 8
        $region16: #{level_twavenet_forward.1} parent=11 // pred_fallthru
          _
        // Predicated region
        $region17: #{level_twavenet_forward.1} parent=11 // pred_check
          %p219 = pneg %p92
        $region18: #{level_twavenet_forward.1} parent=11 // pred_check_branch
          %221 = sbr.rel (%p219) target = $region20
        $region19: #{level_twavenet_forward.1} parent=11 // pred_region
          %s223 = ssub.s32 256, 256
          %224 = vsyncadd [#allocation6], %s223
          %s225 = sshll.u32 [#allocation7], 4
          %s226 = int_to_ptr.vmem [resolvable:$true] %s225
          %231 = dma.hbm_to_vmem [thread:$0]  %s2, 256, %s226, [#allocation6], 64, 64, 4
        $region20: #{level_twavenet_forward.1} parent=11 // pred_fallthru
          _
        // Predicated region
        $region21: #{level_twavenet_forward.1} parent=11 // pred_check
          %p232 = pneg %p113
        $region22: #{level_twavenet_forward.1} parent=11 // pred_check_branch
          %234 = sbr.rel (%p232) target = $region24
        $region23: #{level_twavenet_forward.1} parent=11 // pred_region
          %s236 = ssub.s32 256, 256
          %237 = vsyncadd [#allocation9], %s236
          %s238 = sshll.u32 [#allocation8], 4
          %s239 = int_to_ptr.vmem [resolvable:$true] %s238
          %244 = dma.hbm_to_vmem [thread:$0]  %s3, 256, %s239, [#allocation9], 64, 64, 4
        $region24: #{level_twavenet_forward.1} parent=11 // pred_fallthru
          _
      $region12: #{level_twavenet_forward.1} parent=5 // pred_fallthru
        _
      %p245 = scmp.lt.s32.totalorder %s24, 2
      // Predicated region
      $region25: #{level_twavenet_forward.1} parent=5 // pred_check
        %p246 = pneg %p245
      $region26: #{level_twavenet_forward.1} parent=5 // pred_check_branch
        %248 = sbr.rel (%p246) target = $region28
      $region27: #{level_twavenet_forward.1} parent=5 // pred_region
        // Predicated region
        $region29: #{level_twavenet_forward.1} parent=27 // pred_check
          %p249 = pneg %p44
        $region30: #{level_twavenet_forward.1} parent=27 // pred_check_branch
          %251 = sbr.rel (%p249) target = $region32
        $region31: #{level_twavenet_forward.1} parent=27 // pred_region
          %s252 = sand.u32 %s34, 1
          %s253 = scalar_lea.sflag [#allocation3], %s252
          %s254 = sand.u32 %s34, 1
          %s255 = smul.addr %s254, 4
          %s256 = scalar_lea.vmem [#allocation2], %s255
          %s258 = ssub.s32 64, 64
          %259 = vsyncadd %s253, %s258
          %s260 = smul.addr %s24, 64
          %s261 = scalar_lea.hbm %s0, %s260
          %s263 = sshll.u32 %s256, 4
          %s264 = int_to_ptr.vmem [resolvable:$true] %s263
          %266 = dma.hbm_to_vmem [thread:$0]  %s261, 64, %s264, %s253
        $region32: #{level_twavenet_forward.1} parent=27 // pred_fallthru
          _
      $region28: #{level_twavenet_forward.1} parent=5 // pred_fallthru
        _
      %p267 = scmp.le.s32.totalorder 1, %s24
      %p268 = scmp.lt.s32.totalorder %s24, 3
      %p269 = pnand %p267, %p268
      %p270 = pneg %p269
      // Predicated region
      $region33: #{level_twavenet_forward.1} parent=5 // pred_check
        _
      $region34: #{level_twavenet_forward.1} parent=5 // pred_check_branch
        %272 = sbr.rel (%p269) target = $region36
      $region35: #{level_twavenet_forward.1} parent=5 // pred_region
        %s273 = ssub.s32 %s24, 1
        %s274 = sand.u32 %s37, 1
        %s275 = scalar_lea.sflag [#allocation3], %s274
        %s276 = sand.u32 %s37, 1
        %s277 = smul.addr %s276, 4
        %s278 = scalar_lea.vmem [#allocation2], %s277
        // Predicated region
        $region37: #{level_twavenet_forward.1} parent=35 // pred_check
          %p279 = pneg %p50
        $region38: #{level_twavenet_forward.1} parent=35 // pred_check_branch
          %281 = sbr.rel (%p279) target = $region40
        $region39: #{level_twavenet_forward.1} parent=35 // pred_region
          %282 = dma.done %s275, 64
        $region40: #{level_twavenet_forward.1} parent=35 // pred_fallthru
          _
        // Predicated region
        $region41: #{level_twavenet_forward.1} parent=35 // pred_check
          %p283 = pneg %p71
        $region42: #{level_twavenet_forward.1} parent=35 // pred_check_branch
          %285 = sbr.rel (%p283) target = $region44
        $region43: #{level_twavenet_forward.1} parent=35 // pred_region
          %286 = dma.done [#allocation6], 256
        $region44: #{level_twavenet_forward.1} parent=35 // pred_fallthru
          _
        // Predicated region
        $region45: #{level_twavenet_forward.1} parent=35 // pred_check
          %p287 = pneg %p92
        $region46: #{level_twavenet_forward.1} parent=35 // pred_check_branch
          %289 = sbr.rel (%p287) target = $region48
        $region47: #{level_twavenet_forward.1} parent=35 // pred_region
          %290 = dma.done [#allocation6], 256
        $region48: #{level_twavenet_forward.1} parent=35 // pred_fallthru
          _
        // Predicated region
        $region49: #{level_twavenet_forward.1} parent=35 // pred_check
          %p291 = pneg %p113
        $region50: #{level_twavenet_forward.1} parent=35 // pred_check_branch
          %293 = sbr.rel (%p291) target = $region52
        $region51: #{level_twavenet_forward.1} parent=35 // pred_region
          %294 = dma.done [#allocation9], 256
        $region52: #{level_twavenet_forward.1} parent=35 // pred_fallthru
          _
        %s295 = sand.u32 %s37, 1
        %s296 = scalar_lea.sflag [#allocation3], %s295
        %s297 = sand.u32 %s37, 1
        %s298 = smul.addr %s297, 4
        %s299 = scalar_lea.vmem [#allocation2], %s298
        %p300 = pneg %p50
        %p301 = pneg %p47
        %p302 = pneg %p71
        %p303 = pneg %p68
        %p304 = pneg %p92
        %p305 = pneg %p89
        %p306 = pneg %p113
        %p307 = pneg %p110
        %p308 = pneg %p139
        %p309 = pneg %p136
        %s310 = sand.u32 %s126, 1
        %s311 = scalar_lea.sflag [#allocation4], %s310
        %s312 = sand.u32 %s126, 1
        %s313 = smul.addr %s312, 4
        %s314 = scalar_lea.vmem [#allocation10], %s313
        %p315 = pneg %p165
        %p316 = pneg %p162
        %s317 = sand.u32 %s29, 1
        %s318 = scalar_lea.sflag [#allocation12], %s317
        %s319 = sand.u32 %s152, 1
        %s320 = smul.addr %s319, 4
        %s321 = scalar_lea.vmem [#allocation11], %s320
        %p322 = pneg %p191
        %p323 = pneg %p188
        %s324 = sand.u32 %s29, 1
        %s325 = scalar_lea.sflag [#allocation12], %s324
        %s326 = sand.u32 %s178, 1
        %s327 = scalar_lea.vmem [#allocation13], %s326
        %v328 = vld [vmem:[%s278] sm:$0xf]
        %v329 = vld [vmem:[#allocation5] sm:$0xff]
        %v330 = vld [vmem:[#allocation5 + $0x8] sm:$0xff]
        %vm331 = vcmask 130048
        %v333 = vsel %vm331, %v328, 0
        %335 = vmatprep.subr.mxu0 0.0
        %v336 = vand.u32 %v329, 4294901760
        %337 = vmatpush1.msra.mxu0 %v336
        %338 = vmatprep.subr.mxu0 0.0
        %v339 = vand.u32 %v330, 4294901760
        %340 = vmatpush1.msra.mxu0 %v339
        %341 = vmatprep.subr.mxu0 0.0
        %342 = vmatpush1.msra.mxu0 0.0
        %343 = vmatprep.subr.mxu0 0.0
        %344 = vmatpush1.msra.mxu0 0.0
        %345 = vmatprep.subr.mxu0 0.0
        %346 = vmatpush1.msra.mxu0 0.0
        %347 = vmatprep.subr.mxu0 0.0
        %348 = vmatpush1.msra.mxu0 0.0
        %349 = vmatprep.subr.mxu0 0.0
        %350 = vmatpush1.msra.mxu0 0.0
        %351 = vmatprep.subr.mxu0 0.0
        %352 = vmatpush1.msra.mxu0 0.0
        %353 = vmatprep.subr.mxu0 0.0
        %354 = vmatpush1.msra.mxu0 0.0
        %355 = vmatprep.subr.mxu0 0.0
        %356 = vmatpush1.msra.mxu0 0.0
        %357 = vmatprep.subr.mxu0 0.0
        %358 = vmatpush1.msra.mxu0 0.0
        %359 = vmatprep.subr.mxu0 0.0
        %360 = vmatpush1.msra.mxu0 0.0
        %361 = vmatprep.subr.mxu0 0.0
        %362 = vmatpush1.msra.mxu0 0.0
        %363 = vmatprep.subr.mxu0 0.0
        %364 = vmatpush1.msra.mxu0 0.0
        %365 = vmatprep.subr.mxu0 0.0
        %366 = vmatpush1.msra.mxu0 0.0
        %367 = vmatprep.subr.mxu0 0.0
        %368 = vmatpush1.msra.mxu0 0.0
        %369 = vmatprep.subr.mxu0 0.0
        %370 = vmatpush1.msra.mxu0 0.0
        %371 = vmatprep.subr.mxu0 0.0
        %372 = vmatpush1.msra.mxu0 0.0
        %373 = vmatprep.subr.mxu0 0.0
        %374 = vmatpush1.msra.mxu0 0.0
        %375 = vmatprep.subr.mxu0 0.0
        %376 = vmatpush1.msra.mxu0 0.0
        %377 = vmatprep.subr.mxu0 0.0
        %378 = vmatpush1.msra.mxu0 0.0
        %379 = vmatprep.subr.mxu0 0.0
        %380 = vmatpush1.msra.mxu0 0.0
        %381 = vmatprep.subr.mxu0 0.0
        %382 = vmatpush1.msra.mxu0 0.0
        %383 = vmatprep.subr.mxu0 0.0
        %384 = vmatpush1.msra.mxu0 0.0
        %385 = vmatprep.subr.mxu0 0.0
        %386 = vmatpush1.msra.mxu0 0.0
        %387 = vmatprep.subr.mxu0 0.0
        %388 = vmatpush1.msra.mxu0 0.0
        %389 = vmatprep.subr.mxu0 0.0
        %390 = vmatpush1.msra.mxu0 0.0
        %391 = vmatprep.subr.mxu0 0.0
        %392 = vmatpush1.msra.mxu0 0.0
        %393 = vmatprep.subr.mxu0 0.0
        %394 = vmatpush1.msra.mxu0 0.0
        %395 = vmatprep.subr.mxu0 0.0
        %396 = vmatpush1.msra.mxu0 0.0
        %397 = vmatprep.subr.mxu0 0.0
        %398 = vmatpush1.msra.mxu0 0.0
        %399 = vmatprep.subr.mxu0 0.0
        %400 = vmatpush1.msra.mxu0 0.0
        %401 = vmatprep.mubr.f32.mxu0 0.0
        %v402 = vand.u32 %v333, 4294901760
        %v403 = vsub.f32 %v333, %v402
        %v404 = vand.u32 %v403, 4294901760
        %v405 = vsub.f32 %v403, %v404
        %v406 = vand.u32 %v405, 4294901760
        %407 = vmatmul.mubr.f32.gmra.mrb[0].mxu0 %v406
        %v408 = vpop.f32.mrb[0].mxu0
        %v409 = vadd.f32 0.0, %v408
        %v410 = vpop.f32.mrb[0].mxu0
        %411 = vdwg.mxu0
        %412 = vmatprep.subr.mxu0 0.0
        %v413 = vand.u32 %v329, 4294901760
        %v414 = vsub.f32 %v329, %v413
        %v415 = vand.u32 %v414, 4294901760
        %v416 = vsub.f32 %v414, %v415
        %v417 = vand.u32 %v416, 4294901760
        %418 = vmatpush1.msra.mxu0 %v417
        %419 = vmatprep.subr.mxu0 0.0
        %v420 = vand.u32 %v330, 4294901760
        %v421 = vsub.f32 %v330, %v420
        %v422 = vand.u32 %v421, 4294901760
        %v423 = vsub.f32 %v421, %v422
        %v424 = vand.u32 %v423, 4294901760
        %425 = vmatpush1.msra.mxu0 %v424
        %426 = vmatprep.subr.mxu0 0.0
        %427 = vmatpush1.msra.mxu0 0.0
        %428 = vmatprep.subr.mxu0 0.0
        %429 = vmatpush1.msra.mxu0 0.0
        %430 = vmatprep.subr.mxu0 0.0
        %431 = vmatpush1.msra.mxu0 0.0
        %432 = vmatprep.subr.mxu0 0.0
        %433 = vmatpush1.msra.mxu0 0.0
        %434 = vmatprep.subr.mxu0 0.0
        %435 = vmatpush1.msra.mxu0 0.0
        %436 = vmatprep.subr.mxu0 0.0
        %437 = vmatpush1.msra.mxu0 0.0
        %438 = vmatprep.subr.mxu0 0.0
        %439 = vmatpush1.msra.mxu0 0.0
        %440 = vmatprep.subr.mxu0 0.0
        %441 = vmatpush1.msra.mxu0 0.0
        %442 = vmatprep.subr.mxu0 0.0
        %443 = vmatpush1.msra.mxu0 0.0
        %444 = vmatprep.subr.mxu0 0.0
        %445 = vmatpush1.msra.mxu0 0.0
        %446 = vmatprep.subr.mxu0 0.0
        %447 = vmatpush1.msra.mxu0 0.0
        %448 = vmatprep.subr.mxu0 0.0
        %449 = vmatpush1.msra.mxu0 0.0
        %450 = vmatprep.subr.mxu0 0.0
        %451 = vmatpush1.msra.mxu0 0.0
        %452 = vmatprep.subr.mxu0 0.0
        %453 = vmatpush1.msra.mxu0 0.0
        %454 = vmatprep.subr.mxu0 0.0
        %455 = vmatpush1.msra.mxu0 0.0
        %456 = vmatprep.subr.mxu0 0.0
        %457 = vmatpush1.msra.mxu0 0.0
        %458 = vmatprep.subr.mxu0 0.0
        %459 = vmatpush1.msra.mxu0 0.0
        %460 = vmatprep.subr.mxu0 0.0
        %461 = vmatpush1.msra.mxu0 0.0
        %462 = vmatprep.subr.mxu0 0.0
        %463 = vmatpush1.msra.mxu0 0.0
        %464 = vmatprep.subr.mxu0 0.0
        %465 = vmatpush1.msra.mxu0 0.0
        %466 = vmatprep.subr.mxu0 0.0
        %467 = vmatpush1.msra.mxu0 0.0
        %468 = vmatprep.subr.mxu0 0.0
        %469 = vmatpush1.msra.mxu0 0.0
        %470 = vmatprep.subr.mxu0 0.0
        %471 = vmatpush1.msra.mxu0 0.0
        %472 = vmatprep.subr.mxu0 0.0
        %473 = vmatpush1.msra.mxu0 0.0
        %474 = vmatprep.subr.mxu0 0.0
        %475 = vmatpush1.msra.mxu0 0.0
        %476 = vmatprep.subr.mxu0 0.0
        %477 = vmatpush1.msra.mxu0 0.0
        %478 = vmatprep.subr.mxu0 0.0
        %479 = vmatpush1.msra.mxu0 0.0
        %480 = vmatprep.subr.mxu0 0.0
        %481 = vmatpush1.msra.mxu0 0.0
        %482 = vmatprep.subr.mxu0 0.0
        %483 = vmatpush1.msra.mxu0 0.0
        %484 = vmatprep.subr.mxu0 0.0
        %485 = vmatpush1.msra.mxu0 0.0
        %486 = vmatprep.mubr.f32.mxu0 0.0
        %v487 = vand.u32 %v333, 4294901760
        %488 = vmatmul.mubr.f32.gmra.mrb[0].mxu0 %v487
        %v489 = vpop.f32.mrb[0].mxu0
        %v490 = vadd.f32 %v409, %v489
        %v491 = vpop.f32.mrb[0].mxu0
        %492 = vdwg.mxu0
        %493 = vmatprep.subr.mxu0 0.0
        %v494 = vand.u32 %v329, 4294901760
        %v495 = vsub.f32 %v329, %v494
        %496 = vmatpush1.msra.mxu0 %v495
        %497 = vmatprep.subr.mxu0 0.0
        %v498 = vand.u32 %v330, 4294901760
        %v499 = vsub.f32 %v330, %v498
        %500 = vmatpush1.msra.mxu0 %v499
        %501 = vmatprep.subr.mxu0 0.0
        %502 = vmatpush1.msra.mxu0 0.0
        %503 = vmatprep.subr.mxu0 0.0
        %504 = vmatpush1.msra.mxu0 0.0
        %505 = vmatprep.subr.mxu0 0.0
        %506 = vmatpush1.msra.mxu0 0.0
        %507 = vmatprep.subr.mxu0 0.0
        %508 = vmatpush1.msra.mxu0 0.0
        %509 = vmatprep.subr.mxu0 0.0
        %510 = vmatpush1.msra.mxu0 0.0
        %511 = vmatprep.subr.mxu0 0.0
        %512 = vmatpush1.msra.mxu0 0.0
        %513 = vmatprep.subr.mxu0 0.0
        %514 = vmatpush1.msra.mxu0 0.0
        %515 = vmatprep.subr.mxu0 0.0
        %516 = vmatpush1.msra.mxu0 0.0
        %517 = vmatprep.subr.mxu0 0.0
        %518 = vmatpush1.msra.mxu0 0.0
        %519 = vmatprep.subr.mxu0 0.0
        %520 = vmatpush1.msra.mxu0 0.0
        %521 = vmatprep.subr.mxu0 0.0
        %522 = vmatpush1.msra.mxu0 0.0
        %523 = vmatprep.subr.mxu0 0.0
        %524 = vmatpush1.msra.mxu0 0.0
        %525 = vmatprep.subr.mxu0 0.0
        %526 = vmatpush1.msra.mxu0 0.0
        %527 = vmatprep.subr.mxu0 0.0
        %528 = vmatpush1.msra.mxu0 0.0
        %529 = vmatprep.subr.mxu0 0.0
        %530 = vmatpush1.msra.mxu0 0.0
        %531 = vmatprep.subr.mxu0 0.0
        %532 = vmatpush1.msra.mxu0 0.0
        %533 = vmatprep.subr.mxu0 0.0
        %534 = vmatpush1.msra.mxu0 0.0
        %535 = vmatprep.subr.mxu0 0.0
        %536 = vmatpush1.msra.mxu0 0.0
        %537 = vmatprep.subr.mxu0 0.0
        %538 = vmatpush1.msra.mxu0 0.0
        %539 = vmatprep.subr.mxu0 0.0
        %540 = vmatpush1.msra.mxu0 0.0
        %541 = vmatprep.subr.mxu0 0.0
        %542 = vmatpush1.msra.mxu0 0.0
        %543 = vmatprep.subr.mxu0 0.0
        %544 = vmatpush1.msra.mxu0 0.0
        %545 = vmatprep.subr.mxu0 0.0
        %546 = vmatpush1.msra.mxu0 0.0
        %547 = vmatprep.subr.mxu0 0.0
        %548 = vmatpush1.msra.mxu0 0.0
        %549 = vmatprep.subr.mxu0 0.0
        %550 = vmatpush1.msra.mxu0 0.0
        %551 = vmatprep.subr.mxu0 0.0
        %552 = vmatpush1.msra.mxu0 0.0
        %553 = vmatprep.subr.mxu0 0.0
        %554 = vmatpush1.msra.mxu0 0.0
        %555 = vmatprep.subr.mxu0 0.0
        %556 = vmatpush1.msra.mxu0 0.0
        %557 = vmatprep.subr.mxu0 0.0
        %558 = vmatpush1.msra.mxu0 0.0
        %559 = vmatprep.subr.mxu0 0.0
        %560 = vmatpush1.msra.mxu0 0.0
        %561 = vmatprep.mubr.f32.mxu0 0.0
        %v562 = vand.u32 %v333, 4294901760
        %v563 = vsub.f32 %v333, %v562
        %564 = vmatmul.mubr.f32.gmra.mrb[0].mxu0 %v563
        %v565 = vpop.f32.mrb[0].mxu0
        %v566 = vadd.f32 %v490, %v565
        %v567 = vpop.f32.mrb[0].mxu0
        %568 = vdwg.mxu0
        %569 = vmatprep.subr.mxu0 0.0
        %v570 = vand.u32 %v329, 4294901760
        %571 = vmatpush1.msra.mxu0 %v570
        %572 = vmatprep.subr.mxu0 0.0
        %v573 = vand.u32 %v330, 4294901760
        %574 = vmatpush1.msra.mxu0 %v573
        %575 = vmatprep.subr.mxu0 0.0
        %576 = vmatpush1.msra.mxu0 0.0
        %577 = vmatprep.subr.mxu0 0.0
        %578 = vmatpush1.msra.mxu0 0.0
        %579 = vmatprep.subr.mxu0 0.0
        %580 = vmatpush1.msra.mxu0 0.0
        %581 = vmatprep.subr.mxu0 0.0
        %582 = vmatpush1.msra.mxu0 0.0
        %583 = vmatprep.subr.mxu0 0.0
        %584 = vmatpush1.msra.mxu0 0.0
        %585 = vmatprep.subr.mxu0 0.0
        %586 = vmatpush1.msra.mxu0 0.0
        %587 = vmatprep.subr.mxu0 0.0
        %588 = vmatpush1.msra.mxu0 0.0
        %589 = vmatprep.subr.mxu0 0.0
        %590 = vmatpush1.msra.mxu0 0.0
        %591 = vmatprep.subr.mxu0 0.0
        %592 = vmatpush1.msra.mxu0 0.0
        %593 = vmatprep.subr.mxu0 0.0
        %594 = vmatpush1.msra.mxu0 0.0
        %595 = vmatprep.subr.mxu0 0.0
        %596 = vmatpush1.msra.mxu0 0.0
        %597 = vmatprep.subr.mxu0 0.0
        %598 = vmatpush1.msra.mxu0 0.0
        %599 = vmatprep.subr.mxu0 0.0
        %600 = vmatpush1.msra.mxu0 0.0
        %601 = vmatprep.subr.mxu0 0.0
        %602 = vmatpush1.msra.mxu0 0.0
        %603 = vmatprep.subr.mxu0 0.0
        %604 = vmatpush1.msra.mxu0 0.0
        %605 = vmatprep.subr.mxu0 0.0
        %606 = vmatpush1.msra.mxu0 0.0
        %607 = vmatprep.subr.mxu0 0.0
        %608 = vmatpush1.msra.mxu0 0.0
        %609 = vmatprep.subr.mxu0 0.0
        %610 = vmatpush1.msra.mxu0 0.0
        %611 = vmatprep.subr.mxu0 0.0
        %612 = vmatpush1.msra.mxu0 0.0
        %613 = vmatprep.subr.mxu0 0.0
        %614 = vmatpush1.msra.mxu0 0.0
        %615 = vmatprep.subr.mxu0 0.0
        %616 = vmatpush1.msra.mxu0 0.0
        %617 = vmatprep.subr.mxu0 0.0
        %618 = vmatpush1.msra.mxu0 0.0
        %619 = vmatprep.subr.mxu0 0.0
        %620 = vmatpush1.msra.mxu0 0.0
        %621 = vmatprep.subr.mxu0 0.0
        %622 = vmatpush1.msra.mxu0 0.0
        %623 = vmatprep.subr.mxu0 0.0
        %624 = vmatpush1.msra.mxu0 0.0
        %625 = vmatprep.subr.mxu0 0.0
        %626 = vmatpush1.msra.mxu0 0.0
        %627 = vmatprep.subr.mxu0 0.0
        %628 = vmatpush1.msra.mxu0 0.0
        %629 = vmatprep.subr.mxu0 0.0
        %630 = vmatpush1.msra.mxu0 0.0
        %631 = vmatprep.subr.mxu0 0.0
        %632 = vmatpush1.msra.mxu0 0.0
        %633 = vmatprep.subr.mxu0 0.0
        %634 = vmatpush1.msra.mxu0 0.0
        %635 = vmatprep.mubr.f32.mxu0 0.0
        %v636 = vand.u32 %v333, 4294901760
        %v637 = vsub.f32 %v333, %v636
        %v638 = vand.u32 %v637, 4294901760
        %639 = vmatmul.mubr.f32.gmra.mrb[0].mxu0 %v638
        %v640 = vpop.f32.mrb[0].mxu0
        %v641 = vadd.f32 %v566, %v640
        %v642 = vpop.f32.mrb[0].mxu0
        %643 = vdwg.mxu0
        %644 = vmatprep.subr.mxu0 0.0
        %v645 = vand.u32 %v329, 4294901760
        %v646 = vsub.f32 %v329, %v645
        %v647 = vand.u32 %v646, 4294901760
        %648 = vmatpush1.msra.mxu0 %v647
        %649 = vmatprep.subr.mxu0 0.0
        %v650 = vand.u32 %v330, 4294901760
        %v651 = vsub.f32 %v330, %v650
        %v652 = vand.u32 %v651, 4294901760
        %653 = vmatpush1.msra.mxu0 %v652
        %654 = vmatprep.subr.mxu0 0.0
        %655 = vmatpush1.msra.mxu0 0.0
        %656 = vmatprep.subr.mxu0 0.0
        %657 = vmatpush1.msra.mxu0 0.0
        %658 = vmatprep.subr.mxu0 0.0
        %659 = vmatpush1.msra.mxu0 0.0
        %660 = vmatprep.subr.mxu0 0.0
        %661 = vmatpush1.msra.mxu0 0.0
        %662 = vmatprep.subr.mxu0 0.0
        %663 = vmatpush1.msra.mxu0 0.0
        %664 = vmatprep.subr.mxu0 0.0
        %665 = vmatpush1.msra.mxu0 0.0
        %666 = vmatprep.subr.mxu0 0.0
        %667 = vmatpush1.msra.mxu0 0.0
        %668 = vmatprep.subr.mxu0 0.0
        %669 = vmatpush1.msra.mxu0 0.0
        %670 = vmatprep.subr.mxu0 0.0
        %671 = vmatpush1.msra.mxu0 0.0
        %672 = vmatprep.subr.mxu0 0.0
        %673 = vmatpush1.msra.mxu0 0.0
        %674 = vmatprep.subr.mxu0 0.0
        %675 = vmatpush1.msra.mxu0 0.0
        %676 = vmatprep.subr.mxu0 0.0
        %677 = vmatpush1.msra.mxu0 0.0
        %678 = vmatprep.subr.mxu0 0.0
        %679 = vmatpush1.msra.mxu0 0.0
        %680 = vmatprep.subr.mxu0 0.0
        %681 = vmatpush1.msra.mxu0 0.0
        %682 = vmatprep.subr.mxu0 0.0
        %683 = vmatpush1.msra.mxu0 0.0
        %684 = vmatprep.subr.mxu0 0.0
        %685 = vmatpush1.msra.mxu0 0.0
        %686 = vmatprep.subr.mxu0 0.0
        %687 = vmatpush1.msra.mxu0 0.0
        %688 = vmatprep.subr.mxu0 0.0
        %689 = vmatpush1.msra.mxu0 0.0
        %690 = vmatprep.subr.mxu0 0.0
        %691 = vmatpush1.msra.mxu0 0.0
        %692 = vmatprep.subr.mxu0 0.0
        %693 = vmatpush1.msra.mxu0 0.0
        %694 = vmatprep.subr.mxu0 0.0
        %695 = vmatpush1.msra.mxu0 0.0
        %696 = vmatprep.subr.mxu0 0.0
        %697 = vmatpush1.msra.mxu0 0.0
        %698 = vmatprep.subr.mxu0 0.0
        %699 = vmatpush1.msra.mxu0 0.0
        %700 = vmatprep.subr.mxu0 0.0
        %701 = vmatpush1.msra.mxu0 0.0
        %702 = vmatprep.subr.mxu0 0.0
        %703 = vmatpush1.msra.mxu0 0.0
        %704 = vmatprep.subr.mxu0 0.0
        %705 = vmatpush1.msra.mxu0 0.0
        %706 = vmatprep.subr.mxu0 0.0
        %707 = vmatpush1.msra.mxu0 0.0
        %708 = vmatprep.subr.mxu0 0.0
        %709 = vmatpush1.msra.mxu0 0.0
        %710 = vmatprep.subr.mxu0 0.0
        %711 = vmatpush1.msra.mxu0 0.0
        %712 = vmatprep.subr.mxu0 0.0
        %713 = vmatpush1.msra.mxu0 0.0
        %714 = vmatprep.mubr.f32.mxu0 0.0
        %v715 = vand.u32 %v333, 4294901760
        %716 = vmatmul.mubr.f32.gmra.mrb[0].mxu0 %v715
        %v717 = vpop.f32.mrb[0].mxu0
        %v718 = vadd.f32 %v641, %v717
        %v719 = vpop.f32.mrb[0].mxu0
        %720 = vdwg.mxu0
        %721 = vmatprep.subr.mxu0 0.0
        %v722 = vand.u32 %v329, 4294901760
        %723 = vmatpush1.msra.mxu0 %v722
        %724 = vmatprep.subr.mxu0 0.0
        %v725 = vand.u32 %v330, 4294901760
        %726 = vmatpush1.msra.mxu0 %v725
        %727 = vmatprep.subr.mxu0 0.0
        %728 = vmatpush1.msra.mxu0 0.0
        %729 = vmatprep.subr.mxu0 0.0
        %730 = vmatpush1.msra.mxu0 0.0
        %731 = vmatprep.subr.mxu0 0.0
        %732 = vmatpush1.msra.mxu0 0.0
        %733 = vmatprep.subr.mxu0 0.0
        %734 = vmatpush1.msra.mxu0 0.0
        %735 = vmatprep.subr.mxu0 0.0
        %736 = vmatpush1.msra.mxu0 0.0
        %737 = vmatprep.subr.mxu0 0.0
        %738 = vmatpush1.msra.mxu0 0.0
        %739 = vmatprep.subr.mxu0 0.0
        %740 = vmatpush1.msra.mxu0 0.0
        %741 = vmatprep.subr.mxu0 0.0
        %742 = vmatpush1.msra.mxu0 0.0
        %743 = vmatprep.subr.mxu0 0.0
        %744 = vmatpush1.msra.mxu0 0.0
        %745 = vmatprep.subr.mxu0 0.0
        %746 = vmatpush1.msra.mxu0 0.0
        %747 = vmatprep.subr.mxu0 0.0
        %748 = vmatpush1.msra.mxu0 0.0
        %749 = vmatprep.subr.mxu0 0.0
        %750 = vmatpush1.msra.mxu0 0.0
        %751 = vmatprep.subr.mxu0 0.0
        %752 = vmatpush1.msra.mxu0 0.0
        %753 = vmatprep.subr.mxu0 0.0
        %754 = vmatpush1.msra.mxu0 0.0
        %755 = vmatprep.subr.mxu0 0.0
        %756 = vmatpush1.msra.mxu0 0.0
        %757 = vmatprep.subr.mxu0 0.0
        %758 = vmatpush1.msra.mxu0 0.0
        %759 = vmatprep.subr.mxu0 0.0
        %760 = vmatpush1.msra.mxu0 0.0
        %761 = vmatprep.subr.mxu0 0.0
        %762 = vmatpush1.msra.mxu0 0.0
        %763 = vmatprep.subr.mxu0 0.0
        %764 = vmatpush1.msra.mxu0 0.0
        %765 = vmatprep.subr.mxu0 0.0
        %766 = vmatpush1.msra.mxu0 0.0
        %767 = vmatprep.subr.mxu0 0.0
        %768 = vmatpush1.msra.mxu0 0.0
        %769 = vmatprep.subr.mxu0 0.0
        %770 = vmatpush1.msra.mxu0 0.0
        %771 = vmatprep.subr.mxu0 0.0
        %772 = vmatpush1.msra.mxu0 0.0
        %773 = vmatprep.subr.mxu0 0.0
        %774 = vmatpush1.msra.mxu0 0.0
        %775 = vmatprep.subr.mxu0 0.0
        %776 = vmatpush1.msra.mxu0 0.0
        %777 = vmatprep.subr.mxu0 0.0
        %778 = vmatpush1.msra.mxu0 0.0
        %779 = vmatprep.subr.mxu0 0.0
        %780 = vmatpush1.msra.mxu0 0.0
        %781 = vmatprep.subr.mxu0 0.0
        %782 = vmatpush1.msra.mxu0 0.0
        %783 = vmatprep.subr.mxu0 0.0
        %784 = vmatpush1.msra.mxu0 0.0
        %785 = vmatprep.subr.mxu0 0.0
        %786 = vmatpush1.msra.mxu0 0.0
        %787 = vmatprep.mubr.f32.mxu0 0.0
        %v788 = vand.u32 %v333, 4294901760
        %789 = vmatmul.mubr.f32.gmra.mrb[0].mxu0 %v788
        %v790 = vpop.f32.mrb[0].mxu0
        %v791 = vadd.f32 %v718, %v790
        %v792 = vpop.f32.mrb[0].mxu0
        %793 = vdwg.mxu0
        %v794 = vld [vmem:[#allocation7] sm:$0xf]
        %v795 = vld [vmem:[#allocation8] sm:$0xf]
        %s796 = scalar_lea.vmem [#allocation7], 4
        %v797 = vld [vmem:[%s796] sm:$0xf]
        %s798 = scalar_lea.vmem [#allocation8], 4
        %v799 = vld [vmem:[%s798] sm:$0xf]
        %801 = vrot.lane.b32.xlu0 %v791, 118
        %v802 = vpop.permute.xlu0 %801
        %804 = vrot.lane.b32.xlu0 %v791, 120
        %v805 = vpop.permute.xlu0 %804
        %807 = vrot.lane.b32.xlu0 %v791, 122
        %v808 = vpop.permute.xlu0 %807
        %810 = vrot.lane.b32.xlu0 %v791, 124
        %v811 = vpop.permute.xlu0 %810
        %813 = vrot.lane.b32.xlu0 %v791, 126
        %v814 = vpop.permute.xlu0 %813
        %vm816 = vcmask 7168
        %v817 = vsel %vm816, %v802, %v805
        %vm818 = vcmask 15360
        %v819 = vsel %vm818, %v817, %v808
        %vm820 = vcmask 80896
        %v821 = vsel %vm820, %v819, %v811
        %vm822 = vcmask 89088
        %v823 = vsel %vm822, %v821, %v814
        %v825 = vrot.slane %v823, 4
        %826 = vrot.lane.b32.xlu0 %v825, 127
        %v827 = vpop.permute.xlu0 %826
        %829 = vrot.lane.b32.xlu0 %v823, 126
        %v830 = vpop.permute.xlu0 %829
        %vm831 = vcmask 1043456
        %v832 = vsel %vm831, %v823, %v827
        %834 = vset.pattern.permute.xlu0 0
        %835 = vperm.xlu0 %834, %v795
        %v836 = vpop.permute.xlu0 %835
        %vm838 = vcmask 97280
        %v840 = vsel %vm838, %v794, 0
        %v842 = vsel %vm831, %v830, 0
        %844 = vmatprep.subr.mxu0 0.0
        %v845 = vand.u32 %v832, 4294901760
        %846 = vmatpush1.msra.mxu0 %v845
        %847 = vmatprep.subr.mxu0 0.0
        %v848 = vand.u32 %v842, 4294901760
        %849 = vmatpush1.msra.mxu0 %v848
        %850 = vmatprep.subr.mxu0 0.0
        %851 = vmatpush1.msra.mxu0 0.0
        %852 = vmatprep.subr.mxu0 0.0
        %853 = vmatpush1.msra.mxu0 0.0
        %854 = vmatprep.subr.mxu0 0.0
        %855 = vmatpush1.msra.mxu0 0.0
        %856 = vmatprep.subr.mxu0 0.0
        %857 = vmatpush1.msra.mxu0 0.0
        %858 = vmatprep.subr.mxu0 0.0
        %859 = vmatpush1.msra.mxu0 0.0
        %860 = vmatprep.subr.mxu0 0.0
        %861 = vmatpush1.msra.mxu0 0.0
        %862 = vmatprep.subr.mxu0 0.0
        %863 = vmatpush1.msra.mxu0 0.0
        %864 = vmatprep.subr.mxu0 0.0
        %865 = vmatpush1.msra.mxu0 0.0
        %866 = vmatprep.subr.mxu0 0.0
        %867 = vmatpush1.msra.mxu0 0.0
        %868 = vmatprep.subr.mxu0 0.0
        %869 = vmatpush1.msra.mxu0 0.0
        %870 = vmatprep.subr.mxu0 0.0
        %871 = vmatpush1.msra.mxu0 0.0
        %872 = vmatprep.subr.mxu0 0.0
        %873 = vmatpush1.msra.mxu0 0.0
        %874 = vmatprep.subr.mxu0 0.0
        %875 = vmatpush1.msra.mxu0 0.0
        %876 = vmatprep.subr.mxu0 0.0
        %877 = vmatpush1.msra.mxu0 0.0
        %878 = vmatprep.subr.mxu0 0.0
        %879 = vmatpush1.msra.mxu0 0.0
        %880 = vmatprep.subr.mxu0 0.0
        %881 = vmatpush1.msra.mxu0 0.0
        %882 = vmatprep.subr.mxu0 0.0
        %883 = vmatpush1.msra.mxu0 0.0
        %884 = vmatprep.subr.mxu0 0.0
        %885 = vmatpush1.msra.mxu0 0.0
        %886 = vmatprep.subr.mxu0 0.0
        %887 = vmatpush1.msra.mxu0 0.0
        %888 = vmatprep.subr.mxu0 0.0
        %889 = vmatpush1.msra.mxu0 0.0
        %890 = vmatprep.subr.mxu0 0.0
        %891 = vmatpush1.msra.mxu0 0.0
        %892 = vmatprep.subr.mxu0 0.0
        %893 = vmatpush1.msra.mxu0 0.0
        %894 = vmatprep.subr.mxu0 0.0
        %895 = vmatpush1.msra.mxu0 0.0
        %896 = vmatprep.subr.mxu0 0.0
        %897 = vmatpush1.msra.mxu0 0.0
        %898 = vmatprep.subr.mxu0 0.0
        %899 = vmatpush1.msra.mxu0 0.0
        %900 = vmatprep.subr.mxu0 0.0
        %901 = vmatpush1.msra.mxu0 0.0
        %902 = vmatprep.subr.mxu0 0.0
        %903 = vmatpush1.msra.mxu0 0.0
        %904 = vmatprep.subr.mxu0 0.0
        %905 = vmatpush1.msra.mxu0 0.0
        %906 = vmatprep.subr.mxu0 0.0
        %907 = vmatpush1.msra.mxu0 0.0
        %908 = vmatprep.subr.mxu0 0.0
        %909 = vmatpush1.msra.mxu0 0.0
        %910 = vmatprep.mubr.f32.mxu0 0.0
        %v911 = vand.u32 %v840, 4294901760
        %v912 = vsub.f32 %v840, %v911
        %v913 = vand.u32 %v912, 4294901760
        %v914 = vsub.f32 %v912, %v913
        %v915 = vand.u32 %v914, 4294901760
        %916 = vmatmul.mubr.f32.gmra.mrb[0].mxu0 %v915
        %v917 = vpop.f32.mrb[0].mxu0
        %v918 = vadd.f32 %v836, %v917
        %v919 = vpop.f32.mrb[0].mxu0
        %920 = vdwg.mxu0
        %921 = vmatprep.subr.mxu0 0.0
        %v922 = vand.u32 %v832, 4294901760
        %v923 = vsub.f32 %v832, %v922
        %v924 = vand.u32 %v923, 4294901760
        %v925 = vsub.f32 %v923, %v924
        %v926 = vand.u32 %v925, 4294901760
        %927 = vmatpush1.msra.mxu0 %v926
        %928 = vmatprep.subr.mxu0 0.0
        %v929 = vand.u32 %v842, 4294901760
        %v930 = vsub.f32 %v842, %v929
        %v931 = vand.u32 %v930, 4294901760
        %v932 = vsub.f32 %v930, %v931
        %v933 = vand.u32 %v932, 4294901760
        %934 = vmatpush1.msra.mxu0 %v933
        %935 = vmatprep.subr.mxu0 0.0
        %936 = vmatpush1.msra.mxu0 0.0
        %937 = vmatprep.subr.mxu0 0.0
        %938 = vmatpush1.msra.mxu0 0.0
        %939 = vmatprep.subr.mxu0 0.0
        %940 = vmatpush1.msra.mxu0 0.0
        %941 = vmatprep.subr.mxu0 0.0
        %942 = vmatpush1.msra.mxu0 0.0
        %943 = vmatprep.subr.mxu0 0.0
        %944 = vmatpush1.msra.mxu0 0.0
        %945 = vmatprep.subr.mxu0 0.0
        %946 = vmatpush1.msra.mxu0 0.0
        %947 = vmatprep.subr.mxu0 0.0
        %948 = vmatpush1.msra.mxu0 0.0
        %949 = vmatprep.subr.mxu0 0.0
        %950 = vmatpush1.msra.mxu0 0.0
        %951 = vmatprep.subr.mxu0 0.0
        %952 = vmatpush1.msra.mxu0 0.0
        %953 = vmatprep.subr.mxu0 0.0
        %954 = vmatpush1.msra.mxu0 0.0
        %955 = vmatprep.subr.mxu0 0.0
        %956 = vmatpush1.msra.mxu0 0.0
        %957 = vmatprep.subr.mxu0 0.0
        %958 = vmatpush1.msra.mxu0 0.0
        %959 = vmatprep.subr.mxu0 0.0
        %960 = vmatpush1.msra.mxu0 0.0
        %961 = vmatprep.subr.mxu0 0.0
        %962 = vmatpush1.msra.mxu0 0.0
        %963 = vmatprep.subr.mxu0 0.0
        %964 = vmatpush1.msra.mxu0 0.0
        %965 = vmatprep.subr.mxu0 0.0
        %966 = vmatpush1.msra.mxu0 0.0
        %967 = vmatprep.subr.mxu0 0.0
        %968 = vmatpush1.msra.mxu0 0.0
        %969 = vmatprep.subr.mxu0 0.0
        %970 = vmatpush1.msra.mxu0 0.0
        %971 = vmatprep.subr.mxu0 0.0
        %972 = vmatpush1.msra.mxu0 0.0
        %973 = vmatprep.subr.mxu0 0.0
        %974 = vmatpush1.msra.mxu0 0.0
        %975 = vmatprep.subr.mxu0 0.0
        %976 = vmatpush1.msra.mxu0 0.0
        %977 = vmatprep.subr.mxu0 0.0
        %978 = vmatpush1.msra.mxu0 0.0
        %979 = vmatprep.subr.mxu0 0.0
        %980 = vmatpush1.msra.mxu0 0.0
        %981 = vmatprep.subr.mxu0 0.0
        %982 = vmatpush1.msra.mxu0 0.0
        %983 = vmatprep.subr.mxu0 0.0
        %984 = vmatpush1.msra.mxu0 0.0
        %985 = vmatprep.subr.mxu0 0.0
        %986 = vmatpush1.msra.mxu0 0.0
        %987 = vmatprep.subr.mxu0 0.0
        %988 = vmatpush1.msra.mxu0 0.0
        %989 = vmatprep.subr.mxu0 0.0
        %990 = vmatpush1.msra.mxu0 0.0
        %991 = vmatprep.subr.mxu0 0.0
        %992 = vmatpush1.msra.mxu0 0.0
        %993 = vmatprep.subr.mxu0 0.0
        %994 = vmatpush1.msra.mxu0 0.0
        %995 = vmatprep.mubr.f32.mxu0 0.0
        %v996 = vand.u32 %v840, 4294901760
        %997 = vmatmul.mubr.f32.gmra.mrb[0].mxu0 %v996
        %v998 = vpop.f32.mrb[0].mxu0
        %v999 = vadd.f32 %v918, %v998
        %v1000 = vpop.f32.mrb[0].mxu0
        %1001 = vdwg.mxu0
        %1002 = vmatprep.subr.mxu0 0.0
        %v1003 = vand.u32 %v832, 4294901760
        %v1004 = vsub.f32 %v832, %v1003
        %1005 = vmatpush1.msra.mxu0 %v1004
        %1006 = vmatprep.subr.mxu0 0.0
        %v1007 = vand.u32 %v842, 4294901760
        %v1008 = vsub.f32 %v842, %v1007
        %1009 = vmatpush1.msra.mxu0 %v1008
        %1010 = vmatprep.subr.mxu0 0.0
        %1011 = vmatpush1.msra.mxu0 0.0
        %1012 = vmatprep.subr.mxu0 0.0
        %1013 = vmatpush1.msra.mxu0 0.0
        %1014 = vmatprep.subr.mxu0 0.0
        %1015 = vmatpush1.msra.mxu0 0.0
        %1016 = vmatprep.subr.mxu0 0.0
        %1017 = vmatpush1.msra.mxu0 0.0
        %1018 = vmatprep.subr.mxu0 0.0
        %1019 = vmatpush1.msra.mxu0 0.0
        %1020 = vmatprep.subr.mxu0 0.0
        %1021 = vmatpush1.msra.mxu0 0.0
        %1022 = vmatprep.subr.mxu0 0.0
        %1023 = vmatpush1.msra.mxu0 0.0
        %1024 = vmatprep.subr.mxu0 0.0
        %1025 = vmatpush1.msra.mxu0 0.0
        %1026 = vmatprep.subr.mxu0 0.0
        %1027 = vmatpush1.msra.mxu0 0.0
        %1028 = vmatprep.subr.mxu0 0.0
        %1029 = vmatpush1.msra.mxu0 0.0
        %1030 = vmatprep.subr.mxu0 0.0
        %1031 = vmatpush1.msra.mxu0 0.0
        %1032 = vmatprep.subr.mxu0 0.0
        %1033 = vmatpush1.msra.mxu0 0.0
        %1034 = vmatprep.subr.mxu0 0.0
        %1035 = vmatpush1.msra.mxu0 0.0
        %1036 = vmatprep.subr.mxu0 0.0
        %1037 = vmatpush1.msra.mxu0 0.0
        %1038 = vmatprep.subr.mxu0 0.0
        %1039 = vmatpush1.msra.mxu0 0.0
        %1040 = vmatprep.subr.mxu0 0.0
        %1041 = vmatpush1.msra.mxu0 0.0
        %1042 = vmatprep.subr.mxu0 0.0
        %1043 = vmatpush1.msra.mxu0 0.0
        %1044 = vmatprep.subr.mxu0 0.0
        %1045 = vmatpush1.msra.mxu0 0.0
        %1046 = vmatprep.subr.mxu0 0.0
        %1047 = vmatpush1.msra.mxu0 0.0
        %1048 = vmatprep.subr.mxu0 0.0
        %1049 = vmatpush1.msra.mxu0 0.0
        %1050 = vmatprep.subr.mxu0 0.0
        %1051 = vmatpush1.msra.mxu0 0.0
        %1052 = vmatprep.subr.mxu0 0.0
        %1053 = vmatpush1.msra.mxu0 0.0
        %1054 = vmatprep.subr.mxu0 0.0
        %1055 = vmatpush1.msra.mxu0 0.0
        %1056 = vmatprep.subr.mxu0 0.0
        %1057 = vmatpush1.msra.mxu0 0.0
        %1058 = vmatprep.subr.mxu0 0.0
        %1059 = vmatpush1.msra.mxu0 0.0
        %1060 = vmatprep.subr.mxu0 0.0
        %1061 = vmatpush1.msra.mxu0 0.0
        %1062 = vmatprep.subr.mxu0 0.0
        %1063 = vmatpush1.msra.mxu0 0.0
        %1064 = vmatprep.subr.mxu0 0.0
        %1065 = vmatpush1.msra.mxu0 0.0
        %1066 = vmatprep.subr.mxu0 0.0
        %1067 = vmatpush1.msra.mxu0 0.0
        %1068 = vmatprep.subr.mxu0 0.0
        %1069 = vmatpush1.msra.mxu0 0.0
        %1070 = vmatprep.mubr.f32.mxu0 0.0
        %v1071 = vand.u32 %v840, 4294901760
        %v1072 = vsub.f32 %v840, %v1071
        %1073 = vmatmul.mubr.f32.gmra.mrb[0].mxu0 %v1072
        %v1074 = vpop.f32.mrb[0].mxu0
        %v1075 = vadd.f32 %v999, %v1074
        %v1076 = vpop.f32.mrb[0].mxu0
        %1077 = vdwg.mxu0
        %1078 = vmatprep.subr.mxu0 0.0
        %v1079 = vand.u32 %v832, 4294901760
        %1080 = vmatpush1.msra.mxu0 %v1079
        %1081 = vmatprep.subr.mxu0 0.0
        %v1082 = vand.u32 %v842, 4294901760
        %1083 = vmatpush1.msra.mxu0 %v1082
        %1084 = vmatprep.subr.mxu0 0.0
        %1085 = vmatpush1.msra.mxu0 0.0
        %1086 = vmatprep.subr.mxu0 0.0
        %1087 = vmatpush1.msra.mxu0 0.0
        %1088 = vmatprep.subr.mxu0 0.0
        %1089 = vmatpush1.msra.mxu0 0.0
        %1090 = vmatprep.subr.mxu0 0.0
        %1091 = vmatpush1.msra.mxu0 0.0
        %1092 = vmatprep.subr.mxu0 0.0
        %1093 = vmatpush1.msra.mxu0 0.0
        %1094 = vmatprep.subr.mxu0 0.0
        %1095 = vmatpush1.msra.mxu0 0.0
        %1096 = vmatprep.subr.mxu0 0.0
        %1097 = vmatpush1.msra.mxu0 0.0
        %1098 = vmatprep.subr.mxu0 0.0
        %1099 = vmatpush1.msra.mxu0 0.0
        %1100 = vmatprep.subr.mxu0 0.0
        %1101 = vmatpush1.msra.mxu0 0.0
        %1102 = vmatprep.subr.mxu0 0.0
        %1103 = vmatpush1.msra.mxu0 0.0
        %1104 = vmatprep.subr.mxu0 0.0
        %1105 = vmatpush1.msra.mxu0 0.0
        %1106 = vmatprep.subr.mxu0 0.0
        %1107 = vmatpush1.msra.mxu0 0.0
        %1108 = vmatprep.subr.mxu0 0.0
        %1109 = vmatpush1.msra.mxu0 0.0
        %1110 = vmatprep.subr.mxu0 0.0
        %1111 = vmatpush1.msra.mxu0 0.0
        %1112 = vmatprep.subr.mxu0 0.0
        %1113 = vmatpush1.msra.mxu0 0.0
        %1114 = vmatprep.subr.mxu0 0.0
        %1115 = vmatpush1.msra.mxu0 0.0
        %1116 = vmatprep.subr.mxu0 0.0
        %1117 = vmatpush1.msra.mxu0 0.0
        %1118 = vmatprep.subr.mxu0 0.0
        %1119 = vmatpush1.msra.mxu0 0.0
        %1120 = vmatprep.subr.mxu0 0.0
        %1121 = vmatpush1.msra.mxu0 0.0
        %1122 = vmatprep.subr.mxu0 0.0
        %1123 = vmatpush1.msra.mxu0 0.0
        %1124 = vmatprep.subr.mxu0 0.0
        %1125 = vmatpush1.msra.mxu0 0.0
        %1126 = vmatprep.subr.mxu0 0.0
        %1127 = vmatpush1.msra.mxu0 0.0
        %1128 = vmatprep.subr.mxu0 0.0
        %1129 = vmatpush1.msra.mxu0 0.0
        %1130 = vmatprep.subr.mxu0 0.0
        %1131 = vmatpush1.msra.mxu0 0.0
        %1132 = vmatprep.subr.mxu0 0.0
        %1133 = vmatpush1.msra.mxu0 0.0
        %1134 = vmatprep.subr.mxu0 0.0
        %1135 = vmatpush1.msra.mxu0 0.0
        %1136 = vmatprep.subr.mxu0 0.0
        %1137 = vmatpush1.msra.mxu0 0.0
        %1138 = vmatprep.subr.mxu0 0.0
        %1139 = vmatpush1.msra.mxu0 0.0
        %1140 = vmatprep.subr.mxu0 0.0
        %1141 = vmatpush1.msra.mxu0 0.0
        %1142 = vmatprep.subr.mxu0 0.0
        %1143 = vmatpush1.msra.mxu0 0.0
        %1144 = vmatprep.mubr.f32.mxu0 0.0
        %v1145 = vand.u32 %v840, 4294901760
        %v1146 = vsub.f32 %v840, %v1145
        %v1147 = vand.u32 %v1146, 4294901760
        %1148 = vmatmul.mubr.f32.gmra.mrb[0].mxu0 %v1147
        %v1149 = vpop.f32.mrb[0].mxu0
        %v1150 = vadd.f32 %v1075, %v1149
        %v1151 = vpop.f32.mrb[0].mxu0
        %1152 = vdwg.mxu0
        %1153 = vmatprep.subr.mxu0 0.0
        %v1154 = vand.u32 %v832, 4294901760
        %v1155 = vsub.f32 %v832, %v1154
        %v1156 = vand.u32 %v1155, 4294901760
        %1157 = vmatpush1.msra.mxu0 %v1156
        %1158 = vmatprep.subr.mxu0 0.0
        %v1159 = vand.u32 %v842, 4294901760
        %v1160 = vsub.f32 %v842, %v1159
        %v1161 = vand.u32 %v1160, 4294901760
        %1162 = vmatpush1.msra.mxu0 %v1161
        %1163 = vmatprep.subr.mxu0 0.0
        %1164 = vmatpush1.msra.mxu0 0.0
        %1165 = vmatprep.subr.mxu0 0.0
        %1166 = vmatpush1.msra.mxu0 0.0
        %1167 = vmatprep.subr.mxu0 0.0
        %1168 = vmatpush1.msra.mxu0 0.0
        %1169 = vmatprep.subr.mxu0 0.0
        %1170 = vmatpush1.msra.mxu0 0.0
        %1171 = vmatprep.subr.mxu0 0.0
        %1172 = vmatpush1.msra.mxu0 0.0
        %1173 = vmatprep.subr.mxu0 0.0
        %1174 = vmatpush1.msra.mxu0 0.0
        %1175 = vmatprep.subr.mxu0 0.0
        %1176 = vmatpush1.msra.mxu0 0.0
        %1177 = vmatprep.subr.mxu0 0.0
        %1178 = vmatpush1.msra.mxu0 0.0
        %1179 = vmatprep.subr.mxu0 0.0
        %1180 = vmatpush1.msra.mxu0 0.0
        %1181 = vmatprep.subr.mxu0 0.0
        %1182 = vmatpush1.msra.mxu0 0.0
        %1183 = vmatprep.subr.mxu0 0.0
        %1184 = vmatpush1.msra.mxu0 0.0
        %1185 = vmatprep.subr.mxu0 0.0
        %1186 = vmatpush1.msra.mxu0 0.0
        %1187 = vmatprep.subr.mxu0 0.0
        %1188 = vmatpush1.msra.mxu0 0.0
        %1189 = vmatprep.subr.mxu0 0.0
        %1190 = vmatpush1.msra.mxu0 0.0
        %1191 = vmatprep.subr.mxu0 0.0
        %1192 = vmatpush1.msra.mxu0 0.0
        %1193 = vmatprep.subr.mxu0 0.0
        %1194 = vmatpush1.msra.mxu0 0.0
        %1195 = vmatprep.subr.mxu0 0.0
        %1196 = vmatpush1.msra.mxu0 0.0
        %1197 = vmatprep.subr.mxu0 0.0
        %1198 = vmatpush1.msra.mxu0 0.0
        %1199 = vmatprep.subr.mxu0 0.0
        %1200 = vmatpush1.msra.mxu0 0.0
        %1201 = vmatprep.subr.mxu0 0.0
        %1202 = vmatpush1.msra.mxu0 0.0
        %1203 = vmatprep.subr.mxu0 0.0
        %1204 = vmatpush1.msra.mxu0 0.0
        %1205 = vmatprep.subr.mxu0 0.0
        %1206 = vmatpush1.msra.mxu0 0.0
        %1207 = vmatprep.subr.mxu0 0.0
        %1208 = vmatpush1.msra.mxu0 0.0
        %1209 = vmatprep.subr.mxu0 0.0
        %1210 = vmatpush1.msra.mxu0 0.0
        %1211 = vmatprep.subr.mxu0 0.0
        %1212 = vmatpush1.msra.mxu0 0.0
        %1213 = vmatprep.subr.mxu0 0.0
        %1214 = vmatpush1.msra.mxu0 0.0
        %1215 = vmatprep.subr.mxu0 0.0
        %1216 = vmatpush1.msra.mxu0 0.0
        %1217 = vmatprep.subr.mxu0 0.0
        %1218 = vmatpush1.msra.mxu0 0.0
        %1219 = vmatprep.subr.mxu0 0.0
        %1220 = vmatpush1.msra.mxu0 0.0
        %1221 = vmatprep.subr.mxu0 0.0
        %1222 = vmatpush1.msra.mxu0 0.0
        %1223 = vmatprep.mubr.f32.mxu0 0.0
        %v1224 = vand.u32 %v840, 4294901760
        %1225 = vmatmul.mubr.f32.gmra.mrb[0].mxu0 %v1224
        %v1226 = vpop.f32.mrb[0].mxu0
        %v1227 = vadd.f32 %v1150, %v1226
        %v1228 = vpop.f32.mrb[0].mxu0
        %1229 = vdwg.mxu0
        %1230 = vmatprep.subr.mxu0 0.0
        %v1231 = vand.u32 %v832, 4294901760
        %1232 = vmatpush1.msra.mxu0 %v1231
        %1233 = vmatprep.subr.mxu0 0.0
        %v1234 = vand.u32 %v842, 4294901760
        %1235 = vmatpush1.msra.mxu0 %v1234
        %1236 = vmatprep.subr.mxu0 0.0
        %1237 = vmatpush1.msra.mxu0 0.0
        %1238 = vmatprep.subr.mxu0 0.0
        %1239 = vmatpush1.msra.mxu0 0.0
        %1240 = vmatprep.subr.mxu0 0.0
        %1241 = vmatpush1.msra.mxu0 0.0
        %1242 = vmatprep.subr.mxu0 0.0
        %1243 = vmatpush1.msra.mxu0 0.0
        %1244 = vmatprep.subr.mxu0 0.0
        %1245 = vmatpush1.msra.mxu0 0.0
        %1246 = vmatprep.subr.mxu0 0.0
        %1247 = vmatpush1.msra.mxu0 0.0
        %1248 = vmatprep.subr.mxu0 0.0
        %1249 = vmatpush1.msra.mxu0 0.0
        %1250 = vmatprep.subr.mxu0 0.0
        %1251 = vmatpush1.msra.mxu0 0.0
        %1252 = vmatprep.subr.mxu0 0.0
        %1253 = vmatpush1.msra.mxu0 0.0
        %1254 = vmatprep.subr.mxu0 0.0
        %1255 = vmatpush1.msra.mxu0 0.0
        %1256 = vmatprep.subr.mxu0 0.0
        %1257 = vmatpush1.msra.mxu0 0.0
        %1258 = vmatprep.subr.mxu0 0.0
        %1259 = vmatpush1.msra.mxu0 0.0
        %1260 = vmatprep.subr.mxu0 0.0
        %1261 = vmatpush1.msra.mxu0 0.0
        %1262 = vmatprep.subr.mxu0 0.0
        %1263 = vmatpush1.msra.mxu0 0.0
        %1264 = vmatprep.subr.mxu0 0.0
        %1265 = vmatpush1.msra.mxu0 0.0
        %1266 = vmatprep.subr.mxu0 0.0
        %1267 = vmatpush1.msra.mxu0 0.0
        %1268 = vmatprep.subr.mxu0 0.0
        %1269 = vmatpush1.msra.mxu0 0.0
        %1270 = vmatprep.subr.mxu0 0.0
        %1271 = vmatpush1.msra.mxu0 0.0
        %1272 = vmatprep.subr.mxu0 0.0
        %1273 = vmatpush1.msra.mxu0 0.0
        %1274 = vmatprep.subr.mxu0 0.0
        %1275 = vmatpush1.msra.mxu0 0.0
        %1276 = vmatprep.subr.mxu0 0.0
        %1277 = vmatpush1.msra.mxu0 0.0
        %1278 = vmatprep.subr.mxu0 0.0
        %1279 = vmatpush1.msra.mxu0 0.0
        %1280 = vmatprep.subr.mxu0 0.0
        %1281 = vmatpush1.msra.mxu0 0.0
        %1282 = vmatprep.subr.mxu0 0.0
        %1283 = vmatpush1.msra.mxu0 0.0
        %1284 = vmatprep.subr.mxu0 0.0
        %1285 = vmatpush1.msra.mxu0 0.0
        %1286 = vmatprep.subr.mxu0 0.0
        %1287 = vmatpush1.msra.mxu0 0.0
        %1288 = vmatprep.subr.mxu0 0.0
        %1289 = vmatpush1.msra.mxu0 0.0
        %1290 = vmatprep.subr.mxu0 0.0
        %1291 = vmatpush1.msra.mxu0 0.0
        %1292 = vmatprep.subr.mxu0 0.0
        %1293 = vmatpush1.msra.mxu0 0.0
        %1294 = vmatprep.subr.mxu0 0.0
        %1295 = vmatpush1.msra.mxu0 0.0
        %1296 = vmatprep.mubr.f32.mxu0 0.0
        %v1297 = vand.u32 %v840, 4294901760
        %1298 = vmatmul.mubr.f32.gmra.mrb[0].mxu0 %v1297
        %v1299 = vpop.f32.mrb[0].mxu0
        %v1300 = vadd.f32 %v1227, %v1299
        %v1301 = vpop.f32.mrb[0].mxu0
        %1302 = vdwg.mxu0
        %vm1303 = vcmp.ge.f32.partialorder %v1300, 0.0
        %v1304 = vmul.f32 %v1300, 0.01
        %v1305 = vsel %vm1303, %v1300, %v1304
        %v1307 = vrot.slane %v1305, 4
        %1308 = vrot.lane.b32.xlu0 %v1307, 127
        %v1309 = vpop.permute.xlu0 %1308
        %1311 = vrot.lane.b32.xlu0 %v1305, 126
        %v1312 = vpop.permute.xlu0 %1311
        %v1313 = vsel %vm831, %v1305, %v1309
        %1315 = vset.pattern.permute.xlu0 0
        %1316 = vperm.xlu0 %1315, %v799
        %v1317 = vpop.permute.xlu0 %1316
        %v1320 = vsel %vm838, %v797, 0
        %v1322 = vsel %vm831, %v1312, 0
        %1324 = vmatprep.subr.mxu0 0.0
        %v1325 = vand.u32 %v1313, 4294901760
        %1326 = vmatpush1.msra.mxu0 %v1325
        %1327 = vmatprep.subr.mxu0 0.0
        %v1328 = vand.u32 %v1322, 4294901760
        %1329 = vmatpush1.msra.mxu0 %v1328
        %1330 = vmatprep.subr.mxu0 0.0
        %1331 = vmatpush1.msra.mxu0 0.0
        %1332 = vmatprep.subr.mxu0 0.0
        %1333 = vmatpush1.msra.mxu0 0.0
        %1334 = vmatprep.subr.mxu0 0.0
        %1335 = vmatpush1.msra.mxu0 0.0
        %1336 = vmatprep.subr.mxu0 0.0
        %1337 = vmatpush1.msra.mxu0 0.0
        %1338 = vmatprep.subr.mxu0 0.0
        %1339 = vmatpush1.msra.mxu0 0.0
        %1340 = vmatprep.subr.mxu0 0.0
        %1341 = vmatpush1.msra.mxu0 0.0
        %1342 = vmatprep.subr.mxu0 0.0
        %1343 = vmatpush1.msra.mxu0 0.0
        %1344 = vmatprep.subr.mxu0 0.0
        %1345 = vmatpush1.msra.mxu0 0.0
        %1346 = vmatprep.subr.mxu0 0.0
        %1347 = vmatpush1.msra.mxu0 0.0
        %1348 = vmatprep.subr.mxu0 0.0
        %1349 = vmatpush1.msra.mxu0 0.0
        %1350 = vmatprep.subr.mxu0 0.0
        %1351 = vmatpush1.msra.mxu0 0.0
        %1352 = vmatprep.subr.mxu0 0.0
        %1353 = vmatpush1.msra.mxu0 0.0
        %1354 = vmatprep.subr.mxu0 0.0
        %1355 = vmatpush1.msra.mxu0 0.0
        %1356 = vmatprep.subr.mxu0 0.0
        %1357 = vmatpush1.msra.mxu0 0.0
        %1358 = vmatprep.subr.mxu0 0.0
        %1359 = vmatpush1.msra.mxu0 0.0
        %1360 = vmatprep.subr.mxu0 0.0
        %1361 = vmatpush1.msra.mxu0 0.0
        %1362 = vmatprep.subr.mxu0 0.0
        %1363 = vmatpush1.msra.mxu0 0.0
        %1364 = vmatprep.subr.mxu0 0.0
        %1365 = vmatpush1.msra.mxu0 0.0
        %1366 = vmatprep.subr.mxu0 0.0
        %1367 = vmatpush1.msra.mxu0 0.0
        %1368 = vmatprep.subr.mxu0 0.0
        %1369 = vmatpush1.msra.mxu0 0.0
        %1370 = vmatprep.subr.mxu0 0.0
        %1371 = vmatpush1.msra.mxu0 0.0
        %1372 = vmatprep.subr.mxu0 0.0
        %1373 = vmatpush1.msra.mxu0 0.0
        %1374 = vmatprep.subr.mxu0 0.0
        %1375 = vmatpush1.msra.mxu0 0.0
        %1376 = vmatprep.subr.mxu0 0.0
        %1377 = vmatpush1.msra.mxu0 0.0
        %1378 = vmatprep.subr.mxu0 0.0
        %1379 = vmatpush1.msra.mxu0 0.0
        %1380 = vmatprep.subr.mxu0 0.0
        %1381 = vmatpush1.msra.mxu0 0.0
        %1382 = vmatprep.subr.mxu0 0.0
        %1383 = vmatpush1.msra.mxu0 0.0
        %1384 = vmatprep.subr.mxu0 0.0
        %1385 = vmatpush1.msra.mxu0 0.0
        %1386 = vmatprep.subr.mxu0 0.0
        %1387 = vmatpush1.msra.mxu0 0.0
        %1388 = vmatprep.subr.mxu0 0.0
        %1389 = vmatpush1.msra.mxu0 0.0
        %1390 = vmatprep.mubr.f32.mxu0 0.0
        %v1391 = vand.u32 %v1320, 4294901760
        %v1392 = vsub.f32 %v1320, %v1391
        %v1393 = vand.u32 %v1392, 4294901760
        %v1394 = vsub.f32 %v1392, %v1393
        %v1395 = vand.u32 %v1394, 4294901760
        %1396 = vmatmul.mubr.f32.gmra.mrb[0].mxu0 %v1395
        %v1397 = vpop.f32.mrb[0].mxu0
        %v1398 = vadd.f32 %v1317, %v1397
        %v1399 = vpop.f32.mrb[0].mxu0
        %1400 = vdwg.mxu0
        %1401 = vmatprep.subr.mxu0 0.0
        %v1402 = vand.u32 %v1313, 4294901760
        %v1403 = vsub.f32 %v1313, %v1402
        %v1404 = vand.u32 %v1403, 4294901760
        %v1405 = vsub.f32 %v1403, %v1404
        %v1406 = vand.u32 %v1405, 4294901760
        %1407 = vmatpush1.msra.mxu0 %v1406
        %1408 = vmatprep.subr.mxu0 0.0
        %v1409 = vand.u32 %v1322, 4294901760
        %v1410 = vsub.f32 %v1322, %v1409
        %v1411 = vand.u32 %v1410, 4294901760
        %v1412 = vsub.f32 %v1410, %v1411
        %v1413 = vand.u32 %v1412, 4294901760
        %1414 = vmatpush1.msra.mxu0 %v1413
        %1415 = vmatprep.subr.mxu0 0.0
        %1416 = vmatpush1.msra.mxu0 0.0
        %1417 = vmatprep.subr.mxu0 0.0
        %1418 = vmatpush1.msra.mxu0 0.0
        %1419 = vmatprep.subr.mxu0 0.0
        %1420 = vmatpush1.msra.mxu0 0.0
        %1421 = vmatprep.subr.mxu0 0.0
        %1422 = vmatpush1.msra.mxu0 0.0
        %1423 = vmatprep.subr.mxu0 0.0
        %1424 = vmatpush1.msra.mxu0 0.0
        %1425 = vmatprep.subr.mxu0 0.0
        %1426 = vmatpush1.msra.mxu0 0.0
        %1427 = vmatprep.subr.mxu0 0.0
        %1428 = vmatpush1.msra.mxu0 0.0
        %1429 = vmatprep.subr.mxu0 0.0
        %1430 = vmatpush1.msra.mxu0 0.0
        %1431 = vmatprep.subr.mxu0 0.0
        %1432 = vmatpush1.msra.mxu0 0.0
        %1433 = vmatprep.subr.mxu0 0.0
        %1434 = vmatpush1.msra.mxu0 0.0
        %1435 = vmatprep.subr.mxu0 0.0
        %1436 = vmatpush1.msra.mxu0 0.0
        %1437 = vmatprep.subr.mxu0 0.0
        %1438 = vmatpush1.msra.mxu0 0.0
        %1439 = vmatprep.subr.mxu0 0.0
        %1440 = vmatpush1.msra.mxu0 0.0
        %1441 = vmatprep.subr.mxu0 0.0
        %1442 = vmatpush1.msra.mxu0 0.0
        %1443 = vmatprep.subr.mxu0 0.0
        %1444 = vmatpush1.msra.mxu0 0.0
        %1445 = vmatprep.subr.mxu0 0.0
        %1446 = vmatpush1.msra.mxu0 0.0
        %1447 = vmatprep.subr.mxu0 0.0
        %1448 = vmatpush1.msra.mxu0 0.0
        %1449 = vmatprep.subr.mxu0 0.0
        %1450 = vmatpush1.msra.mxu0 0.0
        %1451 = vmatprep.subr.mxu0 0.0
        %1452 = vmatpush1.msra.mxu0 0.0
        %1453 = vmatprep.subr.mxu0 0.0
        %1454 = vmatpush1.msra.mxu0 0.0
        %1455 = vmatprep.subr.mxu0 0.0
        %1456 = vmatpush1.msra.mxu0 0.0
        %1457 = vmatprep.subr.mxu0 0.0
        %1458 = vmatpush1.msra.mxu0 0.0
        %1459 = vmatprep.subr.mxu0 0.0
        %1460 = vmatpush1.msra.mxu0 0.0
        %1461 = vmatprep.subr.mxu0 0.0
        %1462 = vmatpush1.msra.mxu0 0.0
        %1463 = vmatprep.subr.mxu0 0.0
        %1464 = vmatpush1.msra.mxu0 0.0
        %1465 = vmatprep.subr.mxu0 0.0
        %1466 = vmatpush1.msra.mxu0 0.0
        %1467 = vmatprep.subr.mxu0 0.0
        %1468 = vmatpush1.msra.mxu0 0.0
        %1469 = vmatprep.subr.mxu0 0.0
        %1470 = vmatpush1.msra.mxu0 0.0
        %1471 = vmatprep.subr.mxu0 0.0
        %1472 = vmatpush1.msra.mxu0 0.0
        %1473 = vmatprep.subr.mxu0 0.0
        %1474 = vmatpush1.msra.mxu0 0.0
        %1475 = vmatprep.mubr.f32.mxu0 0.0
        %v1476 = vand.u32 %v1320, 4294901760
        %1477 = vmatmul.mubr.f32.gmra.mrb[0].mxu0 %v1476
        %v1478 = vpop.f32.mrb[0].mxu0
        %v1479 = vadd.f32 %v1398, %v1478
        %v1480 = vpop.f32.mrb[0].mxu0
        %1481 = vdwg.mxu0
        %1482 = vmatprep.subr.mxu0 0.0
        %v1483 = vand.u32 %v1313, 4294901760
        %v1484 = vsub.f32 %v1313, %v1483
        %1485 = vmatpush1.msra.mxu0 %v1484
        %1486 = vmatprep.subr.mxu0 0.0
        %v1487 = vand.u32 %v1322, 4294901760
        %v1488 = vsub.f32 %v1322, %v1487
        %1489 = vmatpush1.msra.mxu0 %v1488
        %1490 = vmatprep.subr.mxu0 0.0
        %1491 = vmatpush1.msra.mxu0 0.0
        %1492 = vmatprep.subr.mxu0 0.0
        %1493 = vmatpush1.msra.mxu0 0.0
        %1494 = vmatprep.subr.mxu0 0.0
        %1495 = vmatpush1.msra.mxu0 0.0
        %1496 = vmatprep.subr.mxu0 0.0
        %1497 = vmatpush1.msra.mxu0 0.0
        %1498 = vmatprep.subr.mxu0 0.0
        %1499 = vmatpush1.msra.mxu0 0.0
        %1500 = vmatprep.subr.mxu0 0.0
        %1501 = vmatpush1.msra.mxu0 0.0
        %1502 = vmatprep.subr.mxu0 0.0
        %1503 = vmatpush1.msra.mxu0 0.0
        %1504 = vmatprep.subr.mxu0 0.0
        %1505 = vmatpush1.msra.mxu0 0.0
        %1506 = vmatprep.subr.mxu0 0.0
        %1507 = vmatpush1.msra.mxu0 0.0
        %1508 = vmatprep.subr.mxu0 0.0
        %1509 = vmatpush1.msra.mxu0 0.0
        %1510 = vmatprep.subr.mxu0 0.0
        %1511 = vmatpush1.msra.mxu0 0.0
        %1512 = vmatprep.subr.mxu0 0.0
        %1513 = vmatpush1.msra.mxu0 0.0
        %1514 = vmatprep.subr.mxu0 0.0
        %1515 = vmatpush1.msra.mxu0 0.0
        %1516 = vmatprep.subr.mxu0 0.0
        %1517 = vmatpush1.msra.mxu0 0.0
        %1518 = vmatprep.subr.mxu0 0.0
        %1519 = vmatpush1.msra.mxu0 0.0
        %1520 = vmatprep.subr.mxu0 0.0
        %1521 = vmatpush1.msra.mxu0 0.0
        %1522 = vmatprep.subr.mxu0 0.0
        %1523 = vmatpush1.msra.mxu0 0.0
        %1524 = vmatprep.subr.mxu0 0.0
        %1525 = vmatpush1.msra.mxu0 0.0
        %1526 = vmatprep.subr.mxu0 0.0
        %1527 = vmatpush1.msra.mxu0 0.0
        %1528 = vmatprep.subr.mxu0 0.0
        %1529 = vmatpush1.msra.mxu0 0.0
        %1530 = vmatprep.subr.mxu0 0.0
        %1531 = vmatpush1.msra.mxu0 0.0
        %1532 = vmatprep.subr.mxu0 0.0
        %1533 = vmatpush1.msra.mxu0 0.0
        %1534 = vmatprep.subr.mxu0 0.0
        %1535 = vmatpush1.msra.mxu0 0.0
        %1536 = vmatprep.subr.mxu0 0.0
        %1537 = vmatpush1.msra.mxu0 0.0
        %1538 = vmatprep.subr.mxu0 0.0
        %1539 = vmatpush1.msra.mxu0 0.0
        %1540 = vmatprep.subr.mxu0 0.0
        %1541 = vmatpush1.msra.mxu0 0.0
        %1542 = vmatprep.subr.mxu0 0.0
        %1543 = vmatpush1.msra.mxu0 0.0
        %1544 = vmatprep.subr.mxu0 0.0
        %1545 = vmatpush1.msra.mxu0 0.0
        %1546 = vmatprep.subr.mxu0 0.0
        %1547 = vmatpush1.msra.mxu0 0.0
        %1548 = vmatprep.subr.mxu0 0.0
        %1549 = vmatpush1.msra.mxu0 0.0
        %1550 = vmatprep.mubr.f32.mxu0 0.0
        %v1551 = vand.u32 %v1320, 4294901760
        %v1552 = vsub.f32 %v1320, %v1551
        %1553 = vmatmul.mubr.f32.gmra.mrb[0].mxu0 %v1552
        %v1554 = vpop.f32.mrb[0].mxu0
        %v1555 = vadd.f32 %v1479, %v1554
        %v1556 = vpop.f32.mrb[0].mxu0
        %1557 = vdwg.mxu0
        %1558 = vmatprep.subr.mxu0 0.0
        %v1559 = vand.u32 %v1313, 4294901760
        %1560 = vmatpush1.msra.mxu0 %v1559
        %1561 = vmatprep.subr.mxu0 0.0
        %v1562 = vand.u32 %v1322, 4294901760
        %1563 = vmatpush1.msra.mxu0 %v1562
        %1564 = vmatprep.subr.mxu0 0.0
        %1565 = vmatpush1.msra.mxu0 0.0
        %1566 = vmatprep.subr.mxu0 0.0
        %1567 = vmatpush1.msra.mxu0 0.0
        %1568 = vmatprep.subr.mxu0 0.0
        %1569 = vmatpush1.msra.mxu0 0.0
        %1570 = vmatprep.subr.mxu0 0.0
        %1571 = vmatpush1.msra.mxu0 0.0
        %1572 = vmatprep.subr.mxu0 0.0
        %1573 = vmatpush1.msra.mxu0 0.0
        %1574 = vmatprep.subr.mxu0 0.0
        %1575 = vmatpush1.msra.mxu0 0.0
        %1576 = vmatprep.subr.mxu0 0.0
        %1577 = vmatpush1.msra.mxu0 0.0
        %1578 = vmatprep.subr.mxu0 0.0
        %1579 = vmatpush1.msra.mxu0 0.0
        %1580 = vmatprep.subr.mxu0 0.0
        %1581 = vmatpush1.msra.mxu0 0.0
        %1582 = vmatprep.subr.mxu0 0.0
        %1583 = vmatpush1.msra.mxu0 0.0
        %1584 = vmatprep.subr.mxu0 0.0
        %1585 = vmatpush1.msra.mxu0 0.0
        %1586 = vmatprep.subr.mxu0 0.0
        %1587 = vmatpush1.msra.mxu0 0.0
        %1588 = vmatprep.subr.mxu0 0.0
        %1589 = vmatpush1.msra.mxu0 0.0
        %1590 = vmatprep.subr.mxu0 0.0
        %1591 = vmatpush1.msra.mxu0 0.0
        %1592 = vmatprep.subr.mxu0 0.0
        %1593 = vmatpush1.msra.mxu0 0.0
        %1594 = vmatprep.subr.mxu0 0.0
        %1595 = vmatpush1.msra.mxu0 0.0
        %1596 = vmatprep.subr.mxu0 0.0
        %1597 = vmatpush1.msra.mxu0 0.0
        %1598 = vmatprep.subr.mxu0 0.0
        %1599 = vmatpush1.msra.mxu0 0.0
        %1600 = vmatprep.subr.mxu0 0.0
        %1601 = vmatpush1.msra.mxu0 0.0
        %1602 = vmatprep.subr.mxu0 0.0
        %1603 = vmatpush1.msra.mxu0 0.0
        %1604 = vmatprep.subr.mxu0 0.0
        %1605 = vmatpush1.msra.mxu0 0.0
        %1606 = vmatprep.subr.mxu0 0.0
        %1607 = vmatpush1.msra.mxu0 0.0
        %1608 = vmatprep.subr.mxu0 0.0
        %1609 = vmatpush1.msra.mxu0 0.0
        %1610 = vmatprep.subr.mxu0 0.0
        %1611 = vmatpush1.msra.mxu0 0.0
        %1612 = vmatprep.subr.mxu0 0.0
        %1613 = vmatpush1.msra.mxu0 0.0
        %1614 = vmatprep.subr.mxu0 0.0
        %1615 = vmatpush1.msra.mxu0 0.0
        %1616 = vmatprep.subr.mxu0 0.0
        %1617 = vmatpush1.msra.mxu0 0.0
        %1618 = vmatprep.subr.mxu0 0.0
        %1619 = vmatpush1.msra.mxu0 0.0
        %1620 = vmatprep.subr.mxu0 0.0
        %1621 = vmatpush1.msra.mxu0 0.0
        %1622 = vmatprep.subr.mxu0 0.0
        %1623 = vmatpush1.msra.mxu0 0.0
        %1624 = vmatprep.mubr.f32.mxu0 0.0
        %v1625 = vand.u32 %v1320, 4294901760
        %v1626 = vsub.f32 %v1320, %v1625
        %v1627 = vand.u32 %v1626, 4294901760
        %1628 = vmatmul.mubr.f32.gmra.mrb[0].mxu0 %v1627
        %v1629 = vpop.f32.mrb[0].mxu0
        %v1630 = vadd.f32 %v1555, %v1629
        %v1631 = vpop.f32.mrb[0].mxu0
        %1632 = vdwg.mxu0
        %1633 = vmatprep.subr.mxu0 0.0
        %v1634 = vand.u32 %v1313, 4294901760
        %v1635 = vsub.f32 %v1313, %v1634
        %v1636 = vand.u32 %v1635, 4294901760
        %1637 = vmatpush1.msra.mxu0 %v1636
        %1638 = vmatprep.subr.mxu0 0.0
        %v1639 = vand.u32 %v1322, 4294901760
        %v1640 = vsub.f32 %v1322, %v1639
        %v1641 = vand.u32 %v1640, 4294901760
        %1642 = vmatpush1.msra.mxu0 %v1641
        %1643 = vmatprep.subr.mxu0 0.0
        %1644 = vmatpush1.msra.mxu0 0.0
        %1645 = vmatprep.subr.mxu0 0.0
        %1646 = vmatpush1.msra.mxu0 0.0
        %1647 = vmatprep.subr.mxu0 0.0
        %1648 = vmatpush1.msra.mxu0 0.0
        %1649 = vmatprep.subr.mxu0 0.0
        %1650 = vmatpush1.msra.mxu0 0.0
        %1651 = vmatprep.subr.mxu0 0.0
        %1652 = vmatpush1.msra.mxu0 0.0
        %1653 = vmatprep.subr.mxu0 0.0
        %1654 = vmatpush1.msra.mxu0 0.0
        %1655 = vmatprep.subr.mxu0 0.0
        %1656 = vmatpush1.msra.mxu0 0.0
        %1657 = vmatprep.subr.mxu0 0.0
        %1658 = vmatpush1.msra.mxu0 0.0
        %1659 = vmatprep.subr.mxu0 0.0
        %1660 = vmatpush1.msra.mxu0 0.0
        %1661 = vmatprep.subr.mxu0 0.0
        %1662 = vmatpush1.msra.mxu0 0.0
        %1663 = vmatprep.subr.mxu0 0.0
        %1664 = vmatpush1.msra.mxu0 0.0
        %1665 = vmatprep.subr.mxu0 0.0
        %1666 = vmatpush1.msra.mxu0 0.0
        %1667 = vmatprep.subr.mxu0 0.0
        %1668 = vmatpush1.msra.mxu0 0.0
        %1669 = vmatprep.subr.mxu0 0.0
        %1670 = vmatpush1.msra.mxu0 0.0
        %1671 = vmatprep.subr.mxu0 0.0
        %1672 = vmatpush1.msra.mxu0 0.0
        %1673 = vmatprep.subr.mxu0 0.0
        %1674 = vmatpush1.msra.mxu0 0.0
        %1675 = vmatprep.subr.mxu0 0.0
        %1676 = vmatpush1.msra.mxu0 0.0
        %1677 = vmatprep.subr.mxu0 0.0
        %1678 = vmatpush1.msra.mxu0 0.0
        %1679 = vmatprep.subr.mxu0 0.0
        %1680 = vmatpush1.msra.mxu0 0.0
        %1681 = vmatprep.subr.mxu0 0.0
        %1682 = vmatpush1.msra.mxu0 0.0
        %1683 = vmatprep.subr.mxu0 0.0
        %1684 = vmatpush1.msra.mxu0 0.0
        %1685 = vmatprep.subr.mxu0 0.0
        %1686 = vmatpush1.msra.mxu0 0.0
        %1687 = vmatprep.subr.mxu0 0.0
        %1688 = vmatpush1.msra.mxu0 0.0
        %1689 = vmatprep.subr.mxu0 0.0
        %1690 = vmatpush1.msra.mxu0 0.0
        %1691 = vmatprep.subr.mxu0 0.0
        %1692 = vmatpush1.msra.mxu0 0.0
        %1693 = vmatprep.subr.mxu0 0.0
        %1694 = vmatpush1.msra.mxu0 0.0
        %1695 = vmatprep.subr.mxu0 0.0
        %1696 = vmatpush1.msra.mxu0 0.0
        %1697 = vmatprep.subr.mxu0 0.0
        %1698 = vmatpush1.msra.mxu0 0.0
        %1699 = vmatprep.subr.mxu0 0.0
        %1700 = vmatpush1.msra.mxu0 0.0
        %1701 = vmatprep.subr.mxu0 0.0
        %1702 = vmatpush1.msra.mxu0 0.0
        %1703 = vmatprep.mubr.f32.mxu0 0.0
        %v1704 = vand.u32 %v1320, 4294901760
        %1705 = vmatmul.mubr.f32.gmra.mrb[0].mxu0 %v1704
        %v1706 = vpop.f32.mrb[0].mxu0
        %v1707 = vadd.f32 %v1630, %v1706
        %v1708 = vpop.f32.mrb[0].mxu0
        %1709 = vdwg.mxu0
        %1710 = vmatprep.subr.mxu0 0.0
        %v1711 = vand.u32 %v1313, 4294901760
        %1712 = vmatpush1.msra.mxu0 %v1711
        %1713 = vmatprep.subr.mxu0 0.0
        %v1714 = vand.u32 %v1322, 4294901760
        %1715 = vmatpush1.msra.mxu0 %v1714
        %1716 = vmatprep.subr.mxu0 0.0
        %1717 = vmatpush1.msra.mxu0 0.0
        %1718 = vmatprep.subr.mxu0 0.0
        %1719 = vmatpush1.msra.mxu0 0.0
        %1720 = vmatprep.subr.mxu0 0.0
        %1721 = vmatpush1.msra.mxu0 0.0
        %1722 = vmatprep.subr.mxu0 0.0
        %1723 = vmatpush1.msra.mxu0 0.0
        %1724 = vmatprep.subr.mxu0 0.0
        %1725 = vmatpush1.msra.mxu0 0.0
        %1726 = vmatprep.subr.mxu0 0.0
        %1727 = vmatpush1.msra.mxu0 0.0
        %1728 = vmatprep.subr.mxu0 0.0
        %1729 = vmatpush1.msra.mxu0 0.0
        %1730 = vmatprep.subr.mxu0 0.0
        %1731 = vmatpush1.msra.mxu0 0.0
        %1732 = vmatprep.subr.mxu0 0.0
        %1733 = vmatpush1.msra.mxu0 0.0
        %1734 = vmatprep.subr.mxu0 0.0
        %1735 = vmatpush1.msra.mxu0 0.0
        %1736 = vmatprep.subr.mxu0 0.0
        %1737 = vmatpush1.msra.mxu0 0.0
        %1738 = vmatprep.subr.mxu0 0.0
        %1739 = vmatpush1.msra.mxu0 0.0
        %1740 = vmatprep.subr.mxu0 0.0
        %1741 = vmatpush1.msra.mxu0 0.0
        %1742 = vmatprep.subr.mxu0 0.0
        %1743 = vmatpush1.msra.mxu0 0.0
        %1744 = vmatprep.subr.mxu0 0.0
        %1745 = vmatpush1.msra.mxu0 0.0
        %1746 = vmatprep.subr.mxu0 0.0
        %1747 = vmatpush1.msra.mxu0 0.0
        %1748 = vmatprep.subr.mxu0 0.0
        %1749 = vmatpush1.msra.mxu0 0.0
        %1750 = vmatprep.subr.mxu0 0.0
        %1751 = vmatpush1.msra.mxu0 0.0
        %1752 = vmatprep.subr.mxu0 0.0
        %1753 = vmatpush1.msra.mxu0 0.0
        %1754 = vmatprep.subr.mxu0 0.0
        %1755 = vmatpush1.msra.mxu0 0.0
        %1756 = vmatprep.subr.mxu0 0.0
        %1757 = vmatpush1.msra.mxu0 0.0
        %1758 = vmatprep.subr.mxu0 0.0
        %1759 = vmatpush1.msra.mxu0 0.0
        %1760 = vmatprep.subr.mxu0 0.0
        %1761 = vmatpush1.msra.mxu0 0.0
        %1762 = vmatprep.subr.mxu0 0.0
        %1763 = vmatpush1.msra.mxu0 0.0
        %1764 = vmatprep.subr.mxu0 0.0
        %1765 = vmatpush1.msra.mxu0 0.0
        %1766 = vmatprep.subr.mxu0 0.0
        %1767 = vmatpush1.msra.mxu0 0.0
        %1768 = vmatprep.subr.mxu0 0.0
        %1769 = vmatpush1.msra.mxu0 0.0
        %1770 = vmatprep.subr.mxu0 0.0
        %1771 = vmatpush1.msra.mxu0 0.0
        %1772 = vmatprep.subr.mxu0 0.0
        %1773 = vmatpush1.msra.mxu0 0.0
        %1774 = vmatprep.subr.mxu0 0.0
        %1775 = vmatpush1.msra.mxu0 0.0
        %1776 = vmatprep.mubr.f32.mxu0 0.0
        %v1777 = vand.u32 %v1320, 4294901760
        %1778 = vmatmul.mubr.f32.gmra.mrb[0].mxu0 %v1777
        %v1779 = vpop.f32.mrb[0].mxu0
        %v1780 = vadd.f32 %v1707, %v1779
        %v1781 = vpop.f32.mrb[0].mxu0
        %1782 = vdwg.mxu0
        %v1783 = vtanh.pop %v1780
        %v1784 = vadd.f32 %v791, %v1783
        %s1785 = scalar_lea.vmem [#allocation7], 8
        %v1786 = vld [vmem:[%s1785] sm:$0xf]
        %s1787 = scalar_lea.vmem [#allocation8], 8
        %v1788 = vld [vmem:[%s1787] sm:$0xf]
        %s1789 = scalar_lea.vmem [#allocation7], 12
        %v1790 = vld [vmem:[%s1789] sm:$0xf]
        %s1791 = scalar_lea.vmem [#allocation8], 12
        %v1792 = vld [vmem:[%s1791] sm:$0xf]
        %1794 = vrot.lane.b32.xlu0 %v1784, 126
        %v1795 = vpop.permute.xlu0 %1794
        %1797 = vrot.lane.b32.xlu0 %v1784, 2
        %v1798 = vpop.permute.xlu0 %1797
        %1800 = vrot.lane.b32.xlu0 %v1784, 4
        %v1801 = vpop.permute.xlu0 %1800
        %1803 = vrot.lane.b32.xlu0 %v1784, 6
        %v1804 = vpop.permute.xlu0 %1803
        %v1806 = vsel %vm816, %v1795, %v1784
        %v1807 = vsel %vm818, %v1806, %v1798
        %v1808 = vsel %vm820, %v1807, %v1801
        %v1809 = vsel %vm822, %v1808, %v1804
        %v1811 = vrot.slane %v1809, 4
        %1812 = vrot.lane.b32.xlu0 %v1811, 127
        %v1813 = vpop.permute.xlu0 %1812
        %1815 = vrot.lane.b32.xlu0 %v1809, 126
        %v1816 = vpop.permute.xlu0 %1815
        %v1817 = vsel %vm831, %v1809, %v1813
        %1819 = vset.pattern.permute.xlu0 0
        %1820 = vperm.xlu0 %1819, %v1788
        %v1821 = vpop.permute.xlu0 %1820
        %v1824 = vsel %vm838, %v1786, 0
        %v1826 = vsel %vm831, %v1816, 0
        %1828 = vmatprep.subr.mxu0 0.0
        %v1829 = vand.u32 %v1817, 4294901760
        %1830 = vmatpush1.msra.mxu0 %v1829
        %1831 = vmatprep.subr.mxu0 0.0
        %v1832 = vand.u32 %v1826, 4294901760
        %1833 = vmatpush1.msra.mxu0 %v1832
        %1834 = vmatprep.subr.mxu0 0.0
        %1835 = vmatpush1.msra.mxu0 0.0
        %1836 = vmatprep.subr.mxu0 0.0
        %1837 = vmatpush1.msra.mxu0 0.0
        %1838 = vmatprep.subr.mxu0 0.0
        %1839 = vmatpush1.msra.mxu0 0.0
        %1840 = vmatprep.subr.mxu0 0.0
        %1841 = vmatpush1.msra.mxu0 0.0
        %1842 = vmatprep.subr.mxu0 0.0
        %1843 = vmatpush1.msra.mxu0 0.0
        %1844 = vmatprep.subr.mxu0 0.0
        %1845 = vmatpush1.msra.mxu0 0.0
        %1846 = vmatprep.subr.mxu0 0.0
        %1847 = vmatpush1.msra.mxu0 0.0
        %1848 = vmatprep.subr.mxu0 0.0
        %1849 = vmatpush1.msra.mxu0 0.0
        %1850 = vmatprep.subr.mxu0 0.0
        %1851 = vmatpush1.msra.mxu0 0.0
        %1852 = vmatprep.subr.mxu0 0.0
        %1853 = vmatpush1.msra.mxu0 0.0
        %1854 = vmatprep.subr.mxu0 0.0
        %1855 = vmatpush1.msra.mxu0 0.0
        %1856 = vmatprep.subr.mxu0 0.0
        %1857 = vmatpush1.msra.mxu0 0.0
        %1858 = vmatprep.subr.mxu0 0.0
        %1859 = vmatpush1.msra.mxu0 0.0
        %1860 = vmatprep.subr.mxu0 0.0
        %1861 = vmatpush1.msra.mxu0 0.0
        %1862 = vmatprep.subr.mxu0 0.0
        %1863 = vmatpush1.msra.mxu0 0.0
        %1864 = vmatprep.subr.mxu0 0.0
        %1865 = vmatpush1.msra.mxu0 0.0
        %1866 = vmatprep.subr.mxu0 0.0
        %1867 = vmatpush1.msra.mxu0 0.0
        %1868 = vmatprep.subr.mxu0 0.0
        %1869 = vmatpush1.msra.mxu0 0.0
        %1870 = vmatprep.subr.mxu0 0.0
        %1871 = vmatpush1.msra.mxu0 0.0
        %1872 = vmatprep.subr.mxu0 0.0
        %1873 = vmatpush1.msra.mxu0 0.0
        %1874 = vmatprep.subr.mxu0 0.0
        %1875 = vmatpush1.msra.mxu0 0.0
        %1876 = vmatprep.subr.mxu0 0.0
        %1877 = vmatpush1.msra.mxu0 0.0
        %1878 = vmatprep.subr.mxu0 0.0
        %1879 = vmatpush1.msra.mxu0 0.0
        %1880 = vmatprep.subr.mxu0 0.0
        %1881 = vmatpush1.msra.mxu0 0.0
        %1882 = vmatprep.subr.mxu0 0.0
        %1883 = vmatpush1.msra.mxu0 0.0
        %1884 = vmatprep.subr.mxu0 0.0
        %1885 = vmatpush1.msra.mxu0 0.0
        %1886 = vmatprep.subr.mxu0 0.0
        %1887 = vmatpush1.msra.mxu0 0.0
        %1888 = vmatprep.subr.mxu0 0.0
        %1889 = vmatpush1.msra.mxu0 0.0
        %1890 = vmatprep.subr.mxu0 0.0
        %1891 = vmatpush1.msra.mxu0 0.0
        %1892 = vmatprep.subr.mxu0 0.0
        %1893 = vmatpush1.msra.mxu0 0.0
        %1894 = vmatprep.mubr.f32.mxu0 0.0
        %v1895 = vand.u32 %v1824, 4294901760
        %v1896 = vsub.f32 %v1824, %v1895
        %v1897 = vand.u32 %v1896, 4294901760
        %v1898 = vsub.f32 %v1896, %v1897
        %v1899 = vand.u32 %v1898, 4294901760
        %1900 = vmatmul.mubr.f32.gmra.mrb[0].mxu0 %v1899
        %v1901 = vpop.f32.mrb[0].mxu0
        %v1902 = vadd.f32 %v1821, %v1901
        %v1903 = vpop.f32.mrb[0].mxu0
        %1904 = vdwg.mxu0
        %1905 = vmatprep.subr.mxu0 0.0
        %v1906 = vand.u32 %v1817, 4294901760
        %v1907 = vsub.f32 %v1817, %v1906
        %v1908 = vand.u32 %v1907, 4294901760
        %v1909 = vsub.f32 %v1907, %v1908
        %v1910 = vand.u32 %v1909, 4294901760
        %1911 = vmatpush1.msra.mxu0 %v1910
        %1912 = vmatprep.subr.mxu0 0.0
        %v1913 = vand.u32 %v1826, 4294901760
        %v1914 = vsub.f32 %v1826, %v1913
        %v1915 = vand.u32 %v1914, 4294901760
        %v1916 = vsub.f32 %v1914, %v1915
        %v1917 = vand.u32 %v1916, 4294901760
        %1918 = vmatpush1.msra.mxu0 %v1917
        %1919 = vmatprep.subr.mxu0 0.0
        %1920 = vmatpush1.msra.mxu0 0.0
        %1921 = vmatprep.subr.mxu0 0.0
        %1922 = vmatpush1.msra.mxu0 0.0
        %1923 = vmatprep.subr.mxu0 0.0
        %1924 = vmatpush1.msra.mxu0 0.0
        %1925 = vmatprep.subr.mxu0 0.0
        %1926 = vmatpush1.msra.mxu0 0.0
        %1927 = vmatprep.subr.mxu0 0.0
        %1928 = vmatpush1.msra.mxu0 0.0
        %1929 = vmatprep.subr.mxu0 0.0
        %1930 = vmatpush1.msra.mxu0 0.0
        %1931 = vmatprep.subr.mxu0 0.0
        %1932 = vmatpush1.msra.mxu0 0.0
        %1933 = vmatprep.subr.mxu0 0.0
        %1934 = vmatpush1.msra.mxu0 0.0
        %1935 = vmatprep.subr.mxu0 0.0
        %1936 = vmatpush1.msra.mxu0 0.0
        %1937 = vmatprep.subr.mxu0 0.0
        %1938 = vmatpush1.msra.mxu0 0.0
        %1939 = vmatprep.subr.mxu0 0.0
        %1940 = vmatpush1.msra.mxu0 0.0
        %1941 = vmatprep.subr.mxu0 0.0
        %1942 = vmatpush1.msra.mxu0 0.0
        %1943 = vmatprep.subr.mxu0 0.0
        %1944 = vmatpush1.msra.mxu0 0.0
        %1945 = vmatprep.subr.mxu0 0.0
        %1946 = vmatpush1.msra.mxu0 0.0
        %1947 = vmatprep.subr.mxu0 0.0
        %1948 = vmatpush1.msra.mxu0 0.0
        %1949 = vmatprep.subr.mxu0 0.0
        %1950 = vmatpush1.msra.mxu0 0.0
        %1951 = vmatprep.subr.mxu0 0.0
        %1952 = vmatpush1.msra.mxu0 0.0
        %1953 = vmatprep.subr.mxu0 0.0
        %1954 = vmatpush1.msra.mxu0 0.0
        %1955 = vmatprep.subr.mxu0 0.0
        %1956 = vmatpush1.msra.mxu0 0.0
        %1957 = vmatprep.subr.mxu0 0.0
        %1958 = vmatpush1.msra.mxu0 0.0
        %1959 = vmatprep.subr.mxu0 0.0
        %1960 = vmatpush1.msra.mxu0 0.0
        %1961 = vmatprep.subr.mxu0 0.0
        %1962 = vmatpush1.msra.mxu0 0.0
        %1963 = vmatprep.subr.mxu0 0.0
        %1964 = vmatpush1.msra.mxu0 0.0
        %1965 = vmatprep.subr.mxu0 0.0
        %1966 = vmatpush1.msra.mxu0 0.0
        %1967 = vmatprep.subr.mxu0 0.0
        %1968 = vmatpush1.msra.mxu0 0.0
        %1969 = vmatprep.subr.mxu0 0.0
        %1970 = vmatpush1.msra.mxu0 0.0
        %1971 = vmatprep.subr.mxu0 0.0
        %1972 = vmatpush1.msra.mxu0 0.0
        %1973 = vmatprep.subr.mxu0 0.0
        %1974 = vmatpush1.msra.mxu0 0.0
        %1975 = vmatprep.subr.mxu0 0.0
        %1976 = vmatpush1.msra.mxu0 0.0
        %1977 = vmatprep.subr.mxu0 0.0
        %1978 = vmatpush1.msra.mxu0 0.0
        %1979 = vmatprep.mubr.f32.mxu0 0.0
        %v1980 = vand.u32 %v1824, 4294901760
        %1981 = vmatmul.mubr.f32.gmra.mrb[0].mxu0 %v1980
        %v1982 = vpop.f32.mrb[0].mxu0
        %v1983 = vadd.f32 %v1902, %v1982
        %v1984 = vpop.f32.mrb[0].mxu0
        %1985 = vdwg.mxu0
        %1986 = vmatprep.subr.mxu0 0.0
        %v1987 = vand.u32 %v1817, 4294901760
        %v1988 = vsub.f32 %v1817, %v1987
        %1989 = vmatpush1.msra.mxu0 %v1988
        %1990 = vmatprep.subr.mxu0 0.0
        %v1991 = vand.u32 %v1826, 4294901760
        %v1992 = vsub.f32 %v1826, %v1991
        %1993 = vmatpush1.msra.mxu0 %v1992
        %1994 = vmatprep.subr.mxu0 0.0
        %1995 = vmatpush1.msra.mxu0 0.0
        %1996 = vmatprep.subr.mxu0 0.0
        %1997 = vmatpush1.msra.mxu0 0.0
        %1998 = vmatprep.subr.mxu0 0.0
        %1999 = vmatpush1.msra.mxu0 0.0
        %2000 = vmatprep.subr.mxu0 0.0
        %2001 = vmatpush1.msra.mxu0 0.0
        %2002 = vmatprep.subr.mxu0 0.0
        %2003 = vmatpush1.msra.mxu0 0.0
        %2004 = vmatprep.subr.mxu0 0.0
        %2005 = vmatpush1.msra.mxu0 0.0
        %2006 = vmatprep.subr.mxu0 0.0
        %2007 = vmatpush1.msra.mxu0 0.0
        %2008 = vmatprep.subr.mxu0 0.0
        %2009 = vmatpush1.msra.mxu0 0.0
        %2010 = vmatprep.subr.mxu0 0.0
        %2011 = vmatpush1.msra.mxu0 0.0
        %2012 = vmatprep.subr.mxu0 0.0
        %2013 = vmatpush1.msra.mxu0 0.0
        %2014 = vmatprep.subr.mxu0 0.0
        %2015 = vmatpush1.msra.mxu0 0.0
        %2016 = vmatprep.subr.mxu0 0.0
        %2017 = vmatpush1.msra.mxu0 0.0
        %2018 = vmatprep.subr.mxu0 0.0
        %2019 = vmatpush1.msra.mxu0 0.0
        %2020 = vmatprep.subr.mxu0 0.0
        %2021 = vmatpush1.msra.mxu0 0.0
        %2022 = vmatprep.subr.mxu0 0.0
        %2023 = vmatpush1.msra.mxu0 0.0
        %2024 = vmatprep.subr.mxu0 0.0
        %2025 = vmatpush1.msra.mxu0 0.0
        %2026 = vmatprep.subr.mxu0 0.0
        %2027 = vmatpush1.msra.mxu0 0.0
        %2028 = vmatprep.subr.mxu0 0.0
        %2029 = vmatpush1.msra.mxu0 0.0
        %2030 = vmatprep.subr.mxu0 0.0
        %2031 = vmatpush1.msra.mxu0 0.0
        %2032 = vmatprep.subr.mxu0 0.0
        %2033 = vmatpush1.msra.mxu0 0.0
        %2034 = vmatprep.subr.mxu0 0.0
        %2035 = vmatpush1.msra.mxu0 0.0
        %2036 = vmatprep.subr.mxu0 0.0
        %2037 = vmatpush1.msra.mxu0 0.0
        %2038 = vmatprep.subr.mxu0 0.0
        %2039 = vmatpush1.msra.mxu0 0.0
        %2040 = vmatprep.subr.mxu0 0.0
        %2041 = vmatpush1.msra.mxu0 0.0
        %2042 = vmatprep.subr.mxu0 0.0
        %2043 = vmatpush1.msra.mxu0 0.0
        %2044 = vmatprep.subr.mxu0 0.0
        %2045 = vmatpush1.msra.mxu0 0.0
        %2046 = vmatprep.subr.mxu0 0.0
        %2047 = vmatpush1.msra.mxu0 0.0
        %2048 = vmatprep.subr.mxu0 0.0
        %2049 = vmatpush1.msra.mxu0 0.0
        %2050 = vmatprep.subr.mxu0 0.0
        %2051 = vmatpush1.msra.mxu0 0.0
        %2052 = vmatprep.subr.mxu0 0.0
        %2053 = vmatpush1.msra.mxu0 0.0
        %2054 = vmatprep.mubr.f32.mxu0 0.0
        %v2055 = vand.u32 %v1824, 4294901760
        %v2056 = vsub.f32 %v1824, %v2055
        %2057 = vmatmul.mubr.f32.gmra.mrb[0].mxu0 %v2056
        %v2058 = vpop.f32.mrb[0].mxu0
        %v2059 = vadd.f32 %v1983, %v2058
        %v2060 = vpop.f32.mrb[0].mxu0
        %2061 = vdwg.mxu0
        %2062 = vmatprep.subr.mxu0 0.0
        %v2063 = vand.u32 %v1817, 4294901760
        %2064 = vmatpush1.msra.mxu0 %v2063
        %2065 = vmatprep.subr.mxu0 0.0
        %v2066 = vand.u32 %v1826, 4294901760
        %2067 = vmatpush1.msra.mxu0 %v2066
        %2068 = vmatprep.subr.mxu0 0.0
        %2069 = vmatpush1.msra.mxu0 0.0
        %2070 = vmatprep.subr.mxu0 0.0
        %2071 = vmatpush1.msra.mxu0 0.0
        %2072 = vmatprep.subr.mxu0 0.0
        %2073 = vmatpush1.msra.mxu0 0.0
        %2074 = vmatprep.subr.mxu0 0.0
        %2075 = vmatpush1.msra.mxu0 0.0
        %2076 = vmatprep.subr.mxu0 0.0
        %2077 = vmatpush1.msra.mxu0 0.0
        %2078 = vmatprep.subr.mxu0 0.0
        %2079 = vmatpush1.msra.mxu0 0.0
        %2080 = vmatprep.subr.mxu0 0.0
        %2081 = vmatpush1.msra.mxu0 0.0
        %2082 = vmatprep.subr.mxu0 0.0
        %2083 = vmatpush1.msra.mxu0 0.0
        %2084 = vmatprep.subr.mxu0 0.0
        %2085 = vmatpush1.msra.mxu0 0.0
        %2086 = vmatprep.subr.mxu0 0.0
        %2087 = vmatpush1.msra.mxu0 0.0
        %2088 = vmatprep.subr.mxu0 0.0
        %2089 = vmatpush1.msra.mxu0 0.0
        %2090 = vmatprep.subr.mxu0 0.0
        %2091 = vmatpush1.msra.mxu0 0.0
        %2092 = vmatprep.subr.mxu0 0.0
        %2093 = vmatpush1.msra.mxu0 0.0
        %2094 = vmatprep.subr.mxu0 0.0
        %2095 = vmatpush1.msra.mxu0 0.0
        %2096 = vmatprep.subr.mxu0 0.0
        %2097 = vmatpush1.msra.mxu0 0.0
        %2098 = vmatprep.subr.mxu0 0.0
        %2099 = vmatpush1.msra.mxu0 0.0
        %2100 = vmatprep.subr.mxu0 0.0
        %2101 = vmatpush1.msra.mxu0 0.0
        %2102 = vmatprep.subr.mxu0 0.0
        %2103 = vmatpush1.msra.mxu0 0.0
        %2104 = vmatprep.subr.mxu0 0.0
        %2105 = vmatpush1.msra.mxu0 0.0
        %2106 = vmatprep.subr.mxu0 0.0
        %2107 = vmatpush1.msra.mxu0 0.0
        %2108 = vmatprep.subr.mxu0 0.0
        %2109 = vmatpush1.msra.mxu0 0.0
        %2110 = vmatprep.subr.mxu0 0.0
        %2111 = vmatpush1.msra.mxu0 0.0
        %2112 = vmatprep.subr.mxu0 0.0
        %2113 = vmatpush1.msra.mxu0 0.0
        %2114 = vmatprep.subr.mxu0 0.0
        %2115 = vmatpush1.msra.mxu0 0.0
        %2116 = vmatprep.subr.mxu0 0.0
        %2117 = vmatpush1.msra.mxu0 0.0
        %2118 = vmatprep.subr.mxu0 0.0
        %2119 = vmatpush1.msra.mxu0 0.0
        %2120 = vmatprep.subr.mxu0 0.0
        %2121 = vmatpush1.msra.mxu0 0.0
        %2122 = vmatprep.subr.mxu0 0.0
        %2123 = vmatpush1.msra.mxu0 0.0
        %2124 = vmatprep.subr.mxu0 0.0
        %2125 = vmatpush1.msra.mxu0 0.0
        %2126 = vmatprep.subr.mxu0 0.0
        %2127 = vmatpush1.msra.mxu0 0.0
        %2128 = vmatprep.mubr.f32.mxu0 0.0
        %v2129 = vand.u32 %v1824, 4294901760
        %v2130 = vsub.f32 %v1824, %v2129
        %v2131 = vand.u32 %v2130, 4294901760
        %2132 = vmatmul.mubr.f32.gmra.mrb[0].mxu0 %v2131
        %v2133 = vpop.f32.mrb[0].mxu0
        %v2134 = vadd.f32 %v2059, %v2133
        %v2135 = vpop.f32.mrb[0].mxu0
        %2136 = vdwg.mxu0
        %2137 = vmatprep.subr.mxu0 0.0
        %v2138 = vand.u32 %v1817, 4294901760
        %v2139 = vsub.f32 %v1817, %v2138
        %v2140 = vand.u32 %v2139, 4294901760
        %2141 = vmatpush1.msra.mxu0 %v2140
        %2142 = vmatprep.subr.mxu0 0.0
        %v2143 = vand.u32 %v1826, 4294901760
        %v2144 = vsub.f32 %v1826, %v2143
        %v2145 = vand.u32 %v2144, 4294901760
        %2146 = vmatpush1.msra.mxu0 %v2145
        %2147 = vmatprep.subr.mxu0 0.0
        %2148 = vmatpush1.msra.mxu0 0.0
        %2149 = vmatprep.subr.mxu0 0.0
        %2150 = vmatpush1.msra.mxu0 0.0
        %2151 = vmatprep.subr.mxu0 0.0
        %2152 = vmatpush1.msra.mxu0 0.0
        %2153 = vmatprep.subr.mxu0 0.0
        %2154 = vmatpush1.msra.mxu0 0.0
        %2155 = vmatprep.subr.mxu0 0.0
        %2156 = vmatpush1.msra.mxu0 0.0
        %2157 = vmatprep.subr.mxu0 0.0
        %2158 = vmatpush1.msra.mxu0 0.0
        %2159 = vmatprep.subr.mxu0 0.0
        %2160 = vmatpush1.msra.mxu0 0.0
        %2161 = vmatprep.subr.mxu0 0.0
        %2162 = vmatpush1.msra.mxu0 0.0
        %2163 = vmatprep.subr.mxu0 0.0
        %2164 = vmatpush1.msra.mxu0 0.0
        %2165 = vmatprep.subr.mxu0 0.0
        %2166 = vmatpush1.msra.mxu0 0.0
        %2167 = vmatprep.subr.mxu0 0.0
        %2168 = vmatpush1.msra.mxu0 0.0
        %2169 = vmatprep.subr.mxu0 0.0
        %2170 = vmatpush1.msra.mxu0 0.0
        %2171 = vmatprep.subr.mxu0 0.0
        %2172 = vmatpush1.msra.mxu0 0.0
        %2173 = vmatprep.subr.mxu0 0.0
        %2174 = vmatpush1.msra.mxu0 0.0
        %2175 = vmatprep.subr.mxu0 0.0
        %2176 = vmatpush1.msra.mxu0 0.0
        %2177 = vmatprep.subr.mxu0 0.0
        %2178 = vmatpush1.msra.mxu0 0.0
        %2179 = vmatprep.subr.mxu0 0.0
        %2180 = vmatpush1.msra.mxu0 0.0
        %2181 = vmatprep.subr.mxu0 0.0
        %2182 = vmatpush1.msra.mxu0 0.0
        %2183 = vmatprep.subr.mxu0 0.0
        %2184 = vmatpush1.msra.mxu0 0.0
        %2185 = vmatprep.subr.mxu0 0.0
        %2186 = vmatpush1.msra.mxu0 0.0
        %2187 = vmatprep.subr.mxu0 0.0
        %2188 = vmatpush1.msra.mxu0 0.0
        %2189 = vmatprep.subr.mxu0 0.0
        %2190 = vmatpush1.msra.mxu0 0.0
        %2191 = vmatprep.subr.mxu0 0.0
        %2192 = vmatpush1.msra.mxu0 0.0
        %2193 = vmatprep.subr.mxu0 0.0
        %2194 = vmatpush1.msra.mxu0 0.0
        %2195 = vmatprep.subr.mxu0 0.0
        %2196 = vmatpush1.msra.mxu0 0.0
        %2197 = vmatprep.subr.mxu0 0.0
        %2198 = vmatpush1.msra.mxu0 0.0
        %2199 = vmatprep.subr.mxu0 0.0
        %2200 = vmatpush1.msra.mxu0 0.0
        %2201 = vmatprep.subr.mxu0 0.0
        %2202 = vmatpush1.msra.mxu0 0.0
        %2203 = vmatprep.subr.mxu0 0.0
        %2204 = vmatpush1.msra.mxu0 0.0
        %2205 = vmatprep.subr.mxu0 0.0
        %2206 = vmatpush1.msra.mxu0 0.0
        %2207 = vmatprep.mubr.f32.mxu0 0.0
        %v2208 = vand.u32 %v1824, 4294901760
        %2209 = vmatmul.mubr.f32.gmra.mrb[0].mxu0 %v2208
        %v2210 = vpop.f32.mrb[0].mxu0
        %v2211 = vadd.f32 %v2134, %v2210
        %v2212 = vpop.f32.mrb[0].mxu0
        %2213 = vdwg.mxu0
        %2214 = vmatprep.subr.mxu0 0.0
        %v2215 = vand.u32 %v1817, 4294901760
        %2216 = vmatpush1.msra.mxu0 %v2215
        %2217 = vmatprep.subr.mxu0 0.0
        %v2218 = vand.u32 %v1826, 4294901760
        %2219 = vmatpush1.msra.mxu0 %v2218
        %2220 = vmatprep.subr.mxu0 0.0
        %2221 = vmatpush1.msra.mxu0 0.0
        %2222 = vmatprep.subr.mxu0 0.0
        %2223 = vmatpush1.msra.mxu0 0.0
        %2224 = vmatprep.subr.mxu0 0.0
        %2225 = vmatpush1.msra.mxu0 0.0
        %2226 = vmatprep.subr.mxu0 0.0
        %2227 = vmatpush1.msra.mxu0 0.0
        %2228 = vmatprep.subr.mxu0 0.0
        %2229 = vmatpush1.msra.mxu0 0.0
        %2230 = vmatprep.subr.mxu0 0.0
        %2231 = vmatpush1.msra.mxu0 0.0
        %2232 = vmatprep.subr.mxu0 0.0
        %2233 = vmatpush1.msra.mxu0 0.0
        %2234 = vmatprep.subr.mxu0 0.0
        %2235 = vmatpush1.msra.mxu0 0.0
        %2236 = vmatprep.subr.mxu0 0.0
        %2237 = vmatpush1.msra.mxu0 0.0
        %2238 = vmatprep.subr.mxu0 0.0
        %2239 = vmatpush1.msra.mxu0 0.0
        %2240 = vmatprep.subr.mxu0 0.0
        %2241 = vmatpush1.msra.mxu0 0.0
        %2242 = vmatprep.subr.mxu0 0.0
        %2243 = vmatpush1.msra.mxu0 0.0
        %2244 = vmatprep.subr.mxu0 0.0
        %2245 = vmatpush1.msra.mxu0 0.0
        %2246 = vmatprep.subr.mxu0 0.0
        %2247 = vmatpush1.msra.mxu0 0.0
        %2248 = vmatprep.subr.mxu0 0.0
        %2249 = vmatpush1.msra.mxu0 0.0
        %2250 = vmatprep.subr.mxu0 0.0
        %2251 = vmatpush1.msra.mxu0 0.0
        %2252 = vmatprep.subr.mxu0 0.0
        %2253 = vmatpush1.msra.mxu0 0.0
        %2254 = vmatprep.subr.mxu0 0.0
        %2255 = vmatpush1.msra.mxu0 0.0
        %2256 = vmatprep.subr.mxu0 0.0
        %2257 = vmatpush1.msra.mxu0 0.0
        %2258 = vmatprep.subr.mxu0 0.0
        %2259 = vmatpush1.msra.mxu0 0.0
        %2260 = vmatprep.subr.mxu0 0.0
        %2261 = vmatpush1.msra.mxu0 0.0
        %2262 = vmatprep.subr.mxu0 0.0
        %2263 = vmatpush1.msra.mxu0 0.0
        %2264 = vmatprep.subr.mxu0 0.0
        %2265 = vmatpush1.msra.mxu0 0.0
        %2266 = vmatprep.subr.mxu0 0.0
        %2267 = vmatpush1.msra.mxu0 0.0
        %2268 = vmatprep.subr.mxu0 0.0
        %2269 = vmatpush1.msra.mxu0 0.0
        %2270 = vmatprep.subr.mxu0 0.0
        %2271 = vmatpush1.msra.mxu0 0.0
        %2272 = vmatprep.subr.mxu0 0.0
        %2273 = vmatpush1.msra.mxu0 0.0
        %2274 = vmatprep.subr.mxu0 0.0
        %2275 = vmatpush1.msra.mxu0 0.0
        %2276 = vmatprep.subr.mxu0 0.0
        %2277 = vmatpush1.msra.mxu0 0.0
        %2278 = vmatprep.subr.mxu0 0.0
        %2279 = vmatpush1.msra.mxu0 0.0
        %2280 = vmatprep.mubr.f32.mxu0 0.0
        %v2281 = vand.u32 %v1824, 4294901760
        %2282 = vmatmul.mubr.f32.gmra.mrb[0].mxu0 %v2281
        %v2283 = vpop.f32.mrb[0].mxu0
        %v2284 = vadd.f32 %v2211, %v2283
        %v2285 = vpop.f32.mrb[0].mxu0
        %2286 = vdwg.mxu0
        %vm2287 = vcmp.ge.f32.partialorder %v2284, 0.0
        %v2288 = vmul.f32 %v2284, 0.01
        %v2289 = vsel %vm2287, %v2284, %v2288
        %v2291 = vrot.slane %v2289, 4
        %2292 = vrot.lane.b32.xlu0 %v2291, 127
        %v2293 = vpop.permute.xlu0 %2292
        %2295 = vrot.lane.b32.xlu0 %v2289, 126
        %v2296 = vpop.permute.xlu0 %2295
        %v2297 = vsel %vm831, %v2289, %v2293
        %2299 = vset.pattern.permute.xlu0 0
        %2300 = vperm.xlu0 %2299, %v1792
        %v2301 = vpop.permute.xlu0 %2300
        %v2304 = vsel %vm838, %v1790, 0
        %v2306 = vsel %vm831, %v2296, 0
        %2308 = vmatprep.subr.mxu0 0.0
        %v2309 = vand.u32 %v2297, 4294901760
        %2310 = vmatpush1.msra.mxu0 %v2309
        %2311 = vmatprep.subr.mxu0 0.0
        %v2312 = vand.u32 %v2306, 4294901760
        %2313 = vmatpush1.msra.mxu0 %v2312
        %2314 = vmatprep.subr.mxu0 0.0
        %2315 = vmatpush1.msra.mxu0 0.0
        %2316 = vmatprep.subr.mxu0 0.0
        %2317 = vmatpush1.msra.mxu0 0.0
        %2318 = vmatprep.subr.mxu0 0.0
        %2319 = vmatpush1.msra.mxu0 0.0
        %2320 = vmatprep.subr.mxu0 0.0
        %2321 = vmatpush1.msra.mxu0 0.0
        %2322 = vmatprep.subr.mxu0 0.0
        %2323 = vmatpush1.msra.mxu0 0.0
        %2324 = vmatprep.subr.mxu0 0.0
        %2325 = vmatpush1.msra.mxu0 0.0
        %2326 = vmatprep.subr.mxu0 0.0
        %2327 = vmatpush1.msra.mxu0 0.0
        %2328 = vmatprep.subr.mxu0 0.0
        %2329 = vmatpush1.msra.mxu0 0.0
        %2330 = vmatprep.subr.mxu0 0.0
        %2331 = vmatpush1.msra.mxu0 0.0
        %2332 = vmatprep.subr.mxu0 0.0
        %2333 = vmatpush1.msra.mxu0 0.0
        %2334 = vmatprep.subr.mxu0 0.0
        %2335 = vmatpush1.msra.mxu0 0.0
        %2336 = vmatprep.subr.mxu0 0.0
        %2337 = vmatpush1.msra.mxu0 0.0
        %2338 = vmatprep.subr.mxu0 0.0
        %2339 = vmatpush1.msra.mxu0 0.0
        %2340 = vmatprep.subr.mxu0 0.0
        %2341 = vmatpush1.msra.mxu0 0.0
        %2342 = vmatprep.subr.mxu0 0.0
        %2343 = vmatpush1.msra.mxu0 0.0
        %2344 = vmatprep.subr.mxu0 0.0
        %2345 = vmatpush1.msra.mxu0 0.0
        %2346 = vmatprep.subr.mxu0 0.0
        %2347 = vmatpush1.msra.mxu0 0.0
        %2348 = vmatprep.subr.mxu0 0.0
        %2349 = vmatpush1.msra.mxu0 0.0
        %2350 = vmatprep.subr.mxu0 0.0
        %2351 = vmatpush1.msra.mxu0 0.0
        %2352 = vmatprep.subr.mxu0 0.0
        %2353 = vmatpush1.msra.mxu0 0.0
        %2354 = vmatprep.subr.mxu0 0.0
        %2355 = vmatpush1.msra.mxu0 0.0
        %2356 = vmatprep.subr.mxu0 0.0
        %2357 = vmatpush1.msra.mxu0 0.0
        %2358 = vmatprep.subr.mxu0 0.0
        %2359 = vmatpush1.msra.mxu0 0.0
        %2360 = vmatprep.subr.mxu0 0.0
        %2361 = vmatpush1.msra.mxu0 0.0
        %2362 = vmatprep.subr.mxu0 0.0
        %2363 = vmatpush1.msra.mxu0 0.0
        %2364 = vmatprep.subr.mxu0 0.0
        %2365 = vmatpush1.msra.mxu0 0.0
        %2366 = vmatprep.subr.mxu0 0.0
        %2367 = vmatpush1.msra.mxu0 0.0
        %2368 = vmatprep.subr.mxu0 0.0
        %2369 = vmatpush1.msra.mxu0 0.0
        %2370 = vmatprep.subr.mxu0 0.0
        %2371 = vmatpush1.msra.mxu0 0.0
        %2372 = vmatprep.subr.mxu0 0.0
        %2373 = vmatpush1.msra.mxu0 0.0
        %2374 = vmatprep.mubr.f32.mxu0 0.0
        %v2375 = vand.u32 %v2304, 4294901760
        %v2376 = vsub.f32 %v2304, %v2375
        %v2377 = vand.u32 %v2376, 4294901760
        %v2378 = vsub.f32 %v2376, %v2377
        %v2379 = vand.u32 %v2378, 4294901760
        %2380 = vmatmul.mubr.f32.gmra.mrb[0].mxu0 %v2379
        %v2381 = vpop.f32.mrb[0].mxu0
        %v2382 = vadd.f32 %v2301, %v2381
        %v2383 = vpop.f32.mrb[0].mxu0
        %2384 = vdwg.mxu0
        %2385 = vmatprep.subr.mxu0 0.0
        %v2386 = vand.u32 %v2297, 4294901760
        %v2387 = vsub.f32 %v2297, %v2386
        %v2388 = vand.u32 %v2387, 4294901760
        %v2389 = vsub.f32 %v2387, %v2388
        %v2390 = vand.u32 %v2389, 4294901760
        %2391 = vmatpush1.msra.mxu0 %v2390
        %2392 = vmatprep.subr.mxu0 0.0
        %v2393 = vand.u32 %v2306, 4294901760
        %v2394 = vsub.f32 %v2306, %v2393
        %v2395 = vand.u32 %v2394, 4294901760
        %v2396 = vsub.f32 %v2394, %v2395
        %v2397 = vand.u32 %v2396, 4294901760
        %2398 = vmatpush1.msra.mxu0 %v2397
        %2399 = vmatprep.subr.mxu0 0.0
        %2400 = vmatpush1.msra.mxu0 0.0
        %2401 = vmatprep.subr.mxu0 0.0
        %2402 = vmatpush1.msra.mxu0 0.0
        %2403 = vmatprep.subr.mxu0 0.0
        %2404 = vmatpush1.msra.mxu0 0.0
        %2405 = vmatprep.subr.mxu0 0.0
        %2406 = vmatpush1.msra.mxu0 0.0
        %2407 = vmatprep.subr.mxu0 0.0
        %2408 = vmatpush1.msra.mxu0 0.0
        %2409 = vmatprep.subr.mxu0 0.0
        %2410 = vmatpush1.msra.mxu0 0.0
        %2411 = vmatprep.subr.mxu0 0.0
        %2412 = vmatpush1.msra.mxu0 0.0
        %2413 = vmatprep.subr.mxu0 0.0
        %2414 = vmatpush1.msra.mxu0 0.0
        %2415 = vmatprep.subr.mxu0 0.0
        %2416 = vmatpush1.msra.mxu0 0.0
        %2417 = vmatprep.subr.mxu0 0.0
        %2418 = vmatpush1.msra.mxu0 0.0
        %2419 = vmatprep.subr.mxu0 0.0
        %2420 = vmatpush1.msra.mxu0 0.0
        %2421 = vmatprep.subr.mxu0 0.0
        %2422 = vmatpush1.msra.mxu0 0.0
        %2423 = vmatprep.subr.mxu0 0.0
        %2424 = vmatpush1.msra.mxu0 0.0
        %2425 = vmatprep.subr.mxu0 0.0
        %2426 = vmatpush1.msra.mxu0 0.0
        %2427 = vmatprep.subr.mxu0 0.0
        %2428 = vmatpush1.msra.mxu0 0.0
        %2429 = vmatprep.subr.mxu0 0.0
        %2430 = vmatpush1.msra.mxu0 0.0
        %2431 = vmatprep.subr.mxu0 0.0
        %2432 = vmatpush1.msra.mxu0 0.0
        %2433 = vmatprep.subr.mxu0 0.0
        %2434 = vmatpush1.msra.mxu0 0.0
        %2435 = vmatprep.subr.mxu0 0.0
        %2436 = vmatpush1.msra.mxu0 0.0
        %2437 = vmatprep.subr.mxu0 0.0
        %2438 = vmatpush1.msra.mxu0 0.0
        %2439 = vmatprep.subr.mxu0 0.0
        %2440 = vmatpush1.msra.mxu0 0.0
        %2441 = vmatprep.subr.mxu0 0.0
        %2442 = vmatpush1.msra.mxu0 0.0
        %2443 = vmatprep.subr.mxu0 0.0
        %2444 = vmatpush1.msra.mxu0 0.0
        %2445 = vmatprep.subr.mxu0 0.0
        %2446 = vmatpush1.msra.mxu0 0.0
        %2447 = vmatprep.subr.mxu0 0.0
        %2448 = vmatpush1.msra.mxu0 0.0
        %2449 = vmatprep.subr.mxu0 0.0
        %2450 = vmatpush1.msra.mxu0 0.0
        %2451 = vmatprep.subr.mxu0 0.0
        %2452 = vmatpush1.msra.mxu0 0.0
        %2453 = vmatprep.subr.mxu0 0.0
        %2454 = vmatpush1.msra.mxu0 0.0
        %2455 = vmatprep.subr.mxu0 0.0
        %2456 = vmatpush1.msra.mxu0 0.0
        %2457 = vmatprep.subr.mxu0 0.0
        %2458 = vmatpush1.msra.mxu0 0.0
        %2459 = vmatprep.mubr.f32.mxu0 0.0
        %v2460 = vand.u32 %v2304, 4294901760
        %2461 = vmatmul.mubr.f32.gmra.mrb[0].mxu0 %v2460
        %v2462 = vpop.f32.mrb[0].mxu0
        %v2463 = vadd.f32 %v2382, %v2462
        %v2464 = vpop.f32.mrb[0].mxu0
        %2465 = vdwg.mxu0
        %2466 = vmatprep.subr.mxu0 0.0
        %v2467 = vand.u32 %v2297, 4294901760
        %v2468 = vsub.f32 %v2297, %v2467
        %2469 = vmatpush1.msra.mxu0 %v2468
        %2470 = vmatprep.subr.mxu0 0.0
        %v2471 = vand.u32 %v2306, 4294901760
        %v2472 = vsub.f32 %v2306, %v2471
        %2473 = vmatpush1.msra.mxu0 %v2472
        %2474 = vmatprep.subr.mxu0 0.0
        %2475 = vmatpush1.msra.mxu0 0.0
        %2476 = vmatprep.subr.mxu0 0.0
        %2477 = vmatpush1.msra.mxu0 0.0
        %2478 = vmatprep.subr.mxu0 0.0
        %2479 = vmatpush1.msra.mxu0 0.0
        %2480 = vmatprep.subr.mxu0 0.0
        %2481 = vmatpush1.msra.mxu0 0.0
        %2482 = vmatprep.subr.mxu0 0.0
        %2483 = vmatpush1.msra.mxu0 0.0
        %2484 = vmatprep.subr.mxu0 0.0
        %2485 = vmatpush1.msra.mxu0 0.0
        %2486 = vmatprep.subr.mxu0 0.0
        %2487 = vmatpush1.msra.mxu0 0.0
        %2488 = vmatprep.subr.mxu0 0.0
        %2489 = vmatpush1.msra.mxu0 0.0
        %2490 = vmatprep.subr.mxu0 0.0
        %2491 = vmatpush1.msra.mxu0 0.0
        %2492 = vmatprep.subr.mxu0 0.0
        %2493 = vmatpush1.msra.mxu0 0.0
        %2494 = vmatprep.subr.mxu0 0.0
        %2495 = vmatpush1.msra.mxu0 0.0
        %2496 = vmatprep.subr.mxu0 0.0
        %2497 = vmatpush1.msra.mxu0 0.0
        %2498 = vmatprep.subr.mxu0 0.0
        %2499 = vmatpush1.msra.mxu0 0.0
        %2500 = vmatprep.subr.mxu0 0.0
        %2501 = vmatpush1.msra.mxu0 0.0
        %2502 = vmatprep.subr.mxu0 0.0
        %2503 = vmatpush1.msra.mxu0 0.0
        %2504 = vmatprep.subr.mxu0 0.0
        %2505 = vmatpush1.msra.mxu0 0.0
        %2506 = vmatprep.subr.mxu0 0.0
        %2507 = vmatpush1.msra.mxu0 0.0
        %2508 = vmatprep.subr.mxu0 0.0
        %2509 = vmatpush1.msra.mxu0 0.0
        %2510 = vmatprep.subr.mxu0 0.0
        %2511 = vmatpush1.msra.mxu0 0.0
        %2512 = vmatprep.subr.mxu0 0.0
        %2513 = vmatpush1.msra.mxu0 0.0
        %2514 = vmatprep.subr.mxu0 0.0
        %2515 = vmatpush1.msra.mxu0 0.0
        %2516 = vmatprep.subr.mxu0 0.0
        %2517 = vmatpush1.msra.mxu0 0.0
        %2518 = vmatprep.subr.mxu0 0.0
        %2519 = vmatpush1.msra.mxu0 0.0
        %2520 = vmatprep.subr.mxu0 0.0
        %2521 = vmatpush1.msra.mxu0 0.0
        %2522 = vmatprep.subr.mxu0 0.0
        %2523 = vmatpush1.msra.mxu0 0.0
        %2524 = vmatprep.subr.mxu0 0.0
        %2525 = vmatpush1.msra.mxu0 0.0
        %2526 = vmatprep.subr.mxu0 0.0
        %2527 = vmatpush1.msra.mxu0 0.0
        %2528 = vmatprep.subr.mxu0 0.0
        %2529 = vmatpush1.msra.mxu0 0.0
        %2530 = vmatprep.subr.mxu0 0.0
        %2531 = vmatpush1.msra.mxu0 0.0
        %2532 = vmatprep.subr.mxu0 0.0
        %2533 = vmatpush1.msra.mxu0 0.0
        %2534 = vmatprep.mubr.f32.mxu0 0.0
        %v2535 = vand.u32 %v2304, 4294901760
        %v2536 = vsub.f32 %v2304, %v2535
        %2537 = vmatmul.mubr.f32.gmra.mrb[0].mxu0 %v2536
        %v2538 = vpop.f32.mrb[0].mxu0
        %v2539 = vadd.f32 %v2463, %v2538
        %v2540 = vpop.f32.mrb[0].mxu0
        %2541 = vdwg.mxu0
        %2542 = vmatprep.subr.mxu0 0.0
        %v2543 = vand.u32 %v2297, 4294901760
        %2544 = vmatpush1.msra.mxu0 %v2543
        %2545 = vmatprep.subr.mxu0 0.0
        %v2546 = vand.u32 %v2306, 4294901760
        %2547 = vmatpush1.msra.mxu0 %v2546
        %2548 = vmatprep.subr.mxu0 0.0
        %2549 = vmatpush1.msra.mxu0 0.0
        %2550 = vmatprep.subr.mxu0 0.0
        %2551 = vmatpush1.msra.mxu0 0.0
        %2552 = vmatprep.subr.mxu0 0.0
        %2553 = vmatpush1.msra.mxu0 0.0
        %2554 = vmatprep.subr.mxu0 0.0
        %2555 = vmatpush1.msra.mxu0 0.0
        %2556 = vmatprep.subr.mxu0 0.0
        %2557 = vmatpush1.msra.mxu0 0.0
        %2558 = vmatprep.subr.mxu0 0.0
        %2559 = vmatpush1.msra.mxu0 0.0
        %2560 = vmatprep.subr.mxu0 0.0
        %2561 = vmatpush1.msra.mxu0 0.0
        %2562 = vmatprep.subr.mxu0 0.0
        %2563 = vmatpush1.msra.mxu0 0.0
        %2564 = vmatprep.subr.mxu0 0.0
        %2565 = vmatpush1.msra.mxu0 0.0
        %2566 = vmatprep.subr.mxu0 0.0
        %2567 = vmatpush1.msra.mxu0 0.0
        %2568 = vmatprep.subr.mxu0 0.0
        %2569 = vmatpush1.msra.mxu0 0.0
        %2570 = vmatprep.subr.mxu0 0.0
        %2571 = vmatpush1.msra.mxu0 0.0
        %2572 = vmatprep.subr.mxu0 0.0
        %2573 = vmatpush1.msra.mxu0 0.0
        %2574 = vmatprep.subr.mxu0 0.0
        %2575 = vmatpush1.msra.mxu0 0.0
        %2576 = vmatprep.subr.mxu0 0.0
        %2577 = vmatpush1.msra.mxu0 0.0
        %2578 = vmatprep.subr.mxu0 0.0
        %2579 = vmatpush1.msra.mxu0 0.0
        %2580 = vmatprep.subr.mxu0 0.0
        %2581 = vmatpush1.msra.mxu0 0.0
        %2582 = vmatprep.subr.mxu0 0.0
        %2583 = vmatpush1.msra.mxu0 0.0
        %2584 = vmatprep.subr.mxu0 0.0
        %2585 = vmatpush1.msra.mxu0 0.0
        %2586 = vmatprep.subr.mxu0 0.0
        %2587 = vmatpush1.msra.mxu0 0.0
        %2588 = vmatprep.subr.mxu0 0.0
        %2589 = vmatpush1.msra.mxu0 0.0
        %2590 = vmatprep.subr.mxu0 0.0
        %2591 = vmatpush1.msra.mxu0 0.0
        %2592 = vmatprep.subr.mxu0 0.0
        %2593 = vmatpush1.msra.mxu0 0.0
        %2594 = vmatprep.subr.mxu0 0.0
        %2595 = vmatpush1.msra.mxu0 0.0
        %2596 = vmatprep.subr.mxu0 0.0
        %2597 = vmatpush1.msra.mxu0 0.0
        %2598 = vmatprep.subr.mxu0 0.0
        %2599 = vmatpush1.msra.mxu0 0.0
        %2600 = vmatprep.subr.mxu0 0.0
        %2601 = vmatpush1.msra.mxu0 0.0
        %2602 = vmatprep.subr.mxu0 0.0
        %2603 = vmatpush1.msra.mxu0 0.0
        %2604 = vmatprep.subr.mxu0 0.0
        %2605 = vmatpush1.msra.mxu0 0.0
        %2606 = vmatprep.subr.mxu0 0.0
        %2607 = vmatpush1.msra.mxu0 0.0
        %2608 = vmatprep.mubr.f32.mxu0 0.0
        %v2609 = vand.u32 %v2304, 4294901760
        %v2610 = vsub.f32 %v2304, %v2609
        %v2611 = vand.u32 %v2610, 4294901760
        %2612 = vmatmul.mubr.f32.gmra.mrb[0].mxu0 %v2611
        %v2613 = vpop.f32.mrb[0].mxu0
        %v2614 = vadd.f32 %v2539, %v2613
        %v2615 = vpop.f32.mrb[0].mxu0
        %2616 = vdwg.mxu0
        %2617 = vmatprep.subr.mxu0 0.0
        %v2618 = vand.u32 %v2297, 4294901760
        %v2619 = vsub.f32 %v2297, %v2618
        %v2620 = vand.u32 %v2619, 4294901760
        %2621 = vmatpush1.msra.mxu0 %v2620
        %2622 = vmatprep.subr.mxu0 0.0
        %v2623 = vand.u32 %v2306, 4294901760
        %v2624 = vsub.f32 %v2306, %v2623
        %v2625 = vand.u32 %v2624, 4294901760
        %2626 = vmatpush1.msra.mxu0 %v2625
        %2627 = vmatprep.subr.mxu0 0.0
        %2628 = vmatpush1.msra.mxu0 0.0
        %2629 = vmatprep.subr.mxu0 0.0
        %2630 = vmatpush1.msra.mxu0 0.0
        %2631 = vmatprep.subr.mxu0 0.0
        %2632 = vmatpush1.msra.mxu0 0.0
        %2633 = vmatprep.subr.mxu0 0.0
        %2634 = vmatpush1.msra.mxu0 0.0
        %2635 = vmatprep.subr.mxu0 0.0
        %2636 = vmatpush1.msra.mxu0 0.0
        %2637 = vmatprep.subr.mxu0 0.0
        %2638 = vmatpush1.msra.mxu0 0.0
        %2639 = vmatprep.subr.mxu0 0.0
        %2640 = vmatpush1.msra.mxu0 0.0
        %2641 = vmatprep.subr.mxu0 0.0
        %2642 = vmatpush1.msra.mxu0 0.0
        %2643 = vmatprep.subr.mxu0 0.0
        %2644 = vmatpush1.msra.mxu0 0.0
        %2645 = vmatprep.subr.mxu0 0.0
        %2646 = vmatpush1.msra.mxu0 0.0
        %2647 = vmatprep.subr.mxu0 0.0
        %2648 = vmatpush1.msra.mxu0 0.0
        %2649 = vmatprep.subr.mxu0 0.0
        %2650 = vmatpush1.msra.mxu0 0.0
        %2651 = vmatprep.subr.mxu0 0.0
        %2652 = vmatpush1.msra.mxu0 0.0
        %2653 = vmatprep.subr.mxu0 0.0
        %2654 = vmatpush1.msra.mxu0 0.0
        %2655 = vmatprep.subr.mxu0 0.0
        %2656 = vmatpush1.msra.mxu0 0.0
        %2657 = vmatprep.subr.mxu0 0.0
        %2658 = vmatpush1.msra.mxu0 0.0
        %2659 = vmatprep.subr.mxu0 0.0
        %2660 = vmatpush1.msra.mxu0 0.0
        %2661 = vmatprep.subr.mxu0 0.0
        %2662 = vmatpush1.msra.mxu0 0.0
        %2663 = vmatprep.subr.mxu0 0.0
        %2664 = vmatpush1.msra.mxu0 0.0
        %2665 = vmatprep.subr.mxu0 0.0
        %2666 = vmatpush1.msra.mxu0 0.0
        %2667 = vmatprep.subr.mxu0 0.0
        %2668 = vmatpush1.msra.mxu0 0.0
        %2669 = vmatprep.subr.mxu0 0.0
        %2670 = vmatpush1.msra.mxu0 0.0
        %2671 = vmatprep.subr.mxu0 0.0
        %2672 = vmatpush1.msra.mxu0 0.0
        %2673 = vmatprep.subr.mxu0 0.0
        %2674 = vmatpush1.msra.mxu0 0.0
        %2675 = vmatprep.subr.mxu0 0.0
        %2676 = vmatpush1.msra.mxu0 0.0
        %2677 = vmatprep.subr.mxu0 0.0
        %2678 = vmatpush1.msra.mxu0 0.0
        %2679 = vmatprep.subr.mxu0 0.0
        %2680 = vmatpush1.msra.mxu0 0.0
        %2681 = vmatprep.subr.mxu0 0.0
        %2682 = vmatpush1.msra.mxu0 0.0
        %2683 = vmatprep.subr.mxu0 0.0
        %2684 = vmatpush1.msra.mxu0 0.0
        %2685 = vmatprep.subr.mxu0 0.0
        %2686 = vmatpush1.msra.mxu0 0.0
        %2687 = vmatprep.mubr.f32.mxu0 0.0
        %v2688 = vand.u32 %v2304, 4294901760
        %2689 = vmatmul.mubr.f32.gmra.mrb[0].mxu0 %v2688
        %v2690 = vpop.f32.mrb[0].mxu0
        %v2691 = vadd.f32 %v2614, %v2690
        %v2692 = vpop.f32.mrb[0].mxu0
        %2693 = vdwg.mxu0
        %2694 = vmatprep.subr.mxu0 0.0
        %v2695 = vand.u32 %v2297, 4294901760
        %2696 = vmatpush1.msra.mxu0 %v2695
        %2697 = vmatprep.subr.mxu0 0.0
        %v2698 = vand.u32 %v2306, 4294901760
        %2699 = vmatpush1.msra.mxu0 %v2698
        %2700 = vmatprep.subr.mxu0 0.0
        %2701 = vmatpush1.msra.mxu0 0.0
        %2702 = vmatprep.subr.mxu0 0.0
        %2703 = vmatpush1.msra.mxu0 0.0
        %2704 = vmatprep.subr.mxu0 0.0
        %2705 = vmatpush1.msra.mxu0 0.0
        %2706 = vmatprep.subr.mxu0 0.0
        %2707 = vmatpush1.msra.mxu0 0.0
        %2708 = vmatprep.subr.mxu0 0.0
        %2709 = vmatpush1.msra.mxu0 0.0
        %2710 = vmatprep.subr.mxu0 0.0
        %2711 = vmatpush1.msra.mxu0 0.0
        %2712 = vmatprep.subr.mxu0 0.0
        %2713 = vmatpush1.msra.mxu0 0.0
        %2714 = vmatprep.subr.mxu0 0.0
        %2715 = vmatpush1.msra.mxu0 0.0
        %2716 = vmatprep.subr.mxu0 0.0
        %2717 = vmatpush1.msra.mxu0 0.0
        %2718 = vmatprep.subr.mxu0 0.0
        %2719 = vmatpush1.msra.mxu0 0.0
        %2720 = vmatprep.subr.mxu0 0.0
        %2721 = vmatpush1.msra.mxu0 0.0
        %2722 = vmatprep.subr.mxu0 0.0
        %2723 = vmatpush1.msra.mxu0 0.0
        %2724 = vmatprep.subr.mxu0 0.0
        %2725 = vmatpush1.msra.mxu0 0.0
        %2726 = vmatprep.subr.mxu0 0.0
        %2727 = vmatpush1.msra.mxu0 0.0
        %2728 = vmatprep.subr.mxu0 0.0
        %2729 = vmatpush1.msra.mxu0 0.0
        %2730 = vmatprep.subr.mxu0 0.0
        %2731 = vmatpush1.msra.mxu0 0.0
        %2732 = vmatprep.subr.mxu0 0.0
        %2733 = vmatpush1.msra.mxu0 0.0
        %2734 = vmatprep.subr.mxu0 0.0
        %2735 = vmatpush1.msra.mxu0 0.0
        %2736 = vmatprep.subr.mxu0 0.0
        %2737 = vmatpush1.msra.mxu0 0.0
        %2738 = vmatprep.subr.mxu0 0.0
        %2739 = vmatpush1.msra.mxu0 0.0
        %2740 = vmatprep.subr.mxu0 0.0
        %2741 = vmatpush1.msra.mxu0 0.0
        %2742 = vmatprep.subr.mxu0 0.0
        %2743 = vmatpush1.msra.mxu0 0.0
        %2744 = vmatprep.subr.mxu0 0.0
        %2745 = vmatpush1.msra.mxu0 0.0
        %2746 = vmatprep.subr.mxu0 0.0
        %2747 = vmatpush1.msra.mxu0 0.0
        %2748 = vmatprep.subr.mxu0 0.0
        %2749 = vmatpush1.msra.mxu0 0.0
        %2750 = vmatprep.subr.mxu0 0.0
        %2751 = vmatpush1.msra.mxu0 0.0
        %2752 = vmatprep.subr.mxu0 0.0
        %2753 = vmatpush1.msra.mxu0 0.0
        %2754 = vmatprep.subr.mxu0 0.0
        %2755 = vmatpush1.msra.mxu0 0.0
        %2756 = vmatprep.subr.mxu0 0.0
        %2757 = vmatpush1.msra.mxu0 0.0
        %2758 = vmatprep.subr.mxu0 0.0
        %2759 = vmatpush1.msra.mxu0 0.0
        %2760 = vmatprep.mubr.f32.mxu0 0.0
        %v2761 = vand.u32 %v2304, 4294901760
        %2762 = vmatmul.mubr.f32.gmra.mrb[0].mxu0 %v2761
        %v2763 = vpop.f32.mrb[0].mxu0
        %v2764 = vadd.f32 %v2691, %v2763
        %v2765 = vpop.f32.mrb[0].mxu0
        %2766 = vdwg.mxu0
        %v2767 = vtanh.pop %v2764
        %2769 = vrot.lane.b32.xlu0 %v2767, 8
        %v2770 = vpop.permute.xlu0 %2769
        %v2772 = vsub.f32 %v791, %v2770
        %vm2773 = vcmask 60416
        %2774 = vst.msk [vmem:[%s314] sm:$0xf] %vm2773, %v1784
        %2776 = vrot.lane.b32.xlu0 %v2772, 120
        %v2777 = vpop.permute.xlu0 %2776
        %2779 = vst.msk [vmem:[%s321] sm:$0xf] %vm2773, %v2777
        %v2780 = vand.u32 2147483647, %v2772
        %2782 = vrot.lane.b32.xlu0 %v2780, 120
        %v2783 = vpop.permute.xlu0 %2782
        %v2785 = vsel %vm2773, %v2783, 0.0
        %2786 = vadd.xlane.f32.xlu0 %v2785
        %v2787 = vpop.xlane.xlu0 %2786
        %v2788 = vrot.slane %v2787, 4
        %v2789 = vadd.f32 %v2787, %v2788
        %v2790 = vrot.slane %v2789, 2
        %v2791 = vadd.f32 %v2789, %v2790
        %v2792 = vrot.slane %v2791, 1
        %v2793 = vadd.f32 %v2791, %v2792
        %s2794 = vtos %v2793
        %v2795 = vstv %s2794
        %v2796 = vadd.f32 %v2795, 0.0
        %v2797 = vsel %vm2773, %v1784, 0.0
        %2798 = vadd.xlane.f32.xlu0 %v2797
        %v2799 = vpop.xlane.xlu0 %2798
        %v2800 = vrot.slane %v2799, 4
        %v2801 = vadd.f32 %v2799, %v2800
        %v2802 = vrot.slane %v2801, 2
        %v2803 = vadd.f32 %v2801, %v2802
        %v2804 = vrot.slane %v2803, 1
        %v2805 = vadd.f32 %v2803, %v2804
        %s2806 = vtos %v2805
        %v2807 = vstv %s2806
        %v2808 = vadd.f32 %v2807, 0.0
        %vm2809 = vcmask 125952
        %v2810 = vsel %vm2809, %v328, 0.0
        %2811 = vadd.xlane.f32.xlu0 %v2810
        %v2812 = vpop.xlane.xlu0 %2811
        %v2813 = vrot.slane %v2812, 4
        %v2814 = vadd.f32 %v2812, %v2813
        %v2815 = vrot.slane %v2814, 2
        %v2816 = vadd.f32 %v2814, %v2815
        %v2817 = vrot.slane %v2816, 1
        %v2818 = vadd.f32 %v2816, %v2817
        %s2819 = vtos %v2818
        %v2820 = vstv %s2819
        %v2821 = vsel %vm816, %v2796, %v2808
        %v2822 = vsel %vm818, %v2821, %v2820
        %vm2823 = vcmask 16384
        %2824 = vst.msk [vmem:[%s327] sm:$0x1] %vm2823, %v2822
        %s2825 = sand.u32 %s126, 1
        %s2826 = scalar_lea.sflag [#allocation4], %s2825
        %s2827 = sand.u32 %s126, 1
        %s2828 = smul.addr %s2827, 4
        %s2829 = scalar_lea.vmem [#allocation10], %s2828
        %s2830 = sand.u32 %s29, 1
        %s2831 = scalar_lea.sflag [#allocation12], %s2830
        %s2832 = sand.u32 %s152, 1
        %s2833 = smul.addr %s2832, 4
        %s2834 = scalar_lea.vmem [#allocation11], %s2833
        %s2835 = sand.u32 %s29, 1
        %s2836 = scalar_lea.sflag [#allocation12], %s2835
        %s2837 = sand.u32 %s178, 1
        %s2838 = scalar_lea.vmem [#allocation13], %s2837
        // Predicated region
        $region53: #{level_twavenet_forward.1} parent=35 // pred_check
          %p2839 = pneg %p136
        $region54: #{level_twavenet_forward.1} parent=35 // pred_check_branch
          %2841 = sbr.rel (%p2839) target = $region56
        $region55: #{level_twavenet_forward.1} parent=35 // pred_region
          %s2843 = ssub.s32 64, 64
          %2844 = vsyncadd %s2826, %s2843
          %s2845 = smul.addr %s29, 64
          %s2846 = scalar_lea.hbm %s4, %s2845
          %s2848 = sshll.u32 %s2829, 4
          %s2849 = int_to_ptr.vmem [resolvable:$true] %s2848
          %2851 = dma.vmem_to_hbm [thread:$0]  %s2849, 64, %s2846, %s2826
        $region56: #{level_twavenet_forward.1} parent=35 // pred_fallthru
          _
        // Predicated region
        $region57: #{level_twavenet_forward.1} parent=35 // pred_check
          %p2852 = pneg %p162
        $region58: #{level_twavenet_forward.1} parent=35 // pred_check_branch
          %2854 = sbr.rel (%p2852) target = $region60
        $region59: #{level_twavenet_forward.1} parent=35 // pred_region
          %s2856 = ssub.s32 64, 64
          %2857 = vsyncadd %s2831, %s2856
          %s2858 = smul.addr %s29, 64
          %s2859 = scalar_lea.hbm %s5, %s2858
          %s2861 = sshll.u32 %s2834, 4
          %s2862 = int_to_ptr.vmem [resolvable:$true] %s2861
          %2864 = dma.vmem_to_hbm [thread:$0]  %s2862, 64, %s2859, %s2831
        $region60: #{level_twavenet_forward.1} parent=35 // pred_fallthru
          _
        // Predicated region
        $region61: #{level_twavenet_forward.1} parent=35 // pred_check
          %p2865 = pneg %p188
        $region62: #{level_twavenet_forward.1} parent=35 // pred_check_branch
          %2867 = sbr.rel (%p2865) target = $region64
        $region63: #{level_twavenet_forward.1} parent=35 // pred_region
          %s2869 = ssub.s32 16, 16
          %2870 = vsyncadd %s2836, %s2869
          %s2871 = smul.addr %s29, 16
          %s2872 = scalar_lea.hbm %s6, %s2871
          %s2874 = sshll.u32 %s2838, 4
          %s2875 = int_to_ptr.vmem [resolvable:$true] %s2874
          %2877 = dma.vmem_to_hbm [thread:$0]  %s2875, 16, %s2872, %s2836
        $region64: #{level_twavenet_forward.1} parent=35 // pred_fallthru
          _
      $region36: #{level_twavenet_forward.1} parent=5 // pred_fallthru
        _
      %p2878 = scmp.le.s32.totalorder 2, %s24
      // Predicated region
      $region65: #{level_twavenet_forward.1} parent=5 // pred_check
        %p2879 = pneg %p2878
      $region66: #{level_twavenet_forward.1} parent=5 // pred_check_branch
        %2881 = sbr.rel (%p2879) target = $region68
      $region67: #{level_twavenet_forward.1} parent=5 // pred_region
        %s2882 = ssub.s32 %s24, 2
        // Predicated region
        $region69: #{level_twavenet_forward.1} parent=67 // pred_check
          %p2883 = pneg %p142
        $region70: #{level_twavenet_forward.1} parent=67 // pred_check_branch
          %2885 = sbr.rel (%p2883) target = $region72
        $region71: #{level_twavenet_forward.1} parent=67 // pred_region
          %s2886 = sand.u32 %s127, 1
          %s2887 = scalar_lea.sflag [#allocation4], %s2886
          %s2888 = sand.u32 %s127, 1
          %s2889 = smul.addr %s2888, 4
          %s2890 = scalar_lea.vmem [#allocation10], %s2889
          %2891 = dma.done %s2887, 64
        $region72: #{level_twavenet_forward.1} parent=67 // pred_fallthru
          _
        // Predicated region
        $region73: #{level_twavenet_forward.1} parent=67 // pred_check
          %p2892 = pneg %p168
        $region74: #{level_twavenet_forward.1} parent=67 // pred_check_branch
          %2894 = sbr.rel (%p2892) target = $region76
        $region75: #{level_twavenet_forward.1} parent=67 // pred_region
          %s2895 = sand.u32 %s30, 1
          %s2896 = scalar_lea.sflag [#allocation12], %s2895
          %s2897 = sand.u32 %s153, 1
          %s2898 = smul.addr %s2897, 4
          %s2899 = scalar_lea.vmem [#allocation11], %s2898
          %2900 = dma.done %s2896, 64
        $region76: #{level_twavenet_forward.1} parent=67 // pred_fallthru
          _
        // Predicated region
        $region77: #{level_twavenet_forward.1} parent=67 // pred_check
          %p2901 = pneg %p194
        $region78: #{level_twavenet_forward.1} parent=67 // pred_check_branch
          %2903 = sbr.rel (%p2901) target = $region80
        $region79: #{level_twavenet_forward.1} parent=67 // pred_region
          %s2904 = sand.u32 %s30, 1
          %s2905 = scalar_lea.sflag [#allocation12], %s2904
          %s2906 = sand.u32 %s179, 1
          %s2907 = scalar_lea.vmem [#allocation13], %s2906
          %2908 = dma.done %s2905, 16
        $region80: #{level_twavenet_forward.1} parent=67 // pred_fallthru
          _
      $region68: #{level_twavenet_forward.1} parent=5 // pred_fallthru
        _
    $region6: #{level_twavenet_forward.1} parent=1 // loop_footer
      %s28 = sadd.s32 1, %s24
    $region7: #{level_twavenet_forward.1} parent=1 // loop_footer_branch
      %23 = sbr.rel target = $region3
    $region8: #{level_twavenet_forward.1} parent=1 // loop_exit
      _
    %2909 = vsyncpa [#allocation3], 1
    %s2910 = scalar_lea.sflag [#allocation3], 1
    %2911 = vsyncpa %s2910, 1
    %2912 = vsyncpa [#allocation6], 1
    %2913 = vsyncpa [#allocation9], 1
    %2914 = vsyncpa [#allocation4], 1
    %s2915 = scalar_lea.sflag [#allocation4], 1
    %2916 = vsyncpa %s2915, 1
    %2917 = vsyncpa [#allocation12], 1
    %s2918 = scalar_lea.sflag [#allocation12], 1
    %2919 = vsyncpa %s2918, 1

</llo_original>
